<compile_context>
chip_gen: v7x
topology: tpu7x:2x2x1
jax: 0.10.0
libtpu: 0.0.40
codegen_flags: <defaults>
</compile_context>

<pallas_src>
import functools

import jax
import jax.numpy as jnp
import numpy as np
from jax import lax
from jax.experimental import pallas as pl
from jax.experimental.pallas import tpu as pltpu

GROUPS = 32
EPS = 1e-5


def _resblock_kernel(H, W, C,
                     x_ref, red_ref, bc_ref,
                     g1_ref, b1_ref, w1_ref, cb1_ref,
                     g2_ref, b2_ref, w2_ref, cb2_ref,
                     o_ref, hal_ref):
    HW = H * W
    cpg = C // GROUPS
    n = float(HW * cpg)

    # Keep the two halo rows zero.  (Only 2*W rows per step -- tiny; done unconditionally so
    # it is also correct when the parallel batch axis is split across TensorCores.)
    zrow = jnp.zeros((W, C), jnp.float32)
    hal_ref[0:W, :] = zrow
    hal_ref[(H + 1) * W:(H + 2) * W, :] = zrow

    # Column-border masks, shared by both convs (computed once per step).
    col = lax.broadcasted_iota(jnp.int32, (HW, 1), 0) % W
    mask_l = col == 0          # output column 0 has no left neighbour
    mask_r = col == (W - 1)    # output column W-1 has no right neighbour

    red = red_ref[...]         # (C, G)  channel -> group reduction (0/1)
    bc = bc_ref[...]           # (G, C)  group   -> channel broadcast (0/1)

    def gn_silu(v, gamma, beta):
        # Two-pass GroupNorm (f32 statistics), then SiLU.
        s = jnp.sum(v, axis=0, keepdims=True)                                   # (1, C)
        mean_c = jnp.dot(jnp.dot(s, red, preferred_element_type=jnp.float32) / n,
                         bc, preferred_element_type=jnp.float32)                # (1, C)
        xc = v - mean_c
        sq = jnp.sum(xc * xc, axis=0, keepdims=True)                            # (1, C)
        var_g = jnp.dot(sq, red, preferred_element_type=jnp.float32) / n        # (1, G)
        inv_c = jnp.dot(lax.rsqrt(var_g + EPS), bc,
                        preferred_element_type=jnp.float32)                     # (1, C)
        y = xc * (inv_c * gamma) + beta
        return y * jax.nn.sigmoid(y)

    def conv3x3(w_ref, bias):
        # Activation lives in hal_ref rows [W, W+HW); halo rows are zero.
        # 3 aligned row-shifted loads (cast to bf16 once each) x 3 MXU matmuls per load.
        q = [None, None, None]
        for ky in range(3):
            a = hal_ref[ky * W:ky * W + HW, :].astype(jnp.bfloat16)
            for kx in range(3):
                t = jnp.dot(a, w_ref[3 * ky + kx], preferred_element_type=jnp.float32)
                q[kx] = t if q[kx] is None else q[kx] + t
        # dx shifts realized on the partial outputs via XLU rolls + one-column masks.
        out = q[1] + bias
        out = out + jnp.where(mask_l, 0.0, pltpu.roll(q[0], shift=1, axis=0))
        out = out + jnp.where(mask_r, 0.0, pltpu.roll(q[2], shift=HW - 1, axis=0))
        return out

    x = x_ref[0]                                                # (HW, C) f32
    hal_ref[W:W + HW, :] = gn_silu(x, g1_ref[...], b1_ref[...])  # GN1+SiLU -> halo interior
    h = conv3x3(w1_ref, cb1_ref[...])
    hal_ref[W:W + HW, :] = gn_silu(h, g2_ref[...], b2_ref[...])  # GN2+SiLU -> halo interior
    h = conv3x3(w2_ref, cb2_ref[...])
    o_ref[0] = x + h                                             # residual add (f32)


def _vmem_limit_bytes(H, W, C):
    f32, bf16 = 4, 2
    hwc = H * W * C
    est = (
        2 * 2 * hwc * f32                     # double-buffered input + output blocks
        + 2 * 2 * 9 * C * C * bf16            # two bf16 weight tensors (double-buffered)
        + 2 * (2 * C * GROUPS + 8 * C) * f32  # group matrices + gamma/beta/bias vectors
        + (H + 2) * W * C * f32               # row-halo scratch
        + 8 * hwc * f32                       # live f32 temporaries (x, xc, q0..q2, out, h)
    )
    return int(min(max(2 * est, 32 * 2 ** 20), 100 * 2 ** 20))


def resblock_pallas(x_nhwc, p):
    B, H, W, C = x_nhwc.shape
    assert C % GROUPS == 0
    HW = H * W
    x_flat = x_nhwc.reshape(B, HW, C)
    kernel = functools.partial(_resblock_kernel, H, W, C)

    def full(shape):
        # Grid-invariant inputs: constant block index, so Pallas does not re-DMA them
        # across grid steps.
        return pl.BlockSpec(shape, lambda b: (0,) * len(shape))

    out_flat = pl.pallas_call(
        kernel,
        out_shape=jax.ShapeDtypeStruct((B, HW, C), jnp.float32),
        grid_spec=pltpu.PrefetchScalarGridSpec(
            num_scalar_prefetch=0,
            grid=(B,),
            in_specs=[
                pl.BlockSpec((1, HW, C), lambda b: (b, 0, 0)),   # x (flattened NHWC)
                full((C, GROUPS)),                               # group reduce matrix
                full((GROUPS, C)),                               # group broadcast matrix
                full((1, C)), full((1, C)),                      # gn1 gamma / beta
                full((9, C, C)), full((1, C)),                   # conv1 w (bf16) / bias
                full((1, C)), full((1, C)),                      # gn2 gamma / beta
                full((9, C, C)), full((1, C)),                   # conv2 w (bf16) / bias
            ],
            out_specs=pl.BlockSpec((1, HW, C), lambda b: (b, 0, 0)),
            scratch_shapes=[pltpu.VMEM(((H + 2) * W, C), jnp.float32)],  # row-halo buffer
        ),
        compiler_params=pltpu.CompilerParams(
            dimension_semantics=("parallel",),
            vmem_limit_bytes=_vmem_limit_bytes(H, W, C),
        ),
    )(x_flat, p["red"], p["bcast"], p["g1"], p["b1"], p["w1"], p["cb1"],
      p["g2"], p["b2"], p["w2"], p["cb2"])
    return out_flat.reshape(B, H, W, C)


def resblock_ref(x_nhwc, p):
    # Pure-JAX f32 reference (matches the PyTorch module semantics).
    def gn_silu(v, gamma, beta):
        B, H, W, C = v.shape
        g = v.reshape(B, H, W, GROUPS, C // GROUPS)
        mean = g.mean(axis=(1, 2, 4), keepdims=True)
        var = ((g - mean) ** 2).mean(axis=(1, 2, 4), keepdims=True)
        y = ((g - mean) / jnp.sqrt(var + EPS)).reshape(B, H, W, C)
        y = y * gamma.reshape(1, 1, 1, C) + beta.reshape(1, 1, 1, C)
        return y * jax.nn.sigmoid(y)

    def conv(v, w_hwio, b):
        y = lax.conv_general_dilated(v, w_hwio, (1, 1), "SAME",
                                     dimension_numbers=("NHWC", "HWIO", "NHWC"),
                                     precision=lax.Precision.HIGHEST)
        return y + b.reshape(1, 1, 1, -1)

    h = gn_silu(x_nhwc, p["g1"][0], p["b1"][0])
    h = conv(h, p["w1_hwio"], p["cb1"][0])
    h = gn_silu(h, p["g2"][0], p["b2"][0])
    h = conv(h, p["w2_hwio"], p["cb2"][0])
    return x_nhwc + h


def make_params(key, C):
    ks = jax.random.split(key, 8)
    cpg = C // GROUPS
    gidx = np.arange(C) // cpg
    red = jnp.asarray((gidx[:, None] == np.arange(GROUPS)[None, :]).astype(np.float32))
    bcast = jnp.asarray((np.arange(GROUPS)[:, None] == gidx[None, :]).astype(np.float32))

    def oihw(k):
        return 0.05 * jax.random.normal(k, (C, C, 3, 3), jnp.float32)

    w1_oihw, w2_oihw = oihw(ks[0]), oihw(ks[1])
    w1_hwio = jnp.transpose(w1_oihw, (2, 3, 1, 0))   # (kH, kW, Cin, Cout)
    w2_hwio = jnp.transpose(w2_oihw, (2, 3, 1, 0))
    return {
        "red": red, "bcast": bcast,
        "g1": 1.0 + 0.1 * jax.random.normal(ks[2], (1, C), jnp.float32),
        "b1": 0.1 * jax.random.normal(ks[3], (1, C), jnp.float32),
        "g2": 1.0 + 0.1 * jax.random.normal(ks[4], (1, C), jnp.float32),
        "b2": 0.1 * jax.random.normal(ks[5], (1, C), jnp.float32),
        "cb1": 0.1 * jax.random.normal(ks[6], (1, C), jnp.float32),
        "cb2": 0.1 * jax.random.normal(ks[7], (1, C), jnp.float32),
        # kernel form: (tap = ky*3+kx, Cin, Cout), bf16 MXU operands
        "w1": w1_hwio.reshape(9, C, C).astype(jnp.bfloat16),
        "w2": w2_hwio.reshape(9, C, C).astype(jnp.bfloat16),
        # reference form: HWIO f32
        "w1_hwio": w1_hwio, "w2_hwio": w2_hwio,
    }


if __name__ == "__main__":
    # ch must be divisible by 32 for GroupNorm(32, ch); C=128 keeps the lane axis dense.
    B, C, H, W = 2, 128, 8, 8
    key = jax.random.PRNGKey(0)
    kx, kp = jax.random.split(key)

    x_nchw = jax.random.normal(kx, (B, C, H, W), jnp.float32)   # PyTorch-convention input
    x_nhwc = jnp.transpose(x_nchw, (0, 2, 3, 1))                # kernel layout

    params = make_params(kp, C)

    out = jax.block_until_ready(resblock_pallas(x_nhwc, params))
    ref = jax.block_until_ready(resblock_ref(x_nhwc, params))

    # bf16 matmul operands (f32 accumulation) vs an f32 HIGHEST-precision reference.
    np.testing.assert_allclose(np.asarray(out), np.asarray(ref), rtol=4e-2, atol=4e-2)

    print("KERNEL_OK")
</pallas_src>

<mosaic_0001>
module attributes {stable_mosaic.version = 11 : i64} {
  func.func @_resblock_kernel(%arg0: i32, %arg1: memref<1x64x128xf32, #tpu.memory_space<vmem>>, %arg2: memref<128x32xf32, #tpu.memory_space<vmem>>, %arg3: memref<32x128xf32, #tpu.memory_space<vmem>>, %arg4: memref<1x128xf32, #tpu.memory_space<vmem>>, %arg5: memref<1x128xf32, #tpu.memory_space<vmem>>, %arg6: memref<9x128x128xbf16, #tpu.memory_space<vmem>>, %arg7: memref<1x128xf32, #tpu.memory_space<vmem>>, %arg8: memref<1x128xf32, #tpu.memory_space<vmem>>, %arg9: memref<1x128xf32, #tpu.memory_space<vmem>>, %arg10: memref<9x128x128xbf16, #tpu.memory_space<vmem>>, %arg11: memref<1x128xf32, #tpu.memory_space<vmem>>, %arg12: memref<1x64x128xf32, #tpu.memory_space<vmem>>, %arg13: memref<80x128xf32, #tpu.memory_space<vmem>>) attributes {dimension_semantics = [#tpu.dimension_semantics<parallel>], iteration_bounds = array<i64: 2>, scalar_prefetch = 0 : i64, scratch_operands = 1 : i64, tpu.core_type = #tpu.core_type<tc>, window_params = [{transform_indices = @transform_0, window_bounds = array<i64: 1, 64, 128>}, {pipeline_mode = #tpu.pipeline_mode<synchronous>, transform_indices = @transform_1, window_bounds = array<i64: 128, 32>}, {pipeline_mode = #tpu.pipeline_mode<synchronous>, transform_indices = @transform_2, window_bounds = array<i64: 32, 128>}, {pipeline_mode = #tpu.pipeline_mode<synchronous>, transform_indices = @transform_3, window_bounds = array<i64: 1, 128>}, {pipeline_mode = #tpu.pipeline_mode<synchronous>, transform_indices = @transform_4, window_bounds = array<i64: 1, 128>}, {pipeline_mode = #tpu.pipeline_mode<synchronous>, transform_indices = @transform_5, window_bounds = array<i64: 9, 128, 128>}, {pipeline_mode = #tpu.pipeline_mode<synchronous>, transform_indices = @transform_6, window_bounds = array<i64: 1, 128>}, {pipeline_mode = #tpu.pipeline_mode<synchronous>, transform_indices = @transform_7, window_bounds = array<i64: 1, 128>}, {pipeline_mode = #tpu.pipeline_mode<synchronous>, transform_indices = @transform_8, window_bounds = array<i64: 1, 128>}, {pipeline_mode = #tpu.pipeline_mode<synchronous>, transform_indices = @transform_9, window_bounds = array<i64: 9, 128, 128>}, {pipeline_mode = #tpu.pipeline_mode<synchronous>, transform_indices = @transform_10, window_bounds = array<i64: 1, 128>}, {transform_indices = @transform_11, window_bounds = array<i64: 1, 64, 128>}]} {
    %cst = arith.constant 0.000000e+00 : f32
    %0 = vector.broadcast %cst : f32 to vector<8x128xf32>
    %c0 = arith.constant 0 : index
    %c0_0 = arith.constant 0 : index
    %1 = vector.load %arg13[%c0, %c0_0] : memref<80x128xf32, #tpu.memory_space<vmem>>, vector<8x128xf32>
    tpu.vector_store %arg13[%c0, %c0_0], %0 {strides = array<i32>} : memref<80x128xf32, #tpu.memory_space<vmem>>, vector<8x128xf32>,
    %c72 = arith.constant 72 : index
    %c0_1 = arith.constant 0 : index
    %2 = vector.load %arg13[%c72, %c0_1] : memref<80x128xf32, #tpu.memory_space<vmem>>, vector<8x128xf32>
    tpu.vector_store %arg13[%c72, %c0_1], %0 {strides = array<i32>} : memref<80x128xf32, #tpu.memory_space<vmem>>, vector<8x128xf32>,
    %3 = tpu.iota {dimensions = array<i32: 0>} : vector<64x1xi32>
    %c8_i32 = arith.constant 8 : i32
    %c0_i32 = arith.constant 0 : i32
    %4 = arith.cmpi eq, %c8_i32, %c0_i32 : i32
    %c1_i32 = arith.constant 1 : i32
    %5 = arith.select %4, %c1_i32, %c8_i32 : i32
    %6 = vector.broadcast %5 : i32 to vector<64x1xi32>
    %7 = arith.remsi %3, %6 : vector<64x1xi32>
    %c0_i32_2 = arith.constant 0 : i32
    %8 = vector.broadcast %c0_i32_2 : i32 to vector<64x1xi32>
    %9 = arith.cmpi ne, %7, %8 : vector<64x1xi32>
    %c0_i32_3 = arith.constant 0 : i32
    %10 = vector.broadcast %c0_i32_3 : i32 to vector<64x1xi32>
    %11 = arith.cmpi slt, %7, %10 : vector<64x1xi32>
    %c0_i32_4 = arith.constant 0 : i32
    %12 = arith.cmpi slt, %5, %c0_i32_4 : i32
    %13 = vector.broadcast %12 : i1 to vector<64x1xi1>
    %14 = vector.broadcast %13 : vector<64x1xi1> to vector<64x1xi1>
    %15 = arith.xori %11, %14 : vector<64x1xi1>
    %16 = arith.andi %15, %9 : vector<64x1xi1>
    %17 = vector.broadcast %5 : i32 to vector<64x1xi32>
    %18 = arith.addi %7, %17 : vector<64x1xi32>
    %19 = arith.select %16, %18, %7 : vector<64x1xi1>, vector<64x1xi32>
    %c0_i32_5 = arith.constant 0 : i32
    %20 = vector.broadcast %c0_i32_5 : i32 to vector<64x1xi32>
    %21 = arith.cmpi eq, %19, %20 : vector<64x1xi32>
    %c7_i32 = arith.constant 7 : i32
    %22 = vector.broadcast %c7_i32 : i32 to vector<64x1xi32>
    %23 = arith.cmpi eq, %19, %22 : vector<64x1xi32>
    %c0_6 = arith.constant 0 : index
    %c0_7 = arith.constant 0 : index
    %24 = vector.load %arg2[%c0_6, %c0_7] : memref<128x32xf32, #tpu.memory_space<vmem>>, vector<128x32xf32>
    %c0_8 = arith.constant 0 : index
    %c0_9 = arith.constant 0 : index
    %25 = vector.load %arg3[%c0_8, %c0_9] : memref<32x128xf32, #tpu.memory_space<vmem>>, vector<32x128xf32>
    %c0_10 = arith.constant 0 : index
    %c0_11 = arith.constant 0 : index
    %c0_12 = arith.constant 0 : index
    %26 = vector.load %arg1[%c0_10, %c0_11, %c0_12] : memref<1x64x128xf32, #tpu.memory_space<vmem>>, vector<1x64x128xf32>
    %27 = vector.shape_cast %26 : vector<1x64x128xf32> to vector<64x128xf32>
    %c0_13 = arith.constant 0 : index
    %c0_14 = arith.constant 0 : index
    %28 = vector.load %arg4[%c0_13, %c0_14] : memref<1x128xf32, #tpu.memory_space<vmem>>, vector<1x128xf32>
    %c0_15 = arith.constant 0 : index
    %c0_16 = arith.constant 0 : index
    %29 = vector.load %arg5[%c0_15, %c0_16] : memref<1x128xf32, #tpu.memory_space<vmem>>, vector<1x128xf32>
    %cst_17 = arith.constant dense<0.000000e+00> : vector<128xf32>
    %30 = vector.multi_reduction <add>, %27, %cst_17 [0] : vector<64x128xf32> to vector<128xf32>
    %31 = vector.shape_cast %30 : vector<128xf32> to vector<1x128xf32>
    %cst_18 = arith.constant dense<0.000000e+00> : vector<1x32xf32>
    %32 = tpu.matmul %31, %24, %cst_18 {dimension_numbers = #tpu.dot_dimension_numbers<[1], [0], [0], [1], [0, 0, 1, 1], [], []>} : vector<1x128xf32>, vector<128x32xf32>, vector<1x32xf32> -> vector<1x32xf32>
    %cst_19 = arith.constant 2.560000e+02 : f32
    %33 = vector.broadcast %cst_19 : f32 to vector<1x32xf32>
    %34 = arith.divf %32, %33 : vector<1x32xf32>
    %cst_20 = arith.constant dense<0.000000e+00> : vector<1x128xf32>
    %35 = tpu.matmul %34, %25, %cst_20 {dimension_numbers = #tpu.dot_dimension_numbers<[1], [0], [0], [1], [0, 0, 1, 1], [], []>} : vector<1x32xf32>, vector<32x128xf32>, vector<1x128xf32> -> vector<1x128xf32>
    %36 = vector.broadcast %35 : vector<1x128xf32> to vector<64x128xf32>
    %37 = arith.subf %27, %36 : vector<64x128xf32>
    %38 = arith.mulf %37, %37 : vector<64x128xf32>
    %cst_21 = arith.constant dense<0.000000e+00> : vector<128xf32>
    %39 = vector.multi_reduction <add>, %38, %cst_21 [0] : vector<64x128xf32> to vector<128xf32>
    %40 = vector.shape_cast %39 : vector<128xf32> to vector<1x128xf32>
    %cst_22 = arith.constant dense<0.000000e+00> : vector<1x32xf32>
    %41 = tpu.matmul %40, %24, %cst_22 {dimension_numbers = #tpu.dot_dimension_numbers<[1], [0], [0], [1], [0, 0, 1, 1], [], []>} : vector<1x128xf32>, vector<128x32xf32>, vector<1x32xf32> -> vector<1x32xf32>
    %cst_23 = arith.constant 2.560000e+02 : f32
    %42 = vector.broadcast %cst_23 : f32 to vector<1x32xf32>
    %43 = arith.divf %41, %42 : vector<1x32xf32>
    %cst_24 = arith.constant 9.99999974E-6 : f32
    %44 = vector.broadcast %cst_24 : f32 to vector<1x32xf32>
    %45 = arith.addf %43, %44 : vector<1x32xf32>
    %46 = math.rsqrt %45 : vector<1x32xf32>
    %cst_25 = arith.constant dense<0.000000e+00> : vector<1x128xf32>
    %47 = tpu.matmul %46, %25, %cst_25 {dimension_numbers = #tpu.dot_dimension_numbers<[1], [0], [0], [1], [0, 0, 1, 1], [], []>} : vector<1x32xf32>, vector<32x128xf32>, vector<1x128xf32> -> vector<1x128xf32>
    %48 = arith.mulf %47, %28 : vector<1x128xf32>
    %49 = vector.broadcast %48 : vector<1x128xf32> to vector<64x128xf32>
    %50 = arith.mulf %37, %49 : vector<64x128xf32>
    %51 = vector.broadcast %29 : vector<1x128xf32> to vector<64x128xf32>
    %52 = arith.addf %50, %51 : vector<64x128xf32>
    %53 = arith.negf %52 : vector<64x128xf32>
    %54 = math.exp %53 : vector<64x128xf32>
    %cst_26 = arith.constant 1.000000e+00 : f32
    %55 = vector.broadcast %cst_26 : f32 to vector<64x128xf32>
    %56 = arith.addf %55, %54 : vector<64x128xf32>
    %57 = arith.divf %55, %56 : vector<64x128xf32>
    %58 = arith.mulf %52, %57 : vector<64x128xf32>
    %c8 = arith.constant 8 : index
    %c0_27 = arith.constant 0 : index
    %59 = vector.load %arg13[%c8, %c0_27] : memref<80x128xf32, #tpu.memory_space<vmem>>, vector<64x128xf32>
    tpu.vector_store %arg13[%c8, %c0_27], %58 {strides = array<i32>} : memref<80x128xf32, #tpu.memory_space<vmem>>, vector<64x128xf32>,
    %c0_28 = arith.constant 0 : index
    %c0_29 = arith.constant 0 : index
    %60 = vector.load %arg7[%c0_28, %c0_29] : memref<1x128xf32, #tpu.memory_space<vmem>>, vector<1x128xf32>
    %c0_30 = arith.constant 0 : index
    %c0_31 = arith.constant 0 : index
    %61 = vector.load %arg13[%c0_30, %c0_31] : memref<80x128xf32, #tpu.memory_space<vmem>>, vector<64x128xf32>
    %62 = arith.truncf %61 : vector<64x128xf32> to vector<64x128xbf16>
    %c0_32 = arith.constant 0 : index
    %c0_33 = arith.constant 0 : index
    %c0_34 = arith.constant 0 : index
    %63 = vector.load %arg6[%c0_32, %c0_33, %c0_34] : memref<9x128x128xbf16, #tpu.memory_space<vmem>>, vector<1x128x128xbf16>
    %64 = vector.shape_cast %63 : vector<1x128x128xbf16> to vector<128x128xbf16>
    %cst_35 = arith.constant dense<0.000000e+00> : vector<64x128xf32>
    %65 = tpu.matmul %62, %64, %cst_35 {dimension_numbers = #tpu.dot_dimension_numbers<[1], [0], [0], [1], [0, 0, 1, 1], [], []>} : vector<64x128xbf16>, vector<128x128xbf16>, vector<64x128xf32> -> vector<64x128xf32>
    %c1 = arith.constant 1 : index
    %c0_36 = arith.constant 0 : index
    %c0_37 = arith.constant 0 : index
    %66 = vector.load %arg6[%c1, %c0_36, %c0_37] : memref<9x128x128xbf16, #tpu.memory_space<vmem>>, vector<1x128x128xbf16>
    %67 = vector.shape_cast %66 : vector<1x128x128xbf16> to vector<128x128xbf16>
    %cst_38 = arith.constant dense<0.000000e+00> : vector<64x128xf32>
    %68 = tpu.matmul %62, %67, %cst_38 {dimension_numbers = #tpu.dot_dimension_numbers<[1], [0], [0], [1], [0, 0, 1, 1], [], []>} : vector<64x128xbf16>, vector<128x128xbf16>, vector<64x128xf32> -> vector<64x128xf32>
    %c2 = arith.constant 2 : index
    %c0_39 = arith.constant 0 : index
    %c0_40 = arith.constant 0 : index
    %69 = vector.load %arg6[%c2, %c0_39, %c0_40] : memref<9x128x128xbf16, #tpu.memory_space<vmem>>, vector<1x128x128xbf16>
    %70 = vector.shape_cast %69 : vector<1x128x128xbf16> to vector<128x128xbf16>
    %cst_41 = arith.constant dense<0.000000e+00> : vector<64x128xf32>
    %71 = tpu.matmul %62, %70, %cst_41 {dimension_numbers = #tpu.dot_dimension_numbers<[1], [0], [0], [1], [0, 0, 1, 1], [], []>} : vector<64x128xbf16>, vector<128x128xbf16>, vector<64x128xf32> -> vector<64x128xf32>
    %c8_42 = arith.constant 8 : index
    %c0_43 = arith.constant 0 : index
    %72 = vector.load %arg13[%c8_42, %c0_43] : memref<80x128xf32, #tpu.memory_space<vmem>>, vector<64x128xf32>
    %73 = arith.truncf %72 : vector<64x128xf32> to vector<64x128xbf16>
    %c3 = arith.constant 3 : index
    %c0_44 = arith.constant 0 : index
    %c0_45 = arith.constant 0 : index
    %74 = vector.load %arg6[%c3, %c0_44, %c0_45] : memref<9x128x128xbf16, #tpu.memory_space<vmem>>, vector<1x128x128xbf16>
    %75 = vector.shape_cast %74 : vector<1x128x128xbf16> to vector<128x128xbf16>
    %cst_46 = arith.constant dense<0.000000e+00> : vector<64x128xf32>
    %76 = tpu.matmul %73, %75, %cst_46 {dimension_numbers = #tpu.dot_dimension_numbers<[1], [0], [0], [1], [0, 0, 1, 1], [], []>} : vector<64x128xbf16>, vector<128x128xbf16>, vector<64x128xf32> -> vector<64x128xf32>
    %77 = arith.addf %65, %76 : vector<64x128xf32>
    %c4 = arith.constant 4 : index
    %c0_47 = arith.constant 0 : index
    %c0_48 = arith.constant 0 : index
    %78 = vector.load %arg6[%c4, %c0_47, %c0_48] : memref<9x128x128xbf16, #tpu.memory_space<vmem>>, vector<1x128x128xbf16>
    %79 = vector.shape_cast %78 : vector<1x128x128xbf16> to vector<128x128xbf16>
    %cst_49 = arith.constant dense<0.000000e+00> : vector<64x128xf32>
    %80 = tpu.matmul %73, %79, %cst_49 {dimension_numbers = #tpu.dot_dimension_numbers<[1], [0], [0], [1], [0, 0, 1, 1], [], []>} : vector<64x128xbf16>, vector<128x128xbf16>, vector<64x128xf32> -> vector<64x128xf32>
    %81 = arith.addf %68, %80 : vector<64x128xf32>
    %c5 = arith.constant 5 : index
    %c0_50 = arith.constant 0 : index
    %c0_51 = arith.constant 0 : index
    %82 = vector.load %arg6[%c5, %c0_50, %c0_51] : memref<9x128x128xbf16, #tpu.memory_space<vmem>>, vector<1x128x128xbf16>
    %83 = vector.shape_cast %82 : vector<1x128x128xbf16> to vector<128x128xbf16>
    %cst_52 = arith.constant dense<0.000000e+00> : vector<64x128xf32>
    %84 = tpu.matmul %73, %83, %cst_52 {dimension_numbers = #tpu.dot_dimension_numbers<[1], [0], [0], [1], [0, 0, 1, 1], [], []>} : vector<64x128xbf16>, vector<128x128xbf16>, vector<64x128xf32> -> vector<64x128xf32>
    %85 = arith.addf %71, %84 : vector<64x128xf32>
    %c16 = arith.constant 16 : index
    %c0_53 = arith.constant 0 : index
    %86 = vector.load %arg13[%c16, %c0_53] : memref<80x128xf32, #tpu.memory_space<vmem>>, vector<64x128xf32>
    %87 = arith.truncf %86 : vector<64x128xf32> to vector<64x128xbf16>
    %c6 = arith.constant 6 : index
    %c0_54 = arith.constant 0 : index
    %c0_55 = arith.constant 0 : index
    %88 = vector.load %arg6[%c6, %c0_54, %c0_55] : memref<9x128x128xbf16, #tpu.memory_space<vmem>>, vector<1x128x128xbf16>
    %89 = vector.shape_cast %88 : vector<1x128x128xbf16> to vector<128x128xbf16>
    %cst_56 = arith.constant dense<0.000000e+00> : vector<64x128xf32>
    %90 = tpu.matmul %87, %89, %cst_56 {dimension_numbers = #tpu.dot_dimension_numbers<[1], [0], [0], [1], [0, 0, 1, 1], [], []>} : vector<64x128xbf16>, vector<128x128xbf16>, vector<64x128xf32> -> vector<64x128xf32>
    %91 = arith.addf %77, %90 : vector<64x128xf32>
    %c7 = arith.constant 7 : index
    %c0_57 = arith.constant 0 : index
    %c0_58 = arith.constant 0 : index
    %92 = vector.load %arg6[%c7, %c0_57, %c0_58] : memref<9x128x128xbf16, #tpu.memory_space<vmem>>, vector<1x128x128xbf16>
    %93 = vector.shape_cast %92 : vector<1x128x128xbf16> to vector<128x128xbf16>
    %cst_59 = arith.constant dense<0.000000e+00> : vector<64x128xf32>
    %94 = tpu.matmul %87, %93, %cst_59 {dimension_numbers = #tpu.dot_dimension_numbers<[1], [0], [0], [1], [0, 0, 1, 1], [], []>} : vector<64x128xbf16>, vector<128x128xbf16>, vector<64x128xf32> -> vector<64x128xf32>
    %95 = arith.addf %81, %94 : vector<64x128xf32>
    %c8_60 = arith.constant 8 : index
    %c0_61 = arith.constant 0 : index
    %c0_62 = arith.constant 0 : index
    %96 = vector.load %arg6[%c8_60, %c0_61, %c0_62] : memref<9x128x128xbf16, #tpu.memory_space<vmem>>, vector<1x128x128xbf16>
    %97 = vector.shape_cast %96 : vector<1x128x128xbf16> to vector<128x128xbf16>
    %cst_63 = arith.constant dense<0.000000e+00> : vector<64x128xf32>
    %98 = tpu.matmul %87, %97, %cst_63 {dimension_numbers = #tpu.dot_dimension_numbers<[1], [0], [0], [1], [0, 0, 1, 1], [], []>} : vector<64x128xbf16>, vector<128x128xbf16>, vector<64x128xf32> -> vector<64x128xf32>
    %99 = arith.addf %85, %98 : vector<64x128xf32>
    %100 = vector.broadcast %60 : vector<1x128xf32> to vector<64x128xf32>
    %101 = arith.addf %95, %100 : vector<64x128xf32>
    %c1_i32_64 = arith.constant 1 : i32
    %102 = tpu.dynamic_rotate %91 by %c1_i32_64 dim 0 : vector<64x128xf32>, i32 -> vector<64x128xf32>
    %cst_65 = arith.constant 0.000000e+00 : f32
    %103 = vector.shape_cast %21 : vector<64x1xi1> to vector<64x1xi1>
    %104 = vector.broadcast %103 : vector<64x1xi1> to vector<64x128xi1>
    %105 = vector.broadcast %cst_65 : f32 to vector<64x128xf32>
    %106 = arith.select %104, %105, %102 : vector<64x128xi1>, vector<64x128xf32>
    %107 = arith.addf %101, %106 : vector<64x128xf32>
    %c63_i32 = arith.constant 63 : i32
    %108 = tpu.dynamic_rotate %99 by %c63_i32 dim 0 : vector<64x128xf32>, i32 -> vector<64x128xf32>
    %cst_66 = arith.constant 0.000000e+00 : f32
    %109 = vector.shape_cast %23 : vector<64x1xi1> to vector<64x1xi1>
    %110 = vector.broadcast %109 : vector<64x1xi1> to vector<64x128xi1>
    %111 = vector.broadcast %cst_66 : f32 to vector<64x128xf32>
    %112 = arith.select %110, %111, %108 : vector<64x128xi1>, vector<64x128xf32>
    %113 = arith.addf %107, %112 : vector<64x128xf32>
    %c0_67 = arith.constant 0 : index
    %c0_68 = arith.constant 0 : index
    %114 = vector.load %arg8[%c0_67, %c0_68] : memref<1x128xf32, #tpu.memory_space<vmem>>, vector<1x128xf32>
    %c0_69 = arith.constant 0 : index
    %c0_70 = arith.constant 0 : index
    %115 = vector.load %arg9[%c0_69, %c0_70] : memref<1x128xf32, #tpu.memory_space<vmem>>, vector<1x128xf32>
    %cst_71 = arith.constant dense<0.000000e+00> : vector<128xf32>
    %116 = vector.multi_reduction <add>, %113, %cst_71 [0] : vector<64x128xf32> to vector<128xf32>
    %117 = vector.shape_cast %116 : vector<128xf32> to vector<1x128xf32>
    %cst_72 = arith.constant dense<0.000000e+00> : vector<1x32xf32>
    %118 = tpu.matmul %117, %24, %cst_72 {dimension_numbers = #tpu.dot_dimension_numbers<[1], [0], [0], [1], [0, 0, 1, 1], [], []>} : vector<1x128xf32>, vector<128x32xf32>, vector<1x32xf32> -> vector<1x32xf32>
    %cst_73 = arith.constant 2.560000e+02 : f32
    %119 = vector.broadcast %cst_73 : f32 to vector<1x32xf32>
    %120 = arith.divf %118, %119 : vector<1x32xf32>
    %cst_74 = arith.constant dense<0.000000e+00> : vector<1x128xf32>
    %121 = tpu.matmul %120, %25, %cst_74 {dimension_numbers = #tpu.dot_dimension_numbers<[1], [0], [0], [1], [0, 0, 1, 1], [], []>} : vector<1x32xf32>, vector<32x128xf32>, vector<1x128xf32> -> vector<1x128xf32>
    %122 = vector.broadcast %121 : vector<1x128xf32> to vector<64x128xf32>
    %123 = arith.subf %113, %122 : vector<64x128xf32>
    %124 = arith.mulf %123, %123 : vector<64x128xf32>
    %cst_75 = arith.constant dense<0.000000e+00> : vector<128xf32>
    %125 = vector.multi_reduction <add>, %124, %cst_75 [0] : vector<64x128xf32> to vector<128xf32>
    %126 = vector.shape_cast %125 : vector<128xf32> to vector<1x128xf32>
    %cst_76 = arith.constant dense<0.000000e+00> : vector<1x32xf32>
    %127 = tpu.matmul %126, %24, %cst_76 {dimension_numbers = #tpu.dot_dimension_numbers<[1], [0], [0], [1], [0, 0, 1, 1], [], []>} : vector<1x128xf32>, vector<128x32xf32>, vector<1x32xf32> -> vector<1x32xf32>
    %cst_77 = arith.constant 2.560000e+02 : f32
    %128 = vector.broadcast %cst_77 : f32 to vector<1x32xf32>
    %129 = arith.divf %127, %128 : vector<1x32xf32>
    %cst_78 = arith.constant 9.99999974E-6 : f32
    %130 = vector.broadcast %cst_78 : f32 to vector<1x32xf32>
    %131 = arith.addf %129, %130 : vector<1x32xf32>
    %132 = math.rsqrt %131 : vector<1x32xf32>
    %cst_79 = arith.constant dense<0.000000e+00> : vector<1x128xf32>
    %133 = tpu.matmul %132, %25, %cst_79 {dimension_numbers = #tpu.dot_dimension_numbers<[1], [0], [0], [1], [0, 0, 1, 1], [], []>} : vector<1x32xf32>, vector<32x128xf32>, vector<1x128xf32> -> vector<1x128xf32>
    %134 = arith.mulf %133, %114 : vector<1x128xf32>
    %135 = vector.broadcast %134 : vector<1x128xf32> to vector<64x128xf32>
    %136 = arith.mulf %123, %135 : vector<64x128xf32>
    %137 = vector.broadcast %115 : vector<1x128xf32> to vector<64x128xf32>
    %138 = arith.addf %136, %137 : vector<64x128xf32>
    %139 = arith.negf %138 : vector<64x128xf32>
    %140 = math.exp %139 : vector<64x128xf32>
    %cst_80 = arith.constant 1.000000e+00 : f32
    %141 = vector.broadcast %cst_80 : f32 to vector<64x128xf32>
    %142 = arith.addf %141, %140 : vector<64x128xf32>
    %143 = arith.divf %141, %142 : vector<64x128xf32>
    %144 = arith.mulf %138, %143 : vector<64x128xf32>
    %c8_81 = arith.constant 8 : index
    %c0_82 = arith.constant 0 : index
    %145 = vector.load %arg13[%c8_81, %c0_82] : memref<80x128xf32, #tpu.memory_space<vmem>>, vector<64x128xf32>
    tpu.vector_store %arg13[%c8_81, %c0_82], %144 {strides = array<i32>} : memref<80x128xf32, #tpu.memory_space<vmem>>, vector<64x128xf32>,
    %c0_83 = arith.constant 0 : index
    %c0_84 = arith.constant 0 : index
    %146 = vector.load %arg11[%c0_83, %c0_84] : memref<1x128xf32, #tpu.memory_space<vmem>>, vector<1x128xf32>
    %c0_85 = arith.constant 0 : index
    %c0_86 = arith.constant 0 : index
    %147 = vector.load %arg13[%c0_85, %c0_86] : memref<80x128xf32, #tpu.memory_space<vmem>>, vector<64x128xf32>
    %148 = arith.truncf %147 : vector<64x128xf32> to vector<64x128xbf16>
    %c0_87 = arith.constant 0 : index
    %c0_88 = arith.constant 0 : index
    %c0_89 = arith.constant 0 : index
    %149 = vector.load %arg10[%c0_87, %c0_88, %c0_89] : memref<9x128x128xbf16, #tpu.memory_space<vmem>>, vector<1x128x128xbf16>
    %150 = vector.shape_cast %149 : vector<1x128x128xbf16> to vector<128x128xbf16>
    %cst_90 = arith.constant dense<0.000000e+00> : vector<64x128xf32>
    %151 = tpu.matmul %148, %150, %cst_90 {dimension_numbers = #tpu.dot_dimension_numbers<[1], [0], [0], [1], [0, 0, 1, 1], [], []>} : vector<64x128xbf16>, vector<128x128xbf16>, vector<64x128xf32> -> vector<64x128xf32>
    %c1_91 = arith.constant 1 : index
    %c0_92 = arith.constant 0 : index
    %c0_93 = arith.constant 0 : index
    %152 = vector.load %arg10[%c1_91, %c0_92, %c0_93] : memref<9x128x128xbf16, #tpu.memory_space<vmem>>, vector<1x128x128xbf16>
    %153 = vector.shape_cast %152 : vector<1x128x128xbf16> to vector<128x128xbf16>
    %cst_94 = arith.constant dense<0.000000e+00> : vector<64x128xf32>
    %154 = tpu.matmul %148, %153, %cst_94 {dimension_numbers = #tpu.dot_dimension_numbers<[1], [0], [0], [1], [0, 0, 1, 1], [], []>} : vector<64x128xbf16>, vector<128x128xbf16>, vector<64x128xf32> -> vector<64x128xf32>
    %c2_95 = arith.constant 2 : index
    %c0_96 = arith.constant 0 : index
    %c0_97 = arith.constant 0 : index
    %155 = vector.load %arg10[%c2_95, %c0_96, %c0_97] : memref<9x128x128xbf16, #tpu.memory_space<vmem>>, vector<1x128x128xbf16>
    %156 = vector.shape_cast %155 : vector<1x128x128xbf16> to vector<128x128xbf16>
    %cst_98 = arith.constant dense<0.000000e+00> : vector<64x128xf32>
    %157 = tpu.matmul %148, %156, %cst_98 {dimension_numbers = #tpu.dot_dimension_numbers<[1], [0], [0], [1], [0, 0, 1, 1], [], []>} : vector<64x128xbf16>, vector<128x128xbf16>, vector<64x128xf32> -> vector<64x128xf32>
    %c8_99 = arith.constant 8 : index
    %c0_100 = arith.constant 0 : index
    %158 = vector.load %arg13[%c8_99, %c0_100] : memref<80x128xf32, #tpu.memory_space<vmem>>, vector<64x128xf32>
    %159 = arith.truncf %158 : vector<64x128xf32> to vector<64x128xbf16>
    %c3_101 = arith.constant 3 : index
    %c0_102 = arith.constant 0 : index
    %c0_103 = arith.constant 0 : index
    %160 = vector.load %arg10[%c3_101, %c0_102, %c0_103] : memref<9x128x128xbf16, #tpu.memory_space<vmem>>, vector<1x128x128xbf16>
    %161 = vector.shape_cast %160 : vector<1x128x128xbf16> to vector<128x128xbf16>
    %cst_104 = arith.constant dense<0.000000e+00> : vector<64x128xf32>
    %162 = tpu.matmul %159, %161, %cst_104 {dimension_numbers = #tpu.dot_dimension_numbers<[1], [0], [0], [1], [0, 0, 1, 1], [], []>} : vector<64x128xbf16>, vector<128x128xbf16>, vector<64x128xf32> -> vector<64x128xf32>
    %163 = arith.addf %151, %162 : vector<64x128xf32>
    %c4_105 = arith.constant 4 : index
    %c0_106 = arith.constant 0 : index
    %c0_107 = arith.constant 0 : index
    %164 = vector.load %arg10[%c4_105, %c0_106, %c0_107] : memref<9x128x128xbf16, #tpu.memory_space<vmem>>, vector<1x128x128xbf16>
    %165 = vector.shape_cast %164 : vector<1x128x128xbf16> to vector<128x128xbf16>
    %cst_108 = arith.constant dense<0.000000e+00> : vector<64x128xf32>
    %166 = tpu.matmul %159, %165, %cst_108 {dimension_numbers = #tpu.dot_dimension_numbers<[1], [0], [0], [1], [0, 0, 1, 1], [], []>} : vector<64x128xbf16>, vector<128x128xbf16>, vector<64x128xf32> -> vector<64x128xf32>
    %167 = arith.addf %154, %166 : vector<64x128xf32>
    %c5_109 = arith.constant 5 : index
    %c0_110 = arith.constant 0 : index
    %c0_111 = arith.constant 0 : index
    %168 = vector.load %arg10[%c5_109, %c0_110, %c0_111] : memref<9x128x128xbf16, #tpu.memory_space<vmem>>, vector<1x128x128xbf16>
    %169 = vector.shape_cast %168 : vector<1x128x128xbf16> to vector<128x128xbf16>
    %cst_112 = arith.constant dense<0.000000e+00> : vector<64x128xf32>
    %170 = tpu.matmul %159, %169, %cst_112 {dimension_numbers = #tpu.dot_dimension_numbers<[1], [0], [0], [1], [0, 0, 1, 1], [], []>} : vector<64x128xbf16>, vector<128x128xbf16>, vector<64x128xf32> -> vector<64x128xf32>
    %171 = arith.addf %157, %170 : vector<64x128xf32>
    %c16_113 = arith.constant 16 : index
    %c0_114 = arith.constant 0 : index
    %172 = vector.load %arg13[%c16_113, %c0_114] : memref<80x128xf32, #tpu.memory_space<vmem>>, vector<64x128xf32>
    %173 = arith.truncf %172 : vector<64x128xf32> to vector<64x128xbf16>
    %c6_115 = arith.constant 6 : index
    %c0_116 = arith.constant 0 : index
    %c0_117 = arith.constant 0 : index
    %174 = vector.load %arg10[%c6_115, %c0_116, %c0_117] : memref<9x128x128xbf16, #tpu.memory_space<vmem>>, vector<1x128x128xbf16>
    %175 = vector.shape_cast %174 : vector<1x128x128xbf16> to vector<128x128xbf16>
    %cst_118 = arith.constant dense<0.000000e+00> : vector<64x128xf32>
    %176 = tpu.matmul %173, %175, %cst_118 {dimension_numbers = #tpu.dot_dimension_numbers<[1], [0], [0], [1], [0, 0, 1, 1], [], []>} : vector<64x128xbf16>, vector<128x128xbf16>, vector<64x128xf32> -> vector<64x128xf32>
    %177 = arith.addf %163, %176 : vector<64x128xf32>
    %c7_119 = arith.constant 7 : index
    %c0_120 = arith.constant 0 : index
    %c0_121 = arith.constant 0 : index
    %178 = vector.load %arg10[%c7_119, %c0_120, %c0_121] : memref<9x128x128xbf16, #tpu.memory_space<vmem>>, vector<1x128x128xbf16>
    %179 = vector.shape_cast %178 : vector<1x128x128xbf16> to vector<128x128xbf16>
    %cst_122 = arith.constant dense<0.000000e+00> : vector<64x128xf32>
    %180 = tpu.matmul %173, %179, %cst_122 {dimension_numbers = #tpu.dot_dimension_numbers<[1], [0], [0], [1], [0, 0, 1, 1], [], []>} : vector<64x128xbf16>, vector<128x128xbf16>, vector<64x128xf32> -> vector<64x128xf32>
    %181 = arith.addf %167, %180 : vector<64x128xf32>
    %c8_123 = arith.constant 8 : index
    %c0_124 = arith.constant 0 : index
    %c0_125 = arith.constant 0 : index
    %182 = vector.load %arg10[%c8_123, %c0_124, %c0_125] : memref<9x128x128xbf16, #tpu.memory_space<vmem>>, vector<1x128x128xbf16>
    %183 = vector.shape_cast %182 : vector<1x128x128xbf16> to vector<128x128xbf16>
    %cst_126 = arith.constant dense<0.000000e+00> : vector<64x128xf32>
    %184 = tpu.matmul %173, %183, %cst_126 {dimension_numbers = #tpu.dot_dimension_numbers<[1], [0], [0], [1], [0, 0, 1, 1], [], []>} : vector<64x128xbf16>, vector<128x128xbf16>, vector<64x128xf32> -> vector<64x128xf32>
    %185 = arith.addf %171, %184 : vector<64x128xf32>
    %186 = vector.broadcast %146 : vector<1x128xf32> to vector<64x128xf32>
    %187 = arith.addf %181, %186 : vector<64x128xf32>
    %c1_i32_127 = arith.constant 1 : i32
    %188 = tpu.dynamic_rotate %177 by %c1_i32_127 dim 0 : vector<64x128xf32>, i32 -> vector<64x128xf32>
    %cst_128 = arith.constant 0.000000e+00 : f32
    %189 = vector.shape_cast %21 : vector<64x1xi1> to vector<64x1xi1>
    %190 = vector.broadcast %189 : vector<64x1xi1> to vector<64x128xi1>
    %191 = vector.broadcast %cst_128 : f32 to vector<64x128xf32>
    %192 = arith.select %190, %191, %188 : vector<64x128xi1>, vector<64x128xf32>
    %193 = arith.addf %187, %192 : vector<64x128xf32>
    %c63_i32_129 = arith.constant 63 : i32
    %194 = tpu.dynamic_rotate %185 by %c63_i32_129 dim 0 : vector<64x128xf32>, i32 -> vector<64x128xf32>
    %cst_130 = arith.constant 0.000000e+00 : f32
    %195 = vector.shape_cast %23 : vector<64x1xi1> to vector<64x1xi1>
    %196 = vector.broadcast %195 : vector<64x1xi1> to vector<64x128xi1>
    %197 = vector.broadcast %cst_130 : f32 to vector<64x128xf32>
    %198 = arith.select %196, %197, %194 : vector<64x128xi1>, vector<64x128xf32>
    %199 = arith.addf %193, %198 : vector<64x128xf32>
    %200 = arith.addf %27, %199 : vector<64x128xf32>
    %c0_131 = arith.constant 0 : index
    %c0_132 = arith.constant 0 : index
    %c0_133 = arith.constant 0 : index
    %201 = vector.load %arg12[%c0_131, %c0_132, %c0_133] : memref<1x64x128xf32, #tpu.memory_space<vmem>>, vector<1x64x128xf32>
    %202 = vector.shape_cast %201 : vector<1x64x128xf32> to vector<64x128xf32>
    %203 = vector.shape_cast %200 : vector<64x128xf32> to vector<1x64x128xf32>
    tpu.vector_store %arg12[%c0_131, %c0_132, %c0_133], %203 {strides = array<i32>} : memref<1x64x128xf32, #tpu.memory_space<vmem>>, vector<1x64x128xf32>,
    return
  }
  func.func @transform_0(%arg0: i32) -> (i32, i32, i32) {
    %c0_i32 = arith.constant 0 : i32
    %c0_i32_0 = arith.constant 0 : i32
    %c0_i32_1 = arith.constant 0 : i32
    return %arg0, %c0_i32, %c0_i32_0 : i32, i32, i32
  }
  func.func @transform_1(%arg0: i32) -> (i32, i32) {
    %c0_i32 = arith.constant 0 : i32
    %c0_i32_0 = arith.constant 0 : i32
    %c0_i32_1 = arith.constant 0 : i32
    return %c0_i32, %c0_i32_0 : i32, i32
  }
  func.func @transform_2(%arg0: i32) -> (i32, i32) {
    %c0_i32 = arith.constant 0 : i32
    %c0_i32_0 = arith.constant 0 : i32
    %c0_i32_1 = arith.constant 0 : i32
    return %c0_i32, %c0_i32_0 : i32, i32
  }
  func.func @transform_3(%arg0: i32) -> (i32, i32) {
    %c0_i32 = arith.constant 0 : i32
    %c0_i32_0 = arith.constant 0 : i32
    %c0_i32_1 = arith.constant 0 : i32
    return %c0_i32, %c0_i32_0 : i32, i32
  }
  func.func @transform_4(%arg0: i32) -> (i32, i32) {
    %c0_i32 = arith.constant 0 : i32
    %c0_i32_0 = arith.constant 0 : i32
    %c0_i32_1 = arith.constant 0 : i32
    return %c0_i32, %c0_i32_0 : i32, i32
  }
  func.func @transform_5(%arg0: i32) -> (i32, i32, i32) {
    %c0_i32 = arith.constant 0 : i32
    %c0_i32_0 = arith.constant 0 : i32
    %c0_i32_1 = arith.constant 0 : i32
    %c0_i32_2 = arith.constant 0 : i32
    return %c0_i32, %c0_i32_0, %c0_i32_1 : i32, i32, i32
  }
  func.func @transform_6(%arg0: i32) -> (i32, i32) {
    %c0_i32 = arith.constant 0 : i32
    %c0_i32_0 = arith.constant 0 : i32
    %c0_i32_1 = arith.constant 0 : i32
    return %c0_i32, %c0_i32_0 : i32, i32
  }
  func.func @transform_7(%arg0: i32) -> (i32, i32) {
    %c0_i32 = arith.constant 0 : i32
    %c0_i32_0 = arith.constant 0 : i32
    %c0_i32_1 = arith.constant 0 : i32
    return %c0_i32, %c0_i32_0 : i32, i32
  }
  func.func @transform_8(%arg0: i32) -> (i32, i32) {
    %c0_i32 = arith.constant 0 : i32
    %c0_i32_0 = arith.constant 0 : i32
    %c0_i32_1 = arith.constant 0 : i32
    return %c0_i32, %c0_i32_0 : i32, i32
  }
  func.func @transform_9(%arg0: i32) -> (i32, i32, i32) {
    %c0_i32 = arith.constant 0 : i32
    %c0_i32_0 = arith.constant 0 : i32
    %c0_i32_1 = arith.constant 0 : i32
    %c0_i32_2 = arith.constant 0 : i32
    return %c0_i32, %c0_i32_0, %c0_i32_1 : i32, i32, i32
  }
  func.func @transform_10(%arg0: i32) -> (i32, i32) {
    %c0_i32 = arith.constant 0 : i32
    %c0_i32_0 = arith.constant 0 : i32
    %c0_i32_1 = arith.constant 0 : i32
    return %c0_i32, %c0_i32_0 : i32, i32
  }
  func.func @transform_11(%arg0: i32) -> (i32, i32, i32) {
    %c0_i32 = arith.constant 0 : i32
    %c0_i32_0 = arith.constant 0 : i32
    %c0_i32_1 = arith.constant 0 : i32
    return %arg0, %c0_i32, %c0_i32_0 : i32, i32, i32
  }
}

</mosaic_0001>

<llo_original>
// kernel: tpu_custom_call.1
$region0: #{tpu_custom_call.1}
  #allocation0 [shape = 'u32[]', space=smem, size = 0x4, offset = 0x4, fixed_abs, tag = 'smem constant byte address 0x4 - core index']
  #allocation1 [shape = 'u32[144,128]{1,0:T(1,128)}', space=vmem, size = 0x12000, scoped, tag = 'internal scratch']
  #allocation2 [shape = 'f32[80,128]{1,0:T(8,128)}', space=vmem, size = 0xa000, scoped, tag = 'scratch operand']
  %s0 = inlined_call_operand.vmem [shape: f32[2,64,128], index: 0, kind: input, shape index: {}]
  %s1 = inlined_call_operand.vmem [shape: f32[128,32], index: 1, kind: input, shape index: {}]
  %s2 = inlined_call_operand.vmem [shape: f32[32,128], index: 2, kind: input, shape index: {}]
  %s3 = inlined_call_operand.vmem [shape: f32[1,128], index: 3, kind: input, shape index: {}]
  %s4 = inlined_call_operand.vmem [shape: f32[1,128], index: 4, kind: input, shape index: {}]
  %s5 = inlined_call_operand.hbm [shape: bf16[9,128,128], index: 5, kind: input, shape index: {}]
  %s6 = inlined_call_operand.vmem [shape: f32[1,128], index: 6, kind: input, shape index: {}]
  %s7 = inlined_call_operand.vmem [shape: f32[1,128], index: 7, kind: input, shape index: {}]
  %s8 = inlined_call_operand.vmem [shape: f32[1,128], index: 8, kind: input, shape index: {}]
  %s9 = inlined_call_operand.hbm [shape: bf16[9,128,128], index: 9, kind: input, shape index: {}]
  %s10 = inlined_call_operand.vmem [shape: f32[1,128], index: 10, kind: input, shape index: {}]
  %s11 = inlined_call_operand.hbm [shape: f32[2,64,128], index: 11, kind: output, shape index: {}]
  %s12 = sld [smem:[#allocation0]]
  $region85: #{tpu_custom_call.1} parent=0
    _
  %s14 = ssub.s32 1, %s12
  %s15 = scalar_select 0, %s14, %s12
  $region1: #{tpu_custom_call.1} parent=0
    #allocation3 [shape = 'u8[294912]{0}', space=vmem, size = 0x48000, scoped, tag = 'input window, operand 5, single buffered']
    #allocation4 [shape = 's32[2]{0}', space=sflag, size = 0x8, scoped, tag = 'scoped memory for tpu_custom_call.1']
    #allocation5 [shape = 's32[2]{0}', space=sflag, size = 0x8, scoped, tag = 'scoped memory for tpu_custom_call.1']
    #allocation6 [shape = 'u8[294912]{0}', space=vmem, size = 0x48000, scoped, tag = 'input window, operand 9, single buffered']
    #allocation7 [shape = 's32[1]{0}', space=sflag, size = 0x4, scoped, tag = 'scoped memory for tpu_custom_call.1']
    #allocation8 [shape = 'u8[65536]{0}', space=vmem, size = 0x10000, scoped, tag = 'output window, operand 0']
    %16 = vsyncpa [#allocation4], 0
    %17 = vsyncpa [#allocation7], 0
    %18 = vsyncpa [#allocation5], 0
    %s19 = scalar_lea.sflag [#allocation5], 1
    %20 = vsyncpa %s19, 0
    loop: start=0, step=1, limit=4
    $region2: #{tpu_custom_call.1} parent=1 // loop_pre_header
      _
    $region3: #{tpu_custom_call.1} parent=1 // loop_header
      %s22 = sphi 0, %s26
      %p23 = scmp.ge.s32.totalorder %s22, 4
      %s32 = sphi 0, %s34
      %s35 = sphi 0, %s32
      %s36 = sphi 0, %s35
      %s52 = sphi 0, %s36
      %s56 = sphi 0, %s56
      %s58 = sphi 0, %s56
      %s59 = sphi 0, %s58
      %s73 = sphi 0, %s59
      %s77 = sphi 0, %s77
      %s79 = sphi 0, %s77
      %s80 = sphi 0, %s79
      %s94 = sphi 0, %s80
      %s98 = sphi 0, %s98
      %s100 = sphi 0, %s98
      %s101 = sphi 0, %s100
      %s115 = sphi 0, %s101
      %s119 = sphi 0, %s119
      %s121 = sphi 0, %s119
      %s122 = sphi 0, %s121
      %s136 = sphi 0, %s122
      %s140 = sphi 0, %s140
      %s142 = sphi 0, %s140
      %s143 = sphi 0, %s142
      %s157 = sphi 0, %s143
      %s161 = sphi 0, %s161
      %s163 = sphi 0, %s161
      %s164 = sphi 0, %s163
      %s178 = sphi 0, %s164
      %s182 = sphi 0, %s182
      %s184 = sphi 0, %s182
      %s185 = sphi 0, %s184
      %s199 = sphi 0, %s185
      %s203 = sphi 0, %s203
      %s205 = sphi 0, %s203
      %s206 = sphi 0, %s205
      %s220 = sphi 0, %s206
      %s224 = sphi 0, %s224
      %s226 = sphi 0, %s224
      %s227 = sphi 0, %s226
      %s241 = sphi 0, %s227
      %s245 = sphi 0, %s245
      %s247 = sphi 0, %s245
      %s248 = sphi 0, %s247
      %s262 = sphi 0, %s248
      %s268 = sphi 0, %s270
      %s271 = sphi 0, %s268
      %s272 = sphi 0, %s271
      %s288 = sphi 0, %s272
    $region4: #{tpu_custom_call.1} parent=1 // loop_header_branch
      %25 = sbr.rel (%p23) target = $region8
    $region5: #{tpu_custom_call.1} parent=1 // loop_body
      %s27 = ssub.s32 %s22, 1
      %s28 = ssub.s32 %s22, 2
      %s29 = sadd.s32 %s22, 1
      %s30 = ssub.s32 %s22, %s29
      %p31 = scmp.eq.s32.totalorder %s30, 0
      %s33 = sadd.s32 %s32, 1
      %s34 = scalar_select %p31, %s32, %s33
      %p37 = pneg %p31
      %p38 = scmp.eq.s32.totalorder %s22, 1
      %p39 = por %p37, %p38
      %p40 = scmp.ne.s32.totalorder %s32, %s35
      %p41 = scmp.eq.s32.totalorder %s22, 0
      %p42 = por %p40, %p41
      %p43 = scmp.ne.s32.totalorder %s32, %s35
      %p44 = scmp.eq.s32.totalorder %s27, 1
      %p45 = por %p43, %p44
      %p46 = scmp.ne.s32.totalorder %s35, %s36
      %p47 = scmp.eq.s32.totalorder %s27, 0
      %p48 = por %p46, %p47
      %p49 = scmp.ne.s32.totalorder %s35, %s36
      %p50 = scmp.eq.s32.totalorder %s28, 1
      %p51 = por %p49, %p50
      %p53 = scmp.ne.s32.totalorder %s36, %s52
      %p54 = scmp.eq.s32.totalorder %s28, 0
      %p55 = por %p53, %p54
      %s57 = sadd.s32 %s56, 1
      %p60 = scmp.eq.s32.totalorder %s22, 1
      %p61 = scmp.ne.s32.totalorder %s56, %s58
      %p62 = scmp.eq.s32.totalorder %s22, 0
      %p63 = por %p61, %p62
      %p64 = scmp.ne.s32.totalorder %s56, %s58
      %p65 = scmp.eq.s32.totalorder %s27, 1
      %p66 = por %p64, %p65
      %p67 = scmp.ne.s32.totalorder %s58, %s59
      %p68 = scmp.eq.s32.totalorder %s27, 0
      %p69 = por %p67, %p68
      %p70 = scmp.ne.s32.totalorder %s58, %s59
      %p71 = scmp.eq.s32.totalorder %s28, 1
      %p72 = por %p70, %p71
      %p74 = scmp.ne.s32.totalorder %s59, %s73
      %p75 = scmp.eq.s32.totalorder %s28, 0
      %p76 = por %p74, %p75
      %s78 = sadd.s32 %s77, 1
      %p81 = scmp.eq.s32.totalorder %s22, 1
      %p82 = scmp.ne.s32.totalorder %s77, %s79
      %p83 = scmp.eq.s32.totalorder %s22, 0
      %p84 = por %p82, %p83
      %p85 = scmp.ne.s32.totalorder %s77, %s79
      %p86 = scmp.eq.s32.totalorder %s27, 1
      %p87 = por %p85, %p86
      %p88 = scmp.ne.s32.totalorder %s79, %s80
      %p89 = scmp.eq.s32.totalorder %s27, 0
      %p90 = por %p88, %p89
      %p91 = scmp.ne.s32.totalorder %s79, %s80
      %p92 = scmp.eq.s32.totalorder %s28, 1
      %p93 = por %p91, %p92
      %p95 = scmp.ne.s32.totalorder %s80, %s94
      %p96 = scmp.eq.s32.totalorder %s28, 0
      %p97 = por %p95, %p96
      %s99 = sadd.s32 %s98, 1
      %p102 = scmp.eq.s32.totalorder %s22, 1
      %p103 = scmp.ne.s32.totalorder %s98, %s100
      %p104 = scmp.eq.s32.totalorder %s22, 0
      %p105 = por %p103, %p104
      %p106 = scmp.ne.s32.totalorder %s98, %s100
      %p107 = scmp.eq.s32.totalorder %s27, 1
      %p108 = por %p106, %p107
      %p109 = scmp.ne.s32.totalorder %s100, %s101
      %p110 = scmp.eq.s32.totalorder %s27, 0
      %p111 = por %p109, %p110
      %p112 = scmp.ne.s32.totalorder %s100, %s101
      %p113 = scmp.eq.s32.totalorder %s28, 1
      %p114 = por %p112, %p113
      %p116 = scmp.ne.s32.totalorder %s101, %s115
      %p117 = scmp.eq.s32.totalorder %s28, 0
      %p118 = por %p116, %p117
      %s120 = sadd.s32 %s119, 1
      %p123 = scmp.eq.s32.totalorder %s22, 1
      %p124 = scmp.ne.s32.totalorder %s119, %s121
      %p125 = scmp.eq.s32.totalorder %s22, 0
      %p126 = por %p124, %p125
      %p127 = scmp.ne.s32.totalorder %s119, %s121
      %p128 = scmp.eq.s32.totalorder %s27, 1
      %p129 = por %p127, %p128
      %p130 = scmp.ne.s32.totalorder %s121, %s122
      %p131 = scmp.eq.s32.totalorder %s27, 0
      %p132 = por %p130, %p131
      %p133 = scmp.ne.s32.totalorder %s121, %s122
      %p134 = scmp.eq.s32.totalorder %s28, 1
      %p135 = por %p133, %p134
      %p137 = scmp.ne.s32.totalorder %s122, %s136
      %p138 = scmp.eq.s32.totalorder %s28, 0
      %p139 = por %p137, %p138
      %s141 = sadd.s32 %s140, 1
      %p144 = scmp.eq.s32.totalorder %s22, 1
      %p145 = scmp.ne.s32.totalorder %s140, %s142
      %p146 = scmp.eq.s32.totalorder %s22, 0
      %p147 = por %p145, %p146
      %p148 = scmp.ne.s32.totalorder %s140, %s142
      %p149 = scmp.eq.s32.totalorder %s27, 1
      %p150 = por %p148, %p149
      %p151 = scmp.ne.s32.totalorder %s142, %s143
      %p152 = scmp.eq.s32.totalorder %s27, 0
      %p153 = por %p151, %p152
      %p154 = scmp.ne.s32.totalorder %s142, %s143
      %p155 = scmp.eq.s32.totalorder %s28, 1
      %p156 = por %p154, %p155
      %p158 = scmp.ne.s32.totalorder %s143, %s157
      %p159 = scmp.eq.s32.totalorder %s28, 0
      %p160 = por %p158, %p159
      %s162 = sadd.s32 %s161, 1
      %p165 = scmp.eq.s32.totalorder %s22, 1
      %p166 = scmp.ne.s32.totalorder %s161, %s163
      %p167 = scmp.eq.s32.totalorder %s22, 0
      %p168 = por %p166, %p167
      %p169 = scmp.ne.s32.totalorder %s161, %s163
      %p170 = scmp.eq.s32.totalorder %s27, 1
      %p171 = por %p169, %p170
      %p172 = scmp.ne.s32.totalorder %s163, %s164
      %p173 = scmp.eq.s32.totalorder %s27, 0
      %p174 = por %p172, %p173
      %p175 = scmp.ne.s32.totalorder %s163, %s164
      %p176 = scmp.eq.s32.totalorder %s28, 1
      %p177 = por %p175, %p176
      %p179 = scmp.ne.s32.totalorder %s164, %s178
      %p180 = scmp.eq.s32.totalorder %s28, 0
      %p181 = por %p179, %p180
      %s183 = sadd.s32 %s182, 1
      %p186 = scmp.eq.s32.totalorder %s22, 1
      %p187 = scmp.ne.s32.totalorder %s182, %s184
      %p188 = scmp.eq.s32.totalorder %s22, 0
      %p189 = por %p187, %p188
      %p190 = scmp.ne.s32.totalorder %s182, %s184
      %p191 = scmp.eq.s32.totalorder %s27, 1
      %p192 = por %p190, %p191
      %p193 = scmp.ne.s32.totalorder %s184, %s185
      %p194 = scmp.eq.s32.totalorder %s27, 0
      %p195 = por %p193, %p194
      %p196 = scmp.ne.s32.totalorder %s184, %s185
      %p197 = scmp.eq.s32.totalorder %s28, 1
      %p198 = por %p196, %p197
      %p200 = scmp.ne.s32.totalorder %s185, %s199
      %p201 = scmp.eq.s32.totalorder %s28, 0
      %p202 = por %p200, %p201
      %s204 = sadd.s32 %s203, 1
      %p207 = scmp.eq.s32.totalorder %s22, 1
      %p208 = scmp.ne.s32.totalorder %s203, %s205
      %p209 = scmp.eq.s32.totalorder %s22, 0
      %p210 = por %p208, %p209
      %p211 = scmp.ne.s32.totalorder %s203, %s205
      %p212 = scmp.eq.s32.totalorder %s27, 1
      %p213 = por %p211, %p212
      %p214 = scmp.ne.s32.totalorder %s205, %s206
      %p215 = scmp.eq.s32.totalorder %s27, 0
      %p216 = por %p214, %p215
      %p217 = scmp.ne.s32.totalorder %s205, %s206
      %p218 = scmp.eq.s32.totalorder %s28, 1
      %p219 = por %p217, %p218
      %p221 = scmp.ne.s32.totalorder %s206, %s220
      %p222 = scmp.eq.s32.totalorder %s28, 0
      %p223 = por %p221, %p222
      %s225 = sadd.s32 %s224, 1
      %p228 = scmp.eq.s32.totalorder %s22, 1
      %p229 = scmp.ne.s32.totalorder %s224, %s226
      %p230 = scmp.eq.s32.totalorder %s22, 0
      %p231 = por %p229, %p230
      %p232 = scmp.ne.s32.totalorder %s224, %s226
      %p233 = scmp.eq.s32.totalorder %s27, 1
      %p234 = por %p232, %p233
      %p235 = scmp.ne.s32.totalorder %s226, %s227
      %p236 = scmp.eq.s32.totalorder %s27, 0
      %p237 = por %p235, %p236
      %p238 = scmp.ne.s32.totalorder %s226, %s227
      %p239 = scmp.eq.s32.totalorder %s28, 1
      %p240 = por %p238, %p239
      %p242 = scmp.ne.s32.totalorder %s227, %s241
      %p243 = scmp.eq.s32.totalorder %s28, 0
      %p244 = por %p242, %p243
      %s246 = sadd.s32 %s245, 1
      %p249 = scmp.eq.s32.totalorder %s22, 1
      %p250 = scmp.ne.s32.totalorder %s245, %s247
      %p251 = scmp.eq.s32.totalorder %s22, 0
      %p252 = por %p250, %p251
      %p253 = scmp.ne.s32.totalorder %s245, %s247
      %p254 = scmp.eq.s32.totalorder %s27, 1
      %p255 = por %p253, %p254
      %p256 = scmp.ne.s32.totalorder %s247, %s248
      %p257 = scmp.eq.s32.totalorder %s27, 0
      %p258 = por %p256, %p257
      %p259 = scmp.ne.s32.totalorder %s247, %s248
      %p260 = scmp.eq.s32.totalorder %s28, 1
      %p261 = por %p259, %p260
      %p263 = scmp.ne.s32.totalorder %s248, %s262
      %p264 = scmp.eq.s32.totalorder %s28, 0
      %p265 = por %p263, %p264
      %s266 = ssub.s32 %s22, %s29
      %p267 = scmp.eq.s32.totalorder %s266, 0
      %s269 = sadd.s32 %s268, 1
      %s270 = scalar_select %p267, %s268, %s269
      %p273 = pneg %p267
      %p274 = scmp.eq.s32.totalorder %s22, 1
      %p275 = por %p273, %p274
      %p276 = scmp.ne.s32.totalorder %s268, %s271
      %p277 = scmp.eq.s32.totalorder %s22, 0
      %p278 = por %p276, %p277
      %p279 = scmp.ne.s32.totalorder %s268, %s271
      %p280 = scmp.eq.s32.totalorder %s27, 1
      %p281 = por %p279, %p280
      %p282 = scmp.ne.s32.totalorder %s271, %s272
      %p283 = scmp.eq.s32.totalorder %s27, 0
      %p284 = por %p282, %p283
      %p285 = scmp.ne.s32.totalorder %s271, %s272
      %p286 = scmp.eq.s32.totalorder %s28, 1
      %p287 = por %p285, %p286
      %p289 = scmp.ne.s32.totalorder %s272, %s288
      %p290 = scmp.eq.s32.totalorder %s28, 0
      %p291 = por %p289, %p290
      %p292 = scmp.le.s32.totalorder 1, %s22
      %p293 = scmp.lt.s32.totalorder %s22, 3
      %p294 = pnand %p292, %p293
      %p295 = pneg %p294
      // Predicated region
      $region9: #{tpu_custom_call.1} parent=5 // pred_check
        _
      $region10: #{tpu_custom_call.1} parent=5 // pred_check_branch
        %297 = sbr.rel (%p294) target = $region12
      $region11: #{tpu_custom_call.1} parent=5 // pred_region
        %s298 = ssub.s32 %s22, 1
        // Predicated region
        $region13: #{tpu_custom_call.1} parent=11 // pred_check
          %p299 = pneg %p69
        $region14: #{tpu_custom_call.1} parent=11 // pred_check_branch
          %301 = sbr.rel (%p299) target = $region16
        $region15: #{tpu_custom_call.1} parent=11 // pred_region
          _
        $region16: #{tpu_custom_call.1} parent=11 // pred_fallthru
          _
        // Predicated region
        $region17: #{tpu_custom_call.1} parent=11 // pred_check
          %p302 = pneg %p90
        $region18: #{tpu_custom_call.1} parent=11 // pred_check_branch
          %304 = sbr.rel (%p302) target = $region20
        $region19: #{tpu_custom_call.1} parent=11 // pred_region
          _
        $region20: #{tpu_custom_call.1} parent=11 // pred_fallthru
          _
        // Predicated region
        $region21: #{tpu_custom_call.1} parent=11 // pred_check
          %p305 = pneg %p111
        $region22: #{tpu_custom_call.1} parent=11 // pred_check_branch
          %307 = sbr.rel (%p305) target = $region24
        $region23: #{tpu_custom_call.1} parent=11 // pred_region
          _
        $region24: #{tpu_custom_call.1} parent=11 // pred_fallthru
          _
        // Predicated region
        $region25: #{tpu_custom_call.1} parent=11 // pred_check
          %p308 = pneg %p132
        $region26: #{tpu_custom_call.1} parent=11 // pred_check_branch
          %310 = sbr.rel (%p308) target = $region28
        $region27: #{tpu_custom_call.1} parent=11 // pred_region
          _
        $region28: #{tpu_custom_call.1} parent=11 // pred_fallthru
          _
        // Predicated region
        $region29: #{tpu_custom_call.1} parent=11 // pred_check
          %p311 = pneg %p153
        $region30: #{tpu_custom_call.1} parent=11 // pred_check_branch
          %313 = sbr.rel (%p311) target = $region32
        $region31: #{tpu_custom_call.1} parent=11 // pred_region
          %s315 = ssub.s32 9216, 9216
          %316 = vsyncadd [#allocation4], %s315
          %s317 = sshll.u32 [#allocation3], 4
          %s318 = int_to_ptr.vmem [resolvable:$true] %s317
          %323 = dma.hbm_to_vmem [thread:$0]  %s5, 9216, %s318, [#allocation4], 64, 64, 4
        $region32: #{tpu_custom_call.1} parent=11 // pred_fallthru
          _
        // Predicated region
        $region33: #{tpu_custom_call.1} parent=11 // pred_check
          %p324 = pneg %p174
        $region34: #{tpu_custom_call.1} parent=11 // pred_check_branch
          %326 = sbr.rel (%p324) target = $region36
        $region35: #{tpu_custom_call.1} parent=11 // pred_region
          _
        $region36: #{tpu_custom_call.1} parent=11 // pred_fallthru
          _
        // Predicated region
        $region37: #{tpu_custom_call.1} parent=11 // pred_check
          %p327 = pneg %p195
        $region38: #{tpu_custom_call.1} parent=11 // pred_check_branch
          %329 = sbr.rel (%p327) target = $region40
        $region39: #{tpu_custom_call.1} parent=11 // pred_region
          _
        $region40: #{tpu_custom_call.1} parent=11 // pred_fallthru
          _
        // Predicated region
        $region41: #{tpu_custom_call.1} parent=11 // pred_check
          %p330 = pneg %p216
        $region42: #{tpu_custom_call.1} parent=11 // pred_check_branch
          %332 = sbr.rel (%p330) target = $region44
        $region43: #{tpu_custom_call.1} parent=11 // pred_region
          _
        $region44: #{tpu_custom_call.1} parent=11 // pred_fallthru
          _
        // Predicated region
        $region45: #{tpu_custom_call.1} parent=11 // pred_check
          %p333 = pneg %p237
        $region46: #{tpu_custom_call.1} parent=11 // pred_check_branch
          %335 = sbr.rel (%p333) target = $region48
        $region47: #{tpu_custom_call.1} parent=11 // pred_region
          %s337 = ssub.s32 9216, 9216
          %338 = vsyncadd [#allocation7], %s337
          %s339 = sshll.u32 [#allocation6], 4
          %s340 = int_to_ptr.vmem [resolvable:$true] %s339
          %345 = dma.hbm_to_vmem [thread:$0]  %s9, 9216, %s340, [#allocation7], 64, 64, 4
        $region48: #{tpu_custom_call.1} parent=11 // pred_fallthru
          _
        // Predicated region
        $region49: #{tpu_custom_call.1} parent=11 // pred_check
          %p346 = pneg %p258
        $region50: #{tpu_custom_call.1} parent=11 // pred_check_branch
          %348 = sbr.rel (%p346) target = $region52
        $region51: #{tpu_custom_call.1} parent=11 // pred_region
          _
        $region52: #{tpu_custom_call.1} parent=11 // pred_fallthru
          _
      $region12: #{tpu_custom_call.1} parent=5 // pred_fallthru
        _
      %p349 = scmp.lt.s32.totalorder %s22, 2
      // Predicated region
      $region53: #{tpu_custom_call.1} parent=5 // pred_check
        %p350 = pneg %p349
      $region54: #{tpu_custom_call.1} parent=5 // pred_check_branch
        %352 = sbr.rel (%p350) target = $region56
      $region55: #{tpu_custom_call.1} parent=5 // pred_region
        // Predicated region
        $region57: #{tpu_custom_call.1} parent=55 // pred_check
          %p353 = pneg %p42
        $region58: #{tpu_custom_call.1} parent=55 // pred_check_branch
          %355 = sbr.rel (%p353) target = $region60
        $region59: #{tpu_custom_call.1} parent=55 // pred_region
          %p356 = scmp.lt.s32.totalorder %s22, 1
          %s357 = scalar_select %p356, %s22, 1
          %s358 = smul.addr %s357, 8
          %s359 = smul.addr %s358, 8
          %s360 = scalar_lea.vmem %s0, %s359
        $region60: #{tpu_custom_call.1} parent=55 // pred_fallthru
          _
      $region56: #{tpu_custom_call.1} parent=5 // pred_fallthru
        _
      %p361 = scmp.le.s32.totalorder 1, %s22
      %p362 = scmp.lt.s32.totalorder %s22, 3
      %p363 = pnand %p361, %p362
      %p364 = pneg %p363
      // Predicated region
      $region61: #{tpu_custom_call.1} parent=5 // pred_check
        _
      $region62: #{tpu_custom_call.1} parent=5 // pred_check_branch
        %366 = sbr.rel (%p363) target = $region64
      $region63: #{tpu_custom_call.1} parent=5 // pred_region
        %s367 = ssub.s32 %s22, 1
        // Predicated region
        $region65: #{tpu_custom_call.1} parent=63 // pred_check
          %p368 = pneg %p153
        $region66: #{tpu_custom_call.1} parent=63 // pred_check_branch
          %370 = sbr.rel (%p368) target = $region68
        $region67: #{tpu_custom_call.1} parent=63 // pred_region
          %371 = dma.done [#allocation4], 9216
        $region68: #{tpu_custom_call.1} parent=63 // pred_fallthru
          _
        // Predicated region
        $region69: #{tpu_custom_call.1} parent=63 // pred_check
          %p372 = pneg %p237
        $region70: #{tpu_custom_call.1} parent=63 // pred_check_branch
          %374 = sbr.rel (%p372) target = $region72
        $region71: #{tpu_custom_call.1} parent=63 // pred_region
          %375 = dma.done [#allocation7], 9216
        $region72: #{tpu_custom_call.1} parent=63 // pred_fallthru
          _
        %p376 = scmp.lt.s32.totalorder %s27, 1
        %s377 = scalar_select %p376, %s27, 1
        %s378 = smul.addr %s377, 8
        %s379 = smul.addr %s378, 8
        %s380 = scalar_lea.vmem %s0, %s379
        %p381 = pneg %p48
        %p382 = pneg %p45
        %p383 = pneg %p69
        %p384 = pneg %p66
        %p385 = pneg %p90
        %p386 = pneg %p87
        %p387 = pneg %p111
        %p388 = pneg %p108
        %p389 = pneg %p132
        %p390 = pneg %p129
        %p391 = pneg %p153
        %p392 = pneg %p150
        %p393 = pneg %p174
        %p394 = pneg %p171
        %p395 = pneg %p195
        %p396 = pneg %p192
        %p397 = pneg %p216
        %p398 = pneg %p213
        %p399 = pneg %p237
        %p400 = pneg %p234
        %p401 = pneg %p258
        %p402 = pneg %p255
        %p403 = pneg %p284
        %p404 = pneg %p281
        %s405 = sand.u32 %s271, 1
        %s406 = scalar_lea.sflag [#allocation5], %s405
        %s407 = sand.u32 %s271, 1
        %s408 = smul.addr %s407, 64
        %s409 = scalar_lea.vmem [#allocation8], %s408
        %p410 = scmp.lt.s32.totalorder %s27, 1
        %s411 = scalar_select %p410, %s27, 1
        %s412 = smul.addr %s411, 8
        %s413 = smul.addr %s412, 8
        %s414 = scalar_lea.vmem %s0, %s413
        %416 = vst [vmem:[#allocation2] sm:$0xff] 0.0
        %417 = vst [vmem:[#allocation2 + $0x48] sm:$0xff] 0.0
        %v418 = vlaneseq
        %v419 = vshrl.u32 %v418, 7
        %v420 = vadd.s32 %v419, 8
        %v421 = vadd.s32 %v419, 16
        %v422 = vadd.s32 %v419, 24
        %v423 = vadd.s32 %v419, 32
        %v424 = vadd.s32 %v419, 40
        %v425 = vadd.s32 %v419, 48
        %v426 = vadd.s32 %v419, 56
        %vm427 = vcmp.lt.s32.totalorder %v419, 0
        %v428 = vsub.s32 0, %v419
        %v429 = vsel %vm427, %v428, %v419
        %v430 = vshrl.u32 %v429, 3
        %v431 = vand.u32 %v429, 7
        %v432 = vsub.s32 0, %v431
        %v433 = vsel %vm427, %v432, %v431
        %vm434 = vcmp.lt.s32.totalorder %v420, 0
        %v435 = vsub.s32 0, %v420
        %v436 = vsel %vm434, %v435, %v420
        %v437 = vshrl.u32 %v436, 3
        %v438 = vand.u32 %v436, 7
        %v439 = vsub.s32 0, %v438
        %v440 = vsel %vm434, %v439, %v438
        %vm441 = vcmp.lt.s32.totalorder %v421, 0
        %v442 = vsub.s32 0, %v421
        %v443 = vsel %vm441, %v442, %v421
        %v444 = vshrl.u32 %v443, 3
        %v445 = vand.u32 %v443, 7
        %v446 = vsub.s32 0, %v445
        %v447 = vsel %vm441, %v446, %v445
        %vm448 = vcmp.lt.s32.totalorder %v422, 0
        %v449 = vsub.s32 0, %v422
        %v450 = vsel %vm448, %v449, %v422
        %v451 = vshrl.u32 %v450, 3
        %v452 = vand.u32 %v450, 7
        %v453 = vsub.s32 0, %v452
        %v454 = vsel %vm448, %v453, %v452
        %vm455 = vcmp.lt.s32.totalorder %v423, 0
        %v456 = vsub.s32 0, %v423
        %v457 = vsel %vm455, %v456, %v423
        %v458 = vshrl.u32 %v457, 3
        %v459 = vand.u32 %v457, 7
        %v460 = vsub.s32 0, %v459
        %v461 = vsel %vm455, %v460, %v459
        %vm462 = vcmp.lt.s32.totalorder %v424, 0
        %v463 = vsub.s32 0, %v424
        %v464 = vsel %vm462, %v463, %v424
        %v465 = vshrl.u32 %v464, 3
        %v466 = vand.u32 %v464, 7
        %v467 = vsub.s32 0, %v466
        %v468 = vsel %vm462, %v467, %v466
        %vm469 = vcmp.lt.s32.totalorder %v425, 0
        %v470 = vsub.s32 0, %v425
        %v471 = vsel %vm469, %v470, %v425
        %v472 = vshrl.u32 %v471, 3
        %v473 = vand.u32 %v471, 7
        %v474 = vsub.s32 0, %v473
        %v475 = vsel %vm469, %v474, %v473
        %vm476 = vcmp.lt.s32.totalorder %v426, 0
        %v477 = vsub.s32 0, %v426
        %v478 = vsel %vm476, %v477, %v426
        %v479 = vshrl.u32 %v478, 3
        %v480 = vand.u32 %v478, 7
        %v481 = vsub.s32 0, %v480
        %v482 = vsel %vm476, %v481, %v480
        %vm483 = vcmp.ne.s32.totalorder %v433, 0
        %vm484 = vcmp.ne.s32.totalorder %v440, 0
        %vm485 = vcmp.ne.s32.totalorder %v447, 0
        %vm486 = vcmp.ne.s32.totalorder %v454, 0
        %vm487 = vcmp.ne.s32.totalorder %v461, 0
        %vm488 = vcmp.ne.s32.totalorder %v468, 0
        %vm489 = vcmp.ne.s32.totalorder %v475, 0
        %vm490 = vcmp.ne.s32.totalorder %v482, 0
        %vm491 = vcmp.lt.s32.totalorder %v433, 0
        %vm492 = vcmp.lt.s32.totalorder %v440, 0
        %vm493 = vcmp.lt.s32.totalorder %v447, 0
        %vm494 = vcmp.lt.s32.totalorder %v454, 0
        %vm495 = vcmp.lt.s32.totalorder %v461, 0
        %vm496 = vcmp.lt.s32.totalorder %v468, 0
        %vm497 = vcmp.lt.s32.totalorder %v475, 0
        %vm498 = vcmp.lt.s32.totalorder %v482, 0
        %vm499 = vmand %vm491, %vm483
        %vm500 = vmand %vm492, %vm484
        %vm501 = vmand %vm493, %vm485
        %vm502 = vmand %vm494, %vm486
        %vm503 = vmand %vm495, %vm487
        %vm504 = vmand %vm496, %vm488
        %vm505 = vmand %vm497, %vm489
        %vm506 = vmand %vm498, %vm490
        %v507 = vadd.s32 %v433, 8
        %v508 = vadd.s32 %v440, 8
        %v509 = vadd.s32 %v447, 8
        %v510 = vadd.s32 %v454, 8
        %v511 = vadd.s32 %v461, 8
        %v512 = vadd.s32 %v468, 8
        %v513 = vadd.s32 %v475, 8
        %v514 = vadd.s32 %v482, 8
        %v515 = vsel %vm499, %v507, %v433
        %v516 = vsel %vm500, %v508, %v440
        %v517 = vsel %vm501, %v509, %v447
        %v518 = vsel %vm502, %v510, %v454
        %v519 = vsel %vm503, %v511, %v461
        %v520 = vsel %vm504, %v512, %v468
        %v521 = vsel %vm505, %v513, %v475
        %v522 = vsel %vm506, %v514, %v482
        %vm523 = vcmp.eq.s32.totalorder %v515, 0
        %vm524 = vcmp.eq.s32.totalorder %v516, 0
        %vm525 = vcmp.eq.s32.totalorder %v517, 0
        %vm526 = vcmp.eq.s32.totalorder %v518, 0
        %vm527 = vcmp.eq.s32.totalorder %v519, 0
        %vm528 = vcmp.eq.s32.totalorder %v520, 0
        %vm529 = vcmp.eq.s32.totalorder %v521, 0
        %vm530 = vcmp.eq.s32.totalorder %v522, 0
        %vm531 = vcmp.eq.s32.totalorder %v515, 7
        %vm532 = vcmp.eq.s32.totalorder %v516, 7
        %vm533 = vcmp.eq.s32.totalorder %v517, 7
        %vm534 = vcmp.eq.s32.totalorder %v518, 7
        %vm535 = vcmp.eq.s32.totalorder %v519, 7
        %vm536 = vcmp.eq.s32.totalorder %v520, 7
        %vm537 = vcmp.eq.s32.totalorder %v521, 7
        %vm538 = vcmp.eq.s32.totalorder %v522, 7
        %v539 = vld [vmem:[%s1] sm:$0xff]
        %v540 = vld [vmem:[%s1 + $0x8] sm:$0xff]
        %v541 = vld [vmem:[%s1 + $0x10] sm:$0xff]
        %v542 = vld [vmem:[%s1 + $0x18] sm:$0xff]
        %v543 = vld [vmem:[%s1 + $0x20] sm:$0xff]
        %v544 = vld [vmem:[%s1 + $0x28] sm:$0xff]
        %v545 = vld [vmem:[%s1 + $0x30] sm:$0xff]
        %v546 = vld [vmem:[%s1 + $0x38] sm:$0xff]
        %v547 = vld [vmem:[%s1 + $0x40] sm:$0xff]
        %v548 = vld [vmem:[%s1 + $0x48] sm:$0xff]
        %v549 = vld [vmem:[%s1 + $0x50] sm:$0xff]
        %v550 = vld [vmem:[%s1 + $0x58] sm:$0xff]
        %v551 = vld [vmem:[%s1 + $0x60] sm:$0xff]
        %v552 = vld [vmem:[%s1 + $0x68] sm:$0xff]
        %v553 = vld [vmem:[%s1 + $0x70] sm:$0xff]
        %v554 = vld [vmem:[%s1 + $0x78] sm:$0xff]
        %v555 = vld [vmem:[%s2] sm:$0xff]
        %v556 = vld [vmem:[%s2 + $0x8] sm:$0xff]
        %v557 = vld [vmem:[%s2 + $0x10] sm:$0xff]
        %v558 = vld [vmem:[%s2 + $0x18] sm:$0xff]
        %v559 = vld [vmem:[%s414] sm:$0xff]
        %v560 = vld [vmem:[%s414 + $0x8] sm:$0xff]
        %v561 = vld [vmem:[%s414 + $0x10] sm:$0xff]
        %v562 = vld [vmem:[%s414 + $0x18] sm:$0xff]
        %v563 = vld [vmem:[%s414 + $0x20] sm:$0xff]
        %v564 = vld [vmem:[%s414 + $0x28] sm:$0xff]
        %v565 = vld [vmem:[%s414 + $0x30] sm:$0xff]
        %v566 = vld [vmem:[%s414 + $0x38] sm:$0xff]
        %v567 = vld [vmem:[%s3] sm:$0x1]
        %v568 = vld [vmem:[%s4] sm:$0x1]
        %v569 = vadd.f32 %v559, %v560
        %v570 = vadd.f32 %v569, %v561
        %v571 = vadd.f32 %v570, %v562
        %v572 = vadd.f32 %v571, %v563
        %v573 = vadd.f32 %v572, %v564
        %v574 = vadd.f32 %v573, %v565
        %v575 = vadd.f32 %v574, %v566
        %v576 = vrot.slane %v575, 4
        %v577 = vadd.f32 %v575, %v576
        %v578 = vrot.slane %v577, 2
        %v579 = vadd.f32 %v577, %v578
        %v580 = vrot.slane %v579, 1
        %v581 = vadd.f32 %v579, %v580
        %582 = vmatprep.subr.mxu0 0.0
        %583 = vmatpush1.msra.mxu0 %v539
        %584 = vmatprep.subr.mxu0 0.0
        %585 = vmatpush1.msra.mxu0 %v540
        %586 = vmatprep.subr.mxu0 0.0
        %587 = vmatpush1.msra.mxu0 %v541
        %588 = vmatprep.subr.mxu0 0.0
        %589 = vmatpush1.msra.mxu0 %v542
        %590 = vmatprep.subr.mxu0 0.0
        %591 = vmatpush1.msra.mxu0 %v543
        %592 = vmatprep.subr.mxu0 0.0
        %593 = vmatpush1.msra.mxu0 %v544
        %594 = vmatprep.subr.mxu0 0.0
        %595 = vmatpush1.msra.mxu0 %v545
        %596 = vmatprep.subr.mxu0 0.0
        %597 = vmatpush1.msra.mxu0 %v546
        %598 = vmatprep.subr.mxu0 0.0
        %599 = vmatpush1.msra.mxu0 %v547
        %600 = vmatprep.subr.mxu0 0.0
        %601 = vmatpush1.msra.mxu0 %v548
        %602 = vmatprep.subr.mxu0 0.0
        %603 = vmatpush1.msra.mxu0 %v549
        %604 = vmatprep.subr.mxu0 0.0
        %605 = vmatpush1.msra.mxu0 %v550
        %606 = vmatprep.subr.mxu0 0.0
        %607 = vmatpush1.msra.mxu0 %v551
        %608 = vmatprep.subr.mxu0 0.0
        %609 = vmatpush1.msra.mxu0 %v552
        %610 = vmatprep.subr.mxu0 0.0
        %611 = vmatpush1.msra.mxu0 %v553
        %612 = vmatprep.subr.mxu0 0.0
        %613 = vmatpush1.msra.mxu0 %v554
        %614 = vmatprep.subr.mxu0 0.0
        %615 = vmatpush1.msra.mxu0 0.0
        %616 = vmatprep.subr.mxu0 0.0
        %617 = vmatpush1.msra.mxu0 0.0
        %618 = vmatprep.subr.mxu0 0.0
        %619 = vmatpush1.msra.mxu0 0.0
        %620 = vmatprep.subr.mxu0 0.0
        %621 = vmatpush1.msra.mxu0 0.0
        %622 = vmatprep.subr.mxu0 0.0
        %623 = vmatpush1.msra.mxu0 0.0
        %624 = vmatprep.subr.mxu0 0.0
        %625 = vmatpush1.msra.mxu0 0.0
        %626 = vmatprep.subr.mxu0 0.0
        %627 = vmatpush1.msra.mxu0 0.0
        %628 = vmatprep.subr.mxu0 0.0
        %629 = vmatpush1.msra.mxu0 0.0
        %630 = vmatprep.subr.mxu0 0.0
        %631 = vmatpush1.msra.mxu0 0.0
        %632 = vmatprep.subr.mxu0 0.0
        %633 = vmatpush1.msra.mxu0 0.0
        %634 = vmatprep.subr.mxu0 0.0
        %635 = vmatpush1.msra.mxu0 0.0
        %636 = vmatprep.subr.mxu0 0.0
        %637 = vmatpush1.msra.mxu0 0.0
        %638 = vmatprep.subr.mxu0 0.0
        %639 = vmatpush1.msra.mxu0 0.0
        %640 = vmatprep.subr.mxu0 0.0
        %641 = vmatpush1.msra.mxu0 0.0
        %642 = vmatprep.subr.mxu0 0.0
        %643 = vmatpush1.msra.mxu0 0.0
        %644 = vmatprep.subr.mxu0 0.0
        %645 = vmatpush1.msra.mxu0 0.0
        %646 = vmatprep.mubr.f32.mxu0 0.0
        %647 = vmatmul.mubr.f32.gmra.mrb[0].mxu0 %v581
        %v648 = vpop.f32.mrb[0].mxu0
        %v649 = vadd.f32 0.0, %v648
        %v650 = vpop.f32.mrb[0].mxu0
        %651 = vdwg.mxu0
        %v652 = vrcp.pop 256.0
        %v653 = vmul.f32 %v649, %v652
        %vm654 = vcmask 261120
        %v656 = vsel %vm654, %v653, 0
        %658 = vmatprep.subr.mxu0 0.0
        %659 = vmatpush1.msra.mxu0 %v555
        %660 = vmatprep.subr.mxu0 0.0
        %661 = vmatpush1.msra.mxu0 %v556
        %662 = vmatprep.subr.mxu0 0.0
        %663 = vmatpush1.msra.mxu0 %v557
        %664 = vmatprep.subr.mxu0 0.0
        %665 = vmatpush1.msra.mxu0 %v558
        %666 = vmatprep.subr.mxu0 0.0
        %667 = vmatpush1.msra.mxu0 0.0
        %668 = vmatprep.subr.mxu0 0.0
        %669 = vmatpush1.msra.mxu0 0.0
        %670 = vmatprep.subr.mxu0 0.0
        %671 = vmatpush1.msra.mxu0 0.0
        %672 = vmatprep.subr.mxu0 0.0
        %673 = vmatpush1.msra.mxu0 0.0
        %674 = vmatprep.subr.mxu0 0.0
        %675 = vmatpush1.msra.mxu0 0.0
        %676 = vmatprep.subr.mxu0 0.0
        %677 = vmatpush1.msra.mxu0 0.0
        %678 = vmatprep.subr.mxu0 0.0
        %679 = vmatpush1.msra.mxu0 0.0
        %680 = vmatprep.subr.mxu0 0.0
        %681 = vmatpush1.msra.mxu0 0.0
        %682 = vmatprep.subr.mxu0 0.0
        %683 = vmatpush1.msra.mxu0 0.0
        %684 = vmatprep.subr.mxu0 0.0
        %685 = vmatpush1.msra.mxu0 0.0
        %686 = vmatprep.subr.mxu0 0.0
        %687 = vmatpush1.msra.mxu0 0.0
        %688 = vmatprep.subr.mxu0 0.0
        %689 = vmatpush1.msra.mxu0 0.0
        %690 = vmatprep.subr.mxu0 0.0
        %691 = vmatpush1.msra.mxu0 0.0
        %692 = vmatprep.subr.mxu0 0.0
        %693 = vmatpush1.msra.mxu0 0.0
        %694 = vmatprep.subr.mxu0 0.0
        %695 = vmatpush1.msra.mxu0 0.0
        %696 = vmatprep.subr.mxu0 0.0
        %697 = vmatpush1.msra.mxu0 0.0
        %698 = vmatprep.subr.mxu0 0.0
        %699 = vmatpush1.msra.mxu0 0.0
        %700 = vmatprep.subr.mxu0 0.0
        %701 = vmatpush1.msra.mxu0 0.0
        %702 = vmatprep.subr.mxu0 0.0
        %703 = vmatpush1.msra.mxu0 0.0
        %704 = vmatprep.subr.mxu0 0.0
        %705 = vmatpush1.msra.mxu0 0.0
        %706 = vmatprep.subr.mxu0 0.0
        %707 = vmatpush1.msra.mxu0 0.0
        %708 = vmatprep.subr.mxu0 0.0
        %709 = vmatpush1.msra.mxu0 0.0
        %710 = vmatprep.subr.mxu0 0.0
        %711 = vmatpush1.msra.mxu0 0.0
        %712 = vmatprep.subr.mxu0 0.0
        %713 = vmatpush1.msra.mxu0 0.0
        %714 = vmatprep.subr.mxu0 0.0
        %715 = vmatpush1.msra.mxu0 0.0
        %716 = vmatprep.subr.mxu0 0.0
        %717 = vmatpush1.msra.mxu0 0.0
        %718 = vmatprep.subr.mxu0 0.0
        %719 = vmatpush1.msra.mxu0 0.0
        %720 = vmatprep.subr.mxu0 0.0
        %721 = vmatpush1.msra.mxu0 0.0
        %722 = vmatprep.mubr.f32.mxu0 0.0
        %723 = vmatmul.mubr.f32.gmra.mrb[0].mxu0 %v656
        %v724 = vpop.f32.mrb[0].mxu0
        %v725 = vadd.f32 0.0, %v724
        %v726 = vpop.f32.mrb[0].mxu0
        %727 = vdwg.mxu0
        %v728 = vlaneseq
        %v729 = vshrl.u32 %v728, 7
        %v730 = vsub.s32 0, %v729
        %v731 = vrot.slane %v725, %v730
        %v732 = vsub.f32 %v559, %v731
        %v733 = vsub.f32 %v560, %v731
        %v734 = vsub.f32 %v561, %v731
        %v735 = vsub.f32 %v562, %v731
        %v736 = vsub.f32 %v563, %v731
        %v737 = vsub.f32 %v564, %v731
        %v738 = vsub.f32 %v565, %v731
        %v739 = vsub.f32 %v566, %v731
        %v740 = vmul.f32 %v732, %v732
        %v741 = vmul.f32 %v733, %v733
        %v742 = vmul.f32 %v734, %v734
        %v743 = vmul.f32 %v735, %v735
        %v744 = vmul.f32 %v736, %v736
        %v745 = vmul.f32 %v737, %v737
        %v746 = vmul.f32 %v738, %v738
        %v747 = vmul.f32 %v739, %v739
        %v748 = vadd.f32 %v740, %v741
        %v749 = vadd.f32 %v748, %v742
        %v750 = vadd.f32 %v749, %v743
        %v751 = vadd.f32 %v750, %v744
        %v752 = vadd.f32 %v751, %v745
        %v753 = vadd.f32 %v752, %v746
        %v754 = vadd.f32 %v753, %v747
        %v755 = vrot.slane %v754, 4
        %v756 = vadd.f32 %v754, %v755
        %v757 = vrot.slane %v756, 2
        %v758 = vadd.f32 %v756, %v757
        %v759 = vrot.slane %v758, 1
        %v760 = vadd.f32 %v758, %v759
        %761 = vmatprep.subr.mxu0 0.0
        %762 = vmatpush1.msra.mxu0 %v539
        %763 = vmatprep.subr.mxu0 0.0
        %764 = vmatpush1.msra.mxu0 %v540
        %765 = vmatprep.subr.mxu0 0.0
        %766 = vmatpush1.msra.mxu0 %v541
        %767 = vmatprep.subr.mxu0 0.0
        %768 = vmatpush1.msra.mxu0 %v542
        %769 = vmatprep.subr.mxu0 0.0
        %770 = vmatpush1.msra.mxu0 %v543
        %771 = vmatprep.subr.mxu0 0.0
        %772 = vmatpush1.msra.mxu0 %v544
        %773 = vmatprep.subr.mxu0 0.0
        %774 = vmatpush1.msra.mxu0 %v545
        %775 = vmatprep.subr.mxu0 0.0
        %776 = vmatpush1.msra.mxu0 %v546
        %777 = vmatprep.subr.mxu0 0.0
        %778 = vmatpush1.msra.mxu0 %v547
        %779 = vmatprep.subr.mxu0 0.0
        %780 = vmatpush1.msra.mxu0 %v548
        %781 = vmatprep.subr.mxu0 0.0
        %782 = vmatpush1.msra.mxu0 %v549
        %783 = vmatprep.subr.mxu0 0.0
        %784 = vmatpush1.msra.mxu0 %v550
        %785 = vmatprep.subr.mxu0 0.0
        %786 = vmatpush1.msra.mxu0 %v551
        %787 = vmatprep.subr.mxu0 0.0
        %788 = vmatpush1.msra.mxu0 %v552
        %789 = vmatprep.subr.mxu0 0.0
        %790 = vmatpush1.msra.mxu0 %v553
        %791 = vmatprep.subr.mxu0 0.0
        %792 = vmatpush1.msra.mxu0 %v554
        %793 = vmatprep.subr.mxu0 0.0
        %794 = vmatpush1.msra.mxu0 0.0
        %795 = vmatprep.subr.mxu0 0.0
        %796 = vmatpush1.msra.mxu0 0.0
        %797 = vmatprep.subr.mxu0 0.0
        %798 = vmatpush1.msra.mxu0 0.0
        %799 = vmatprep.subr.mxu0 0.0
        %800 = vmatpush1.msra.mxu0 0.0
        %801 = vmatprep.subr.mxu0 0.0
        %802 = vmatpush1.msra.mxu0 0.0
        %803 = vmatprep.subr.mxu0 0.0
        %804 = vmatpush1.msra.mxu0 0.0
        %805 = vmatprep.subr.mxu0 0.0
        %806 = vmatpush1.msra.mxu0 0.0
        %807 = vmatprep.subr.mxu0 0.0
        %808 = vmatpush1.msra.mxu0 0.0
        %809 = vmatprep.subr.mxu0 0.0
        %810 = vmatpush1.msra.mxu0 0.0
        %811 = vmatprep.subr.mxu0 0.0
        %812 = vmatpush1.msra.mxu0 0.0
        %813 = vmatprep.subr.mxu0 0.0
        %814 = vmatpush1.msra.mxu0 0.0
        %815 = vmatprep.subr.mxu0 0.0
        %816 = vmatpush1.msra.mxu0 0.0
        %817 = vmatprep.subr.mxu0 0.0
        %818 = vmatpush1.msra.mxu0 0.0
        %819 = vmatprep.subr.mxu0 0.0
        %820 = vmatpush1.msra.mxu0 0.0
        %821 = vmatprep.subr.mxu0 0.0
        %822 = vmatpush1.msra.mxu0 0.0
        %823 = vmatprep.subr.mxu0 0.0
        %824 = vmatpush1.msra.mxu0 0.0
        %825 = vmatprep.mubr.f32.mxu0 0.0
        %826 = vmatmul.mubr.f32.gmra.mrb[0].mxu0 %v760
        %v827 = vpop.f32.mrb[0].mxu0
        %v828 = vadd.f32 0.0, %v827
        %v829 = vpop.f32.mrb[0].mxu0
        %830 = vdwg.mxu0
        %v831 = vmul.f32 %v828, %v652
        %v832 = vadd.f32 %v831, 1e-05
        %v833 = vrsqrt.pop %v832
        %v835 = vsel %vm654, %v833, 0
        %837 = vmatprep.subr.mxu0 0.0
        %838 = vmatpush1.msra.mxu0 %v555
        %839 = vmatprep.subr.mxu0 0.0
        %840 = vmatpush1.msra.mxu0 %v556
        %841 = vmatprep.subr.mxu0 0.0
        %842 = vmatpush1.msra.mxu0 %v557
        %843 = vmatprep.subr.mxu0 0.0
        %844 = vmatpush1.msra.mxu0 %v558
        %845 = vmatprep.subr.mxu0 0.0
        %846 = vmatpush1.msra.mxu0 0.0
        %847 = vmatprep.subr.mxu0 0.0
        %848 = vmatpush1.msra.mxu0 0.0
        %849 = vmatprep.subr.mxu0 0.0
        %850 = vmatpush1.msra.mxu0 0.0
        %851 = vmatprep.subr.mxu0 0.0
        %852 = vmatpush1.msra.mxu0 0.0
        %853 = vmatprep.subr.mxu0 0.0
        %854 = vmatpush1.msra.mxu0 0.0
        %855 = vmatprep.subr.mxu0 0.0
        %856 = vmatpush1.msra.mxu0 0.0
        %857 = vmatprep.subr.mxu0 0.0
        %858 = vmatpush1.msra.mxu0 0.0
        %859 = vmatprep.subr.mxu0 0.0
        %860 = vmatpush1.msra.mxu0 0.0
        %861 = vmatprep.subr.mxu0 0.0
        %862 = vmatpush1.msra.mxu0 0.0
        %863 = vmatprep.subr.mxu0 0.0
        %864 = vmatpush1.msra.mxu0 0.0
        %865 = vmatprep.subr.mxu0 0.0
        %866 = vmatpush1.msra.mxu0 0.0
        %867 = vmatprep.subr.mxu0 0.0
        %868 = vmatpush1.msra.mxu0 0.0
        %869 = vmatprep.subr.mxu0 0.0
        %870 = vmatpush1.msra.mxu0 0.0
        %871 = vmatprep.subr.mxu0 0.0
        %872 = vmatpush1.msra.mxu0 0.0
        %873 = vmatprep.subr.mxu0 0.0
        %874 = vmatpush1.msra.mxu0 0.0
        %875 = vmatprep.subr.mxu0 0.0
        %876 = vmatpush1.msra.mxu0 0.0
        %877 = vmatprep.subr.mxu0 0.0
        %878 = vmatpush1.msra.mxu0 0.0
        %879 = vmatprep.subr.mxu0 0.0
        %880 = vmatpush1.msra.mxu0 0.0
        %881 = vmatprep.subr.mxu0 0.0
        %882 = vmatpush1.msra.mxu0 0.0
        %883 = vmatprep.subr.mxu0 0.0
        %884 = vmatpush1.msra.mxu0 0.0
        %885 = vmatprep.subr.mxu0 0.0
        %886 = vmatpush1.msra.mxu0 0.0
        %887 = vmatprep.subr.mxu0 0.0
        %888 = vmatpush1.msra.mxu0 0.0
        %889 = vmatprep.subr.mxu0 0.0
        %890 = vmatpush1.msra.mxu0 0.0
        %891 = vmatprep.subr.mxu0 0.0
        %892 = vmatpush1.msra.mxu0 0.0
        %893 = vmatprep.subr.mxu0 0.0
        %894 = vmatpush1.msra.mxu0 0.0
        %895 = vmatprep.subr.mxu0 0.0
        %896 = vmatpush1.msra.mxu0 0.0
        %897 = vmatprep.subr.mxu0 0.0
        %898 = vmatpush1.msra.mxu0 0.0
        %899 = vmatprep.subr.mxu0 0.0
        %900 = vmatpush1.msra.mxu0 0.0
        %901 = vmatprep.mubr.f32.mxu0 0.0
        %902 = vmatmul.mubr.f32.gmra.mrb[0].mxu0 %v835
        %v903 = vpop.f32.mrb[0].mxu0
        %v904 = vadd.f32 0.0, %v903
        %v905 = vpop.f32.mrb[0].mxu0
        %906 = vdwg.mxu0
        %v907 = vmul.f32 %v904, %v567
        %v908 = vlaneseq
        %v909 = vshrl.u32 %v908, 7
        %v910 = vsub.s32 0, %v909
        %v911 = vrot.slane %v907, %v910
        %v912 = vmul.f32 %v732, %v911
        %v913 = vmul.f32 %v733, %v911
        %v914 = vmul.f32 %v734, %v911
        %v915 = vmul.f32 %v735, %v911
        %v916 = vmul.f32 %v736, %v911
        %v917 = vmul.f32 %v737, %v911
        %v918 = vmul.f32 %v738, %v911
        %v919 = vmul.f32 %v739, %v911
        %v921 = vlaneseq
        %v922 = vshrl.u32 %v921, 7
        %v923 = vsub.s32 0, %v922
        %v924 = vrot.slane %v568, %v923
        %v926 = vadd.f32 %v912, %v924
        %v927 = vadd.f32 %v913, %v924
        %v928 = vadd.f32 %v914, %v924
        %v929 = vadd.f32 %v915, %v924
        %v930 = vadd.f32 %v916, %v924
        %v931 = vadd.f32 %v917, %v924
        %v932 = vadd.f32 %v918, %v924
        %v933 = vadd.f32 %v919, %v924
        %v934 = vxor.u32 %v926, 2147483648
        %v935 = vxor.u32 %v927, 2147483648
        %v936 = vxor.u32 %v928, 2147483648
        %v937 = vxor.u32 %v929, 2147483648
        %v938 = vxor.u32 %v930, 2147483648
        %v939 = vxor.u32 %v931, 2147483648
        %v940 = vxor.u32 %v932, 2147483648
        %v941 = vxor.u32 %v933, 2147483648
        %v942 = vmul.f32 %v934, 1.442695
        %v943 = vpow.pop %v942
        %v944 = vmul.f32 %v935, 1.442695
        %v945 = vpow.pop %v944
        %v946 = vmul.f32 %v936, 1.442695
        %v947 = vpow.pop %v946
        %v948 = vmul.f32 %v937, 1.442695
        %v949 = vpow.pop %v948
        %v950 = vmul.f32 %v938, 1.442695
        %v951 = vpow.pop %v950
        %v952 = vmul.f32 %v939, 1.442695
        %v953 = vpow.pop %v952
        %v954 = vmul.f32 %v940, 1.442695
        %v955 = vpow.pop %v954
        %v956 = vmul.f32 %v941, 1.442695
        %v957 = vpow.pop %v956
        %v958 = vadd.f32 %v943, 1.0
        %v959 = vadd.f32 %v945, 1.0
        %v960 = vadd.f32 %v947, 1.0
        %v961 = vadd.f32 %v949, 1.0
        %v962 = vadd.f32 %v951, 1.0
        %v963 = vadd.f32 %v953, 1.0
        %v964 = vadd.f32 %v955, 1.0
        %v965 = vadd.f32 %v957, 1.0
        %v966 = vrcp.pop %v958
        %v967 = vmul.f32 1.0, %v966
        %v968 = vrcp.pop %v959
        %v969 = vmul.f32 1.0, %v968
        %v970 = vrcp.pop %v960
        %v971 = vmul.f32 1.0, %v970
        %v972 = vrcp.pop %v961
        %v973 = vmul.f32 1.0, %v972
        %v974 = vrcp.pop %v962
        %v975 = vmul.f32 1.0, %v974
        %v976 = vrcp.pop %v963
        %v977 = vmul.f32 1.0, %v976
        %v978 = vrcp.pop %v964
        %v979 = vmul.f32 1.0, %v978
        %v980 = vrcp.pop %v965
        %v981 = vmul.f32 1.0, %v980
        %v982 = vmul.f32 %v926, %v967
        %v983 = vmul.f32 %v927, %v969
        %v984 = vmul.f32 %v928, %v971
        %v985 = vmul.f32 %v929, %v973
        %v986 = vmul.f32 %v930, %v975
        %v987 = vmul.f32 %v931, %v977
        %v988 = vmul.f32 %v932, %v979
        %v989 = vmul.f32 %v933, %v981
        %990 = vst [vmem:[#allocation2 + $0x8] sm:$0xff] %v982
        %991 = vst [vmem:[#allocation2 + $0x10] sm:$0xff] %v983
        %992 = vst [vmem:[#allocation2 + $0x18] sm:$0xff] %v984
        %993 = vst [vmem:[#allocation2 + $0x20] sm:$0xff] %v985
        %994 = vst [vmem:[#allocation2 + $0x28] sm:$0xff] %v986
        %995 = vst [vmem:[#allocation2 + $0x30] sm:$0xff] %v987
        %996 = vst [vmem:[#allocation2 + $0x38] sm:$0xff] %v988
        %997 = vst [vmem:[#allocation2 + $0x40] sm:$0xff] %v989
        %v998 = vld [vmem:[%s6] sm:$0x1]
        %v999 = vld [vmem:[#allocation2] sm:$0xff]
        %v1000 = vld [vmem:[#allocation2 + $0x8] sm:$0xff]
        %v1001 = vld [vmem:[#allocation2 + $0x10] sm:$0xff]
        %v1002 = vld [vmem:[#allocation2 + $0x18] sm:$0xff]
        %v1003 = vld [vmem:[#allocation2 + $0x20] sm:$0xff]
        %v1004 = vld [vmem:[#allocation2 + $0x28] sm:$0xff]
        %v1005 = vld [vmem:[#allocation2 + $0x30] sm:$0xff]
        %v1006 = vld [vmem:[#allocation2 + $0x38] sm:$0xff]
        %v1007 = vpack.c.bf16 %v1000, %v999
        %v1008 = vpack.c.bf16 %v1002, %v1001
        %v1009 = vpack.c.bf16 %v1004, %v1003
        %v1010 = vpack.c.bf16 %v1006, %v1005
        %v1011 = vld [vmem:[#allocation3] sm:$0xf]
        %v1012 = vld [vmem:[#allocation3 + $0x4] sm:$0xf]
        %v1013 = vld [vmem:[#allocation3 + $0x8] sm:$0xf]
        %v1014 = vld [vmem:[#allocation3 + $0xc] sm:$0xf]
        %v1015 = vld [vmem:[#allocation3 + $0x10] sm:$0xf]
        %v1016 = vld [vmem:[#allocation3 + $0x14] sm:$0xf]
        %v1017 = vld [vmem:[#allocation3 + $0x18] sm:$0xf]
        %v1018 = vld [vmem:[#allocation3 + $0x1c] sm:$0xf]
        %v1019 = vld [vmem:[#allocation3 + $0x20] sm:$0xf]
        %v1020 = vld [vmem:[#allocation3 + $0x24] sm:$0xf]
        %v1021 = vld [vmem:[#allocation3 + $0x28] sm:$0xf]
        %v1022 = vld [vmem:[#allocation3 + $0x2c] sm:$0xf]
        %v1023 = vld [vmem:[#allocation3 + $0x30] sm:$0xf]
        %v1024 = vld [vmem:[#allocation3 + $0x34] sm:$0xf]
        %v1025 = vld [vmem:[#allocation3 + $0x38] sm:$0xf]
        %v1026 = vld [vmem:[#allocation3 + $0x3c] sm:$0xf]
        %s1027 = scalar_lea.vmem [#allocation3], 64
        %v1028 = vld [vmem:[%s1027] sm:$0xf]
        %v1029 = vld [vmem:[%s1027 + $0x4] sm:$0xf]
        %v1030 = vld [vmem:[%s1027 + $0x8] sm:$0xf]
        %v1031 = vld [vmem:[%s1027 + $0xc] sm:$0xf]
        %v1032 = vld [vmem:[%s1027 + $0x10] sm:$0xf]
        %v1033 = vld [vmem:[%s1027 + $0x14] sm:$0xf]
        %v1034 = vld [vmem:[%s1027 + $0x18] sm:$0xf]
        %v1035 = vld [vmem:[%s1027 + $0x1c] sm:$0xf]
        %v1036 = vld [vmem:[%s1027 + $0x20] sm:$0xf]
        %v1037 = vld [vmem:[%s1027 + $0x24] sm:$0xf]
        %v1038 = vld [vmem:[%s1027 + $0x28] sm:$0xf]
        %v1039 = vld [vmem:[%s1027 + $0x2c] sm:$0xf]
        %v1040 = vld [vmem:[%s1027 + $0x30] sm:$0xf]
        %v1041 = vld [vmem:[%s1027 + $0x34] sm:$0xf]
        %v1042 = vld [vmem:[%s1027 + $0x38] sm:$0xf]
        %v1043 = vld [vmem:[%s1027 + $0x3c] sm:$0xf]
        %s1044 = scalar_lea.vmem [#allocation3], 128
        %v1045 = vld [vmem:[%s1044] sm:$0xf]
        %v1046 = vld [vmem:[%s1044 + $0x4] sm:$0xf]
        %v1047 = vld [vmem:[%s1044 + $0x8] sm:$0xf]
        %v1048 = vld [vmem:[%s1044 + $0xc] sm:$0xf]
        %v1049 = vld [vmem:[%s1044 + $0x10] sm:$0xf]
        %v1050 = vld [vmem:[%s1044 + $0x14] sm:$0xf]
        %v1051 = vld [vmem:[%s1044 + $0x18] sm:$0xf]
        %v1052 = vld [vmem:[%s1044 + $0x1c] sm:$0xf]
        %v1053 = vld [vmem:[%s1044 + $0x20] sm:$0xf]
        %v1054 = vld [vmem:[%s1044 + $0x24] sm:$0xf]
        %v1055 = vld [vmem:[%s1044 + $0x28] sm:$0xf]
        %v1056 = vld [vmem:[%s1044 + $0x2c] sm:$0xf]
        %v1057 = vld [vmem:[%s1044 + $0x30] sm:$0xf]
        %v1058 = vld [vmem:[%s1044 + $0x34] sm:$0xf]
        %v1059 = vld [vmem:[%s1044 + $0x38] sm:$0xf]
        %v1060 = vld [vmem:[%s1044 + $0x3c] sm:$0xf]
        %v1061 = vld [vmem:[#allocation2 + $0x40] sm:$0xff]
        %v1062 = vpack.c.bf16 %v1001, %v1000
        %v1063 = vpack.c.bf16 %v1003, %v1002
        %v1064 = vpack.c.bf16 %v1005, %v1004
        %v1065 = vpack.c.bf16 %v1061, %v1006
        %s1066 = scalar_lea.vmem [#allocation3], 192
        %v1067 = vld [vmem:[%s1066] sm:$0xf]
        %v1068 = vld [vmem:[%s1066 + $0x4] sm:$0xf]
        %v1069 = vld [vmem:[%s1066 + $0x8] sm:$0xf]
        %v1070 = vld [vmem:[%s1066 + $0xc] sm:$0xf]
        %v1071 = vld [vmem:[%s1066 + $0x10] sm:$0xf]
        %v1072 = vld [vmem:[%s1066 + $0x14] sm:$0xf]
        %v1073 = vld [vmem:[%s1066 + $0x18] sm:$0xf]
        %v1074 = vld [vmem:[%s1066 + $0x1c] sm:$0xf]
        %v1075 = vld [vmem:[%s1066 + $0x20] sm:$0xf]
        %v1076 = vld [vmem:[%s1066 + $0x24] sm:$0xf]
        %v1077 = vld [vmem:[%s1066 + $0x28] sm:$0xf]
        %v1078 = vld [vmem:[%s1066 + $0x2c] sm:$0xf]
        %v1079 = vld [vmem:[%s1066 + $0x30] sm:$0xf]
        %v1080 = vld [vmem:[%s1066 + $0x34] sm:$0xf]
        %v1081 = vld [vmem:[%s1066 + $0x38] sm:$0xf]
        %v1082 = vld [vmem:[%s1066 + $0x3c] sm:$0xf]
        %v1099 = vunpack.c.l.b16 %v1067
        %v1100 = vunpack.c.l.b16 %v1068
        %v1101 = vunpack.c.l.b16 %v1069
        %v1102 = vunpack.c.l.b16 %v1070
        %v1103 = vunpack.c.l.b16 %v1071
        %v1104 = vunpack.c.l.b16 %v1072
        %v1105 = vunpack.c.l.b16 %v1073
        %v1106 = vunpack.c.l.b16 %v1074
        %v1107 = vunpack.c.l.b16 %v1075
        %v1108 = vunpack.c.l.b16 %v1076
        %v1109 = vunpack.c.l.b16 %v1077
        %v1110 = vunpack.c.l.b16 %v1078
        %v1111 = vunpack.c.l.b16 %v1079
        %v1112 = vunpack.c.l.b16 %v1080
        %v1113 = vunpack.c.l.b16 %v1081
        %v1114 = vunpack.c.l.b16 %v1082
        %v1115 = vpack.c.b16 %v1100, %v1099
        %v1116 = vpack.c.b16 %v1102, %v1101
        %v1117 = vpack.c.b16 %v1104, %v1103
        %v1118 = vpack.c.b16 %v1106, %v1105
        %v1119 = vpack.c.b16 %v1108, %v1107
        %v1120 = vpack.c.b16 %v1110, %v1109
        %v1121 = vpack.c.b16 %v1112, %v1111
        %v1122 = vpack.c.b16 %v1114, %v1113
        %1131 = vmatprep.subr.bf16.mxu0 0
        %1132 = vmatpush1.bf16.msra.mxu0 %v1115
        %1133 = vmatprep.subr.bf16.mxu0 0
        %1134 = vmatpush1.bf16.msra.mxu0 %v1116
        %1135 = vmatprep.subr.bf16.mxu0 0
        %1136 = vmatpush1.bf16.msra.mxu0 %v1117
        %1137 = vmatprep.subr.bf16.mxu0 0
        %1138 = vmatpush1.bf16.msra.mxu0 %v1118
        %1139 = vmatprep.subr.bf16.mxu0 0
        %1140 = vmatpush1.bf16.msra.mxu0 %v1119
        %1141 = vmatprep.subr.bf16.mxu0 0
        %1142 = vmatpush1.bf16.msra.mxu0 %v1120
        %1143 = vmatprep.subr.bf16.mxu0 0
        %1144 = vmatpush1.bf16.msra.mxu0 %v1121
        %1145 = vmatprep.subr.bf16.mxu0 0
        %1146 = vmatpush1.bf16.msra.mxu0 %v1122
        %1147 = vmatprep.subr.bf16.mxu0 0
        %1148 = vmatpush1.bf16.msra.mxu0 0
        %1149 = vmatprep.subr.bf16.mxu0 0
        %1150 = vmatpush1.bf16.msra.mxu0 0
        %1151 = vmatprep.subr.bf16.mxu0 0
        %1152 = vmatpush1.bf16.msra.mxu0 0
        %1153 = vmatprep.subr.bf16.mxu0 0
        %1154 = vmatpush1.bf16.msra.mxu0 0
        %1155 = vmatprep.subr.bf16.mxu0 0
        %1156 = vmatpush1.bf16.msra.mxu0 0
        %1157 = vmatprep.subr.bf16.mxu0 0
        %1158 = vmatpush1.bf16.msra.mxu0 0
        %1159 = vmatprep.subr.bf16.mxu0 0
        %1160 = vmatpush1.bf16.msra.mxu0 0
        %1161 = vmatprep.subr.bf16.mxu0 0
        %1162 = vmatpush1.bf16.msra.mxu0 0
        %1163 = vmatprep.mubr.bf16.mxu0 0
        %1164 = vmatmul.mubr.bf16.gmra.mrb[0].mxu0 %v1062
        %v1165 = vpop.f32.mrb[0].mxu0
        %v1166 = vadd.f32 0.0, %v1165
        %v1167 = vpop.f32.mrb[0].mxu0
        %v1168 = vpop.f32.mrb[0].mxu0
        %v1169 = vadd.f32 0.0, %v1168
        %v1170 = vpop.f32.mrb[0].mxu0
        %1171 = vmatprep.mubr.bf16.mxu0 0
        %1172 = vmatmul.mubr.bf16.gmra.mrb[0].mxu0 %v1063
        %v1173 = vpop.f32.mrb[0].mxu0
        %v1174 = vadd.f32 0.0, %v1173
        %v1175 = vpop.f32.mrb[0].mxu0
        %v1176 = vpop.f32.mrb[0].mxu0
        %v1177 = vadd.f32 0.0, %v1176
        %v1178 = vpop.f32.mrb[0].mxu0
        %1179 = vmatprep.mubr.bf16.mxu0 0
        %1180 = vmatmul.mubr.bf16.gmra.mrb[0].mxu0 %v1064
        %v1181 = vpop.f32.mrb[0].mxu0
        %v1182 = vadd.f32 0.0, %v1181
        %v1183 = vpop.f32.mrb[0].mxu0
        %v1184 = vpop.f32.mrb[0].mxu0
        %v1185 = vadd.f32 0.0, %v1184
        %v1186 = vpop.f32.mrb[0].mxu0
        %1187 = vmatprep.mubr.bf16.mxu0 0
        %1188 = vmatmul.mubr.bf16.gmra.mrb[0].mxu0 %v1065
        %v1189 = vpop.f32.mrb[0].mxu0
        %v1190 = vadd.f32 0.0, %v1189
        %v1191 = vpop.f32.mrb[0].mxu0
        %v1192 = vpop.f32.mrb[0].mxu0
        %v1193 = vadd.f32 0.0, %v1192
        %v1194 = vpop.f32.mrb[0].mxu0
        %1195 = vdwg.mxu0
        %v1212 = vunpack.c.l.b16 %v1011
        %v1213 = vunpack.c.l.b16 %v1012
        %v1214 = vunpack.c.l.b16 %v1013
        %v1215 = vunpack.c.l.b16 %v1014
        %v1216 = vunpack.c.l.b16 %v1015
        %v1217 = vunpack.c.l.b16 %v1016
        %v1218 = vunpack.c.l.b16 %v1017
        %v1219 = vunpack.c.l.b16 %v1018
        %v1220 = vunpack.c.l.b16 %v1019
        %v1221 = vunpack.c.l.b16 %v1020
        %v1222 = vunpack.c.l.b16 %v1021
        %v1223 = vunpack.c.l.b16 %v1022
        %v1224 = vunpack.c.l.b16 %v1023
        %v1225 = vunpack.c.l.b16 %v1024
        %v1226 = vunpack.c.l.b16 %v1025
        %v1227 = vunpack.c.l.b16 %v1026
        %v1228 = vpack.c.b16 %v1213, %v1212
        %v1229 = vpack.c.b16 %v1215, %v1214
        %v1230 = vpack.c.b16 %v1217, %v1216
        %v1231 = vpack.c.b16 %v1219, %v1218
        %v1232 = vpack.c.b16 %v1221, %v1220
        %v1233 = vpack.c.b16 %v1223, %v1222
        %v1234 = vpack.c.b16 %v1225, %v1224
        %v1235 = vpack.c.b16 %v1227, %v1226
        %1244 = vmatprep.subr.bf16.mxu0 0
        %1245 = vmatpush1.bf16.msra.mxu0 %v1228
        %1246 = vmatprep.subr.bf16.mxu0 0
        %1247 = vmatpush1.bf16.msra.mxu0 %v1229
        %1248 = vmatprep.subr.bf16.mxu0 0
        %1249 = vmatpush1.bf16.msra.mxu0 %v1230
        %1250 = vmatprep.subr.bf16.mxu0 0
        %1251 = vmatpush1.bf16.msra.mxu0 %v1231
        %1252 = vmatprep.subr.bf16.mxu0 0
        %1253 = vmatpush1.bf16.msra.mxu0 %v1232
        %1254 = vmatprep.subr.bf16.mxu0 0
        %1255 = vmatpush1.bf16.msra.mxu0 %v1233
        %1256 = vmatprep.subr.bf16.mxu0 0
        %1257 = vmatpush1.bf16.msra.mxu0 %v1234
        %1258 = vmatprep.subr.bf16.mxu0 0
        %1259 = vmatpush1.bf16.msra.mxu0 %v1235
        %1260 = vmatprep.subr.bf16.mxu0 0
        %1261 = vmatpush1.bf16.msra.mxu0 0
        %1262 = vmatprep.subr.bf16.mxu0 0
        %1263 = vmatpush1.bf16.msra.mxu0 0
        %1264 = vmatprep.subr.bf16.mxu0 0
        %1265 = vmatpush1.bf16.msra.mxu0 0
        %1266 = vmatprep.subr.bf16.mxu0 0
        %1267 = vmatpush1.bf16.msra.mxu0 0
        %1268 = vmatprep.subr.bf16.mxu0 0
        %1269 = vmatpush1.bf16.msra.mxu0 0
        %1270 = vmatprep.subr.bf16.mxu0 0
        %1271 = vmatpush1.bf16.msra.mxu0 0
        %1272 = vmatprep.subr.bf16.mxu0 0
        %1273 = vmatpush1.bf16.msra.mxu0 0
        %1274 = vmatprep.subr.bf16.mxu0 0
        %1275 = vmatpush1.bf16.msra.mxu0 0
        %1276 = vmatprep.mubr.bf16.mxu0 0
        %1277 = vmatmul.mubr.bf16.gmra.mrb[0].mxu0 %v1007
        %v1278 = vpop.f32.mrb[0].mxu0
        %v1279 = vadd.f32 %v1166, %v1278
        %v1280 = vpop.f32.mrb[0].mxu0
        %v1281 = vpop.f32.mrb[0].mxu0
        %v1282 = vadd.f32 %v1169, %v1281
        %v1283 = vpop.f32.mrb[0].mxu0
        %1284 = vmatprep.mubr.bf16.mxu0 0
        %1285 = vmatmul.mubr.bf16.gmra.mrb[0].mxu0 %v1008
        %v1286 = vpop.f32.mrb[0].mxu0
        %v1287 = vadd.f32 %v1174, %v1286
        %v1288 = vpop.f32.mrb[0].mxu0
        %v1289 = vpop.f32.mrb[0].mxu0
        %v1290 = vadd.f32 %v1177, %v1289
        %v1291 = vpop.f32.mrb[0].mxu0
        %1292 = vmatprep.mubr.bf16.mxu0 0
        %1293 = vmatmul.mubr.bf16.gmra.mrb[0].mxu0 %v1009
        %v1294 = vpop.f32.mrb[0].mxu0
        %v1295 = vadd.f32 %v1182, %v1294
        %v1296 = vpop.f32.mrb[0].mxu0
        %v1297 = vpop.f32.mrb[0].mxu0
        %v1298 = vadd.f32 %v1185, %v1297
        %v1299 = vpop.f32.mrb[0].mxu0
        %1300 = vmatprep.mubr.bf16.mxu0 0
        %1301 = vmatmul.mubr.bf16.gmra.mrb[0].mxu0 %v1010
        %v1302 = vpop.f32.mrb[0].mxu0
        %v1303 = vadd.f32 %v1190, %v1302
        %v1304 = vpop.f32.mrb[0].mxu0
        %v1305 = vpop.f32.mrb[0].mxu0
        %v1306 = vadd.f32 %v1193, %v1305
        %v1307 = vpop.f32.mrb[0].mxu0
        %1308 = vdwg.mxu0
        %s1309 = scalar_lea.vmem [#allocation3], 256
        %v1310 = vld [vmem:[%s1309] sm:$0xf]
        %v1311 = vld [vmem:[%s1309 + $0x4] sm:$0xf]
        %v1312 = vld [vmem:[%s1309 + $0x8] sm:$0xf]
        %v1313 = vld [vmem:[%s1309 + $0xc] sm:$0xf]
        %v1314 = vld [vmem:[%s1309 + $0x10] sm:$0xf]
        %v1315 = vld [vmem:[%s1309 + $0x14] sm:$0xf]
        %v1316 = vld [vmem:[%s1309 + $0x18] sm:$0xf]
        %v1317 = vld [vmem:[%s1309 + $0x1c] sm:$0xf]
        %v1318 = vld [vmem:[%s1309 + $0x20] sm:$0xf]
        %v1319 = vld [vmem:[%s1309 + $0x24] sm:$0xf]
        %v1320 = vld [vmem:[%s1309 + $0x28] sm:$0xf]
        %v1321 = vld [vmem:[%s1309 + $0x2c] sm:$0xf]
        %v1322 = vld [vmem:[%s1309 + $0x30] sm:$0xf]
        %v1323 = vld [vmem:[%s1309 + $0x34] sm:$0xf]
        %v1324 = vld [vmem:[%s1309 + $0x38] sm:$0xf]
        %v1325 = vld [vmem:[%s1309 + $0x3c] sm:$0xf]
        %v1342 = vunpack.c.l.b16 %v1310
        %v1343 = vunpack.c.l.b16 %v1311
        %v1344 = vunpack.c.l.b16 %v1312
        %v1345 = vunpack.c.l.b16 %v1313
        %v1346 = vunpack.c.l.b16 %v1314
        %v1347 = vunpack.c.l.b16 %v1315
        %v1348 = vunpack.c.l.b16 %v1316
        %v1349 = vunpack.c.l.b16 %v1317
        %v1350 = vunpack.c.l.b16 %v1318
        %v1351 = vunpack.c.l.b16 %v1319
        %v1352 = vunpack.c.l.b16 %v1320
        %v1353 = vunpack.c.l.b16 %v1321
        %v1354 = vunpack.c.l.b16 %v1322
        %v1355 = vunpack.c.l.b16 %v1323
        %v1356 = vunpack.c.l.b16 %v1324
        %v1357 = vunpack.c.l.b16 %v1325
        %v1358 = vpack.c.b16 %v1343, %v1342
        %v1359 = vpack.c.b16 %v1345, %v1344
        %v1360 = vpack.c.b16 %v1347, %v1346
        %v1361 = vpack.c.b16 %v1349, %v1348
        %v1362 = vpack.c.b16 %v1351, %v1350
        %v1363 = vpack.c.b16 %v1353, %v1352
        %v1364 = vpack.c.b16 %v1355, %v1354
        %v1365 = vpack.c.b16 %v1357, %v1356
        %1374 = vmatprep.subr.bf16.mxu0 0
        %1375 = vmatpush1.bf16.msra.mxu0 %v1358
        %1376 = vmatprep.subr.bf16.mxu0 0
        %1377 = vmatpush1.bf16.msra.mxu0 %v1359
        %1378 = vmatprep.subr.bf16.mxu0 0
        %1379 = vmatpush1.bf16.msra.mxu0 %v1360
        %1380 = vmatprep.subr.bf16.mxu0 0
        %1381 = vmatpush1.bf16.msra.mxu0 %v1361
        %1382 = vmatprep.subr.bf16.mxu0 0
        %1383 = vmatpush1.bf16.msra.mxu0 %v1362
        %1384 = vmatprep.subr.bf16.mxu0 0
        %1385 = vmatpush1.bf16.msra.mxu0 %v1363
        %1386 = vmatprep.subr.bf16.mxu0 0
        %1387 = vmatpush1.bf16.msra.mxu0 %v1364
        %1388 = vmatprep.subr.bf16.mxu0 0
        %1389 = vmatpush1.bf16.msra.mxu0 %v1365
        %1390 = vmatprep.subr.bf16.mxu0 0
        %1391 = vmatpush1.bf16.msra.mxu0 0
        %1392 = vmatprep.subr.bf16.mxu0 0
        %1393 = vmatpush1.bf16.msra.mxu0 0
        %1394 = vmatprep.subr.bf16.mxu0 0
        %1395 = vmatpush1.bf16.msra.mxu0 0
        %1396 = vmatprep.subr.bf16.mxu0 0
        %1397 = vmatpush1.bf16.msra.mxu0 0
        %1398 = vmatprep.subr.bf16.mxu0 0
        %1399 = vmatpush1.bf16.msra.mxu0 0
        %1400 = vmatprep.subr.bf16.mxu0 0
        %1401 = vmatpush1.bf16.msra.mxu0 0
        %1402 = vmatprep.subr.bf16.mxu0 0
        %1403 = vmatpush1.bf16.msra.mxu0 0
        %1404 = vmatprep.subr.bf16.mxu0 0
        %1405 = vmatpush1.bf16.msra.mxu0 0
        %1406 = vmatprep.mubr.bf16.mxu0 0
        %1407 = vmatmul.mubr.bf16.gmra.mrb[0].mxu0 %v1062
        %v1408 = vpop.f32.mrb[0].mxu0
        %v1409 = vadd.f32 0.0, %v1408
        %v1410 = vpop.f32.mrb[0].mxu0
        %v1411 = vpop.f32.mrb[0].mxu0
        %v1412 = vadd.f32 0.0, %v1411
        %v1413 = vpop.f32.mrb[0].mxu0
        %1414 = vmatprep.mubr.bf16.mxu0 0
        %1415 = vmatmul.mubr.bf16.gmra.mrb[0].mxu0 %v1063
        %v1416 = vpop.f32.mrb[0].mxu0
        %v1417 = vadd.f32 0.0, %v1416
        %v1418 = vpop.f32.mrb[0].mxu0
        %v1419 = vpop.f32.mrb[0].mxu0
        %v1420 = vadd.f32 0.0, %v1419
        %v1421 = vpop.f32.mrb[0].mxu0
        %1422 = vmatprep.mubr.bf16.mxu0 0
        %1423 = vmatmul.mubr.bf16.gmra.mrb[0].mxu0 %v1064
        %v1424 = vpop.f32.mrb[0].mxu0
        %v1425 = vadd.f32 0.0, %v1424
        %v1426 = vpop.f32.mrb[0].mxu0
        %v1427 = vpop.f32.mrb[0].mxu0
        %v1428 = vadd.f32 0.0, %v1427
        %v1429 = vpop.f32.mrb[0].mxu0
        %1430 = vmatprep.mubr.bf16.mxu0 0
        %1431 = vmatmul.mubr.bf16.gmra.mrb[0].mxu0 %v1065
        %v1432 = vpop.f32.mrb[0].mxu0
        %v1433 = vadd.f32 0.0, %v1432
        %v1434 = vpop.f32.mrb[0].mxu0
        %v1435 = vpop.f32.mrb[0].mxu0
        %v1436 = vadd.f32 0.0, %v1435
        %v1437 = vpop.f32.mrb[0].mxu0
        %1438 = vdwg.mxu0
        %v1455 = vunpack.c.l.b16 %v1028
        %v1456 = vunpack.c.l.b16 %v1029
        %v1457 = vunpack.c.l.b16 %v1030
        %v1458 = vunpack.c.l.b16 %v1031
        %v1459 = vunpack.c.l.b16 %v1032
        %v1460 = vunpack.c.l.b16 %v1033
        %v1461 = vunpack.c.l.b16 %v1034
        %v1462 = vunpack.c.l.b16 %v1035
        %v1463 = vunpack.c.l.b16 %v1036
        %v1464 = vunpack.c.l.b16 %v1037
        %v1465 = vunpack.c.l.b16 %v1038
        %v1466 = vunpack.c.l.b16 %v1039
        %v1467 = vunpack.c.l.b16 %v1040
        %v1468 = vunpack.c.l.b16 %v1041
        %v1469 = vunpack.c.l.b16 %v1042
        %v1470 = vunpack.c.l.b16 %v1043
        %v1471 = vpack.c.b16 %v1456, %v1455
        %v1472 = vpack.c.b16 %v1458, %v1457
        %v1473 = vpack.c.b16 %v1460, %v1459
        %v1474 = vpack.c.b16 %v1462, %v1461
        %v1475 = vpack.c.b16 %v1464, %v1463
        %v1476 = vpack.c.b16 %v1466, %v1465
        %v1477 = vpack.c.b16 %v1468, %v1467
        %v1478 = vpack.c.b16 %v1470, %v1469
        %1487 = vmatprep.subr.bf16.mxu0 0
        %1488 = vmatpush1.bf16.msra.mxu0 %v1471
        %1489 = vmatprep.subr.bf16.mxu0 0
        %1490 = vmatpush1.bf16.msra.mxu0 %v1472
        %1491 = vmatprep.subr.bf16.mxu0 0
        %1492 = vmatpush1.bf16.msra.mxu0 %v1473
        %1493 = vmatprep.subr.bf16.mxu0 0
        %1494 = vmatpush1.bf16.msra.mxu0 %v1474
        %1495 = vmatprep.subr.bf16.mxu0 0
        %1496 = vmatpush1.bf16.msra.mxu0 %v1475
        %1497 = vmatprep.subr.bf16.mxu0 0
        %1498 = vmatpush1.bf16.msra.mxu0 %v1476
        %1499 = vmatprep.subr.bf16.mxu0 0
        %1500 = vmatpush1.bf16.msra.mxu0 %v1477
        %1501 = vmatprep.subr.bf16.mxu0 0
        %1502 = vmatpush1.bf16.msra.mxu0 %v1478
        %1503 = vmatprep.subr.bf16.mxu0 0
        %1504 = vmatpush1.bf16.msra.mxu0 0
        %1505 = vmatprep.subr.bf16.mxu0 0
        %1506 = vmatpush1.bf16.msra.mxu0 0
        %1507 = vmatprep.subr.bf16.mxu0 0
        %1508 = vmatpush1.bf16.msra.mxu0 0
        %1509 = vmatprep.subr.bf16.mxu0 0
        %1510 = vmatpush1.bf16.msra.mxu0 0
        %1511 = vmatprep.subr.bf16.mxu0 0
        %1512 = vmatpush1.bf16.msra.mxu0 0
        %1513 = vmatprep.subr.bf16.mxu0 0
        %1514 = vmatpush1.bf16.msra.mxu0 0
        %1515 = vmatprep.subr.bf16.mxu0 0
        %1516 = vmatpush1.bf16.msra.mxu0 0
        %1517 = vmatprep.subr.bf16.mxu0 0
        %1518 = vmatpush1.bf16.msra.mxu0 0
        %1519 = vmatprep.mubr.bf16.mxu0 0
        %1520 = vmatmul.mubr.bf16.gmra.mrb[0].mxu0 %v1007
        %v1521 = vpop.f32.mrb[0].mxu0
        %v1522 = vadd.f32 %v1409, %v1521
        %v1523 = vpop.f32.mrb[0].mxu0
        %v1524 = vpop.f32.mrb[0].mxu0
        %v1525 = vadd.f32 %v1412, %v1524
        %v1526 = vpop.f32.mrb[0].mxu0
        %1527 = vmatprep.mubr.bf16.mxu0 0
        %1528 = vmatmul.mubr.bf16.gmra.mrb[0].mxu0 %v1008
        %v1529 = vpop.f32.mrb[0].mxu0
        %v1530 = vadd.f32 %v1417, %v1529
        %v1531 = vpop.f32.mrb[0].mxu0
        %v1532 = vpop.f32.mrb[0].mxu0
        %v1533 = vadd.f32 %v1420, %v1532
        %v1534 = vpop.f32.mrb[0].mxu0
        %1535 = vmatprep.mubr.bf16.mxu0 0
        %1536 = vmatmul.mubr.bf16.gmra.mrb[0].mxu0 %v1009
        %v1537 = vpop.f32.mrb[0].mxu0
        %v1538 = vadd.f32 %v1425, %v1537
        %v1539 = vpop.f32.mrb[0].mxu0
        %v1540 = vpop.f32.mrb[0].mxu0
        %v1541 = vadd.f32 %v1428, %v1540
        %v1542 = vpop.f32.mrb[0].mxu0
        %1543 = vmatprep.mubr.bf16.mxu0 0
        %1544 = vmatmul.mubr.bf16.gmra.mrb[0].mxu0 %v1010
        %v1545 = vpop.f32.mrb[0].mxu0
        %v1546 = vadd.f32 %v1433, %v1545
        %v1547 = vpop.f32.mrb[0].mxu0
        %v1548 = vpop.f32.mrb[0].mxu0
        %v1549 = vadd.f32 %v1436, %v1548
        %v1550 = vpop.f32.mrb[0].mxu0
        %1551 = vdwg.mxu0
        %s1552 = scalar_lea.vmem [#allocation3], 320
        %v1553 = vld [vmem:[%s1552] sm:$0xf]
        %v1554 = vld [vmem:[%s1552 + $0x4] sm:$0xf]
        %v1555 = vld [vmem:[%s1552 + $0x8] sm:$0xf]
        %v1556 = vld [vmem:[%s1552 + $0xc] sm:$0xf]
        %v1557 = vld [vmem:[%s1552 + $0x10] sm:$0xf]
        %v1558 = vld [vmem:[%s1552 + $0x14] sm:$0xf]
        %v1559 = vld [vmem:[%s1552 + $0x18] sm:$0xf]
        %v1560 = vld [vmem:[%s1552 + $0x1c] sm:$0xf]
        %v1561 = vld [vmem:[%s1552 + $0x20] sm:$0xf]
        %v1562 = vld [vmem:[%s1552 + $0x24] sm:$0xf]
        %v1563 = vld [vmem:[%s1552 + $0x28] sm:$0xf]
        %v1564 = vld [vmem:[%s1552 + $0x2c] sm:$0xf]
        %v1565 = vld [vmem:[%s1552 + $0x30] sm:$0xf]
        %v1566 = vld [vmem:[%s1552 + $0x34] sm:$0xf]
        %v1567 = vld [vmem:[%s1552 + $0x38] sm:$0xf]
        %v1568 = vld [vmem:[%s1552 + $0x3c] sm:$0xf]
        %v1585 = vunpack.c.l.b16 %v1553
        %v1586 = vunpack.c.l.b16 %v1554
        %v1587 = vunpack.c.l.b16 %v1555
        %v1588 = vunpack.c.l.b16 %v1556
        %v1589 = vunpack.c.l.b16 %v1557
        %v1590 = vunpack.c.l.b16 %v1558
        %v1591 = vunpack.c.l.b16 %v1559
        %v1592 = vunpack.c.l.b16 %v1560
        %v1593 = vunpack.c.l.b16 %v1561
        %v1594 = vunpack.c.l.b16 %v1562
        %v1595 = vunpack.c.l.b16 %v1563
        %v1596 = vunpack.c.l.b16 %v1564
        %v1597 = vunpack.c.l.b16 %v1565
        %v1598 = vunpack.c.l.b16 %v1566
        %v1599 = vunpack.c.l.b16 %v1567
        %v1600 = vunpack.c.l.b16 %v1568
        %v1601 = vpack.c.b16 %v1586, %v1585
        %v1602 = vpack.c.b16 %v1588, %v1587
        %v1603 = vpack.c.b16 %v1590, %v1589
        %v1604 = vpack.c.b16 %v1592, %v1591
        %v1605 = vpack.c.b16 %v1594, %v1593
        %v1606 = vpack.c.b16 %v1596, %v1595
        %v1607 = vpack.c.b16 %v1598, %v1597
        %v1608 = vpack.c.b16 %v1600, %v1599
        %1617 = vmatprep.subr.bf16.mxu0 0
        %1618 = vmatpush1.bf16.msra.mxu0 %v1601
        %1619 = vmatprep.subr.bf16.mxu0 0
        %1620 = vmatpush1.bf16.msra.mxu0 %v1602
        %1621 = vmatprep.subr.bf16.mxu0 0
        %1622 = vmatpush1.bf16.msra.mxu0 %v1603
        %1623 = vmatprep.subr.bf16.mxu0 0
        %1624 = vmatpush1.bf16.msra.mxu0 %v1604
        %1625 = vmatprep.subr.bf16.mxu0 0
        %1626 = vmatpush1.bf16.msra.mxu0 %v1605
        %1627 = vmatprep.subr.bf16.mxu0 0
        %1628 = vmatpush1.bf16.msra.mxu0 %v1606
        %1629 = vmatprep.subr.bf16.mxu0 0
        %1630 = vmatpush1.bf16.msra.mxu0 %v1607
        %1631 = vmatprep.subr.bf16.mxu0 0
        %1632 = vmatpush1.bf16.msra.mxu0 %v1608
        %1633 = vmatprep.subr.bf16.mxu0 0
        %1634 = vmatpush1.bf16.msra.mxu0 0
        %1635 = vmatprep.subr.bf16.mxu0 0
        %1636 = vmatpush1.bf16.msra.mxu0 0
        %1637 = vmatprep.subr.bf16.mxu0 0
        %1638 = vmatpush1.bf16.msra.mxu0 0
        %1639 = vmatprep.subr.bf16.mxu0 0
        %1640 = vmatpush1.bf16.msra.mxu0 0
        %1641 = vmatprep.subr.bf16.mxu0 0
        %1642 = vmatpush1.bf16.msra.mxu0 0
        %1643 = vmatprep.subr.bf16.mxu0 0
        %1644 = vmatpush1.bf16.msra.mxu0 0
        %1645 = vmatprep.subr.bf16.mxu0 0
        %1646 = vmatpush1.bf16.msra.mxu0 0
        %1647 = vmatprep.subr.bf16.mxu0 0
        %1648 = vmatpush1.bf16.msra.mxu0 0
        %1649 = vmatprep.mubr.bf16.mxu0 0
        %1650 = vmatmul.mubr.bf16.gmra.mrb[0].mxu0 %v1062
        %v1651 = vpop.f32.mrb[0].mxu0
        %v1652 = vadd.f32 0.0, %v1651
        %v1653 = vpop.f32.mrb[0].mxu0
        %v1654 = vpop.f32.mrb[0].mxu0
        %v1655 = vadd.f32 0.0, %v1654
        %v1656 = vpop.f32.mrb[0].mxu0
        %1657 = vmatprep.mubr.bf16.mxu0 0
        %1658 = vmatmul.mubr.bf16.gmra.mrb[0].mxu0 %v1063
        %v1659 = vpop.f32.mrb[0].mxu0
        %v1660 = vadd.f32 0.0, %v1659
        %v1661 = vpop.f32.mrb[0].mxu0
        %v1662 = vpop.f32.mrb[0].mxu0
        %v1663 = vadd.f32 0.0, %v1662
        %v1664 = vpop.f32.mrb[0].mxu0
        %1665 = vmatprep.mubr.bf16.mxu0 0
        %1666 = vmatmul.mubr.bf16.gmra.mrb[0].mxu0 %v1064
        %v1667 = vpop.f32.mrb[0].mxu0
        %v1668 = vadd.f32 0.0, %v1667
        %v1669 = vpop.f32.mrb[0].mxu0
        %v1670 = vpop.f32.mrb[0].mxu0
        %v1671 = vadd.f32 0.0, %v1670
        %v1672 = vpop.f32.mrb[0].mxu0
        %1673 = vmatprep.mubr.bf16.mxu0 0
        %1674 = vmatmul.mubr.bf16.gmra.mrb[0].mxu0 %v1065
        %v1675 = vpop.f32.mrb[0].mxu0
        %v1676 = vadd.f32 0.0, %v1675
        %v1677 = vpop.f32.mrb[0].mxu0
        %v1678 = vpop.f32.mrb[0].mxu0
        %v1679 = vadd.f32 0.0, %v1678
        %v1680 = vpop.f32.mrb[0].mxu0
        %1681 = vdwg.mxu0
        %v1698 = vunpack.c.l.b16 %v1045
        %v1699 = vunpack.c.l.b16 %v1046
        %v1700 = vunpack.c.l.b16 %v1047
        %v1701 = vunpack.c.l.b16 %v1048
        %v1702 = vunpack.c.l.b16 %v1049
        %v1703 = vunpack.c.l.b16 %v1050
        %v1704 = vunpack.c.l.b16 %v1051
        %v1705 = vunpack.c.l.b16 %v1052
        %v1706 = vunpack.c.l.b16 %v1053
        %v1707 = vunpack.c.l.b16 %v1054
        %v1708 = vunpack.c.l.b16 %v1055
        %v1709 = vunpack.c.l.b16 %v1056
        %v1710 = vunpack.c.l.b16 %v1057
        %v1711 = vunpack.c.l.b16 %v1058
        %v1712 = vunpack.c.l.b16 %v1059
        %v1713 = vunpack.c.l.b16 %v1060
        %v1714 = vpack.c.b16 %v1699, %v1698
        %v1715 = vpack.c.b16 %v1701, %v1700
        %v1716 = vpack.c.b16 %v1703, %v1702
        %v1717 = vpack.c.b16 %v1705, %v1704
        %v1718 = vpack.c.b16 %v1707, %v1706
        %v1719 = vpack.c.b16 %v1709, %v1708
        %v1720 = vpack.c.b16 %v1711, %v1710
        %v1721 = vpack.c.b16 %v1713, %v1712
        %1730 = vmatprep.subr.bf16.mxu0 0
        %1731 = vmatpush1.bf16.msra.mxu0 %v1714
        %1732 = vmatprep.subr.bf16.mxu0 0
        %1733 = vmatpush1.bf16.msra.mxu0 %v1715
        %1734 = vmatprep.subr.bf16.mxu0 0
        %1735 = vmatpush1.bf16.msra.mxu0 %v1716
        %1736 = vmatprep.subr.bf16.mxu0 0
        %1737 = vmatpush1.bf16.msra.mxu0 %v1717
        %1738 = vmatprep.subr.bf16.mxu0 0
        %1739 = vmatpush1.bf16.msra.mxu0 %v1718
        %1740 = vmatprep.subr.bf16.mxu0 0
        %1741 = vmatpush1.bf16.msra.mxu0 %v1719
        %1742 = vmatprep.subr.bf16.mxu0 0
        %1743 = vmatpush1.bf16.msra.mxu0 %v1720
        %1744 = vmatprep.subr.bf16.mxu0 0
        %1745 = vmatpush1.bf16.msra.mxu0 %v1721
        %1746 = vmatprep.subr.bf16.mxu0 0
        %1747 = vmatpush1.bf16.msra.mxu0 0
        %1748 = vmatprep.subr.bf16.mxu0 0
        %1749 = vmatpush1.bf16.msra.mxu0 0
        %1750 = vmatprep.subr.bf16.mxu0 0
        %1751 = vmatpush1.bf16.msra.mxu0 0
        %1752 = vmatprep.subr.bf16.mxu0 0
        %1753 = vmatpush1.bf16.msra.mxu0 0
        %1754 = vmatprep.subr.bf16.mxu0 0
        %1755 = vmatpush1.bf16.msra.mxu0 0
        %1756 = vmatprep.subr.bf16.mxu0 0
        %1757 = vmatpush1.bf16.msra.mxu0 0
        %1758 = vmatprep.subr.bf16.mxu0 0
        %1759 = vmatpush1.bf16.msra.mxu0 0
        %1760 = vmatprep.subr.bf16.mxu0 0
        %1761 = vmatpush1.bf16.msra.mxu0 0
        %1762 = vmatprep.mubr.bf16.mxu0 0
        %1763 = vmatmul.mubr.bf16.gmra.mrb[0].mxu0 %v1007
        %v1764 = vpop.f32.mrb[0].mxu0
        %v1765 = vadd.f32 %v1652, %v1764
        %v1766 = vpop.f32.mrb[0].mxu0
        %v1767 = vpop.f32.mrb[0].mxu0
        %v1768 = vadd.f32 %v1655, %v1767
        %v1769 = vpop.f32.mrb[0].mxu0
        %1770 = vmatprep.mubr.bf16.mxu0 0
        %1771 = vmatmul.mubr.bf16.gmra.mrb[0].mxu0 %v1008
        %v1772 = vpop.f32.mrb[0].mxu0
        %v1773 = vadd.f32 %v1660, %v1772
        %v1774 = vpop.f32.mrb[0].mxu0
        %v1775 = vpop.f32.mrb[0].mxu0
        %v1776 = vadd.f32 %v1663, %v1775
        %v1777 = vpop.f32.mrb[0].mxu0
        %1778 = vmatprep.mubr.bf16.mxu0 0
        %1779 = vmatmul.mubr.bf16.gmra.mrb[0].mxu0 %v1009
        %v1780 = vpop.f32.mrb[0].mxu0
        %v1781 = vadd.f32 %v1668, %v1780
        %v1782 = vpop.f32.mrb[0].mxu0
        %v1783 = vpop.f32.mrb[0].mxu0
        %v1784 = vadd.f32 %v1671, %v1783
        %v1785 = vpop.f32.mrb[0].mxu0
        %1786 = vmatprep.mubr.bf16.mxu0 0
        %1787 = vmatmul.mubr.bf16.gmra.mrb[0].mxu0 %v1010
        %v1788 = vpop.f32.mrb[0].mxu0
        %v1789 = vadd.f32 %v1676, %v1788
        %v1790 = vpop.f32.mrb[0].mxu0
        %v1791 = vpop.f32.mrb[0].mxu0
        %v1792 = vadd.f32 %v1679, %v1791
        %v1793 = vpop.f32.mrb[0].mxu0
        %1794 = vdwg.mxu0
        %v1795 = vld [vmem:[#allocation2 + $0x10] sm:$0xff]
        %v1796 = vld [vmem:[#allocation2 + $0x18] sm:$0xff]
        %v1797 = vld [vmem:[#allocation2 + $0x20] sm:$0xff]
        %v1798 = vld [vmem:[#allocation2 + $0x28] sm:$0xff]
        %v1799 = vld [vmem:[#allocation2 + $0x30] sm:$0xff]
        %v1800 = vld [vmem:[#allocation2 + $0x38] sm:$0xff]
        %v1801 = vld [vmem:[#allocation2 + $0x40] sm:$0xff]
        %v1802 = vld [vmem:[#allocation2 + $0x48] sm:$0xff]
        %v1803 = vpack.c.bf16 %v1796, %v1795
        %v1804 = vpack.c.bf16 %v1798, %v1797
        %v1805 = vpack.c.bf16 %v1800, %v1799
        %v1806 = vpack.c.bf16 %v1802, %v1801
        %s1807 = scalar_lea.vmem [#allocation3], 384
        %v1808 = vld [vmem:[%s1807] sm:$0xf]
        %v1809 = vld [vmem:[%s1807 + $0x4] sm:$0xf]
        %v1810 = vld [vmem:[%s1807 + $0x8] sm:$0xf]
        %v1811 = vld [vmem:[%s1807 + $0xc] sm:$0xf]
        %v1812 = vld [vmem:[%s1807 + $0x10] sm:$0xf]
        %v1813 = vld [vmem:[%s1807 + $0x14] sm:$0xf]
        %v1814 = vld [vmem:[%s1807 + $0x18] sm:$0xf]
        %v1815 = vld [vmem:[%s1807 + $0x1c] sm:$0xf]
        %v1816 = vld [vmem:[%s1807 + $0x20] sm:$0xf]
        %v1817 = vld [vmem:[%s1807 + $0x24] sm:$0xf]
        %v1818 = vld [vmem:[%s1807 + $0x28] sm:$0xf]
        %v1819 = vld [vmem:[%s1807 + $0x2c] sm:$0xf]
        %v1820 = vld [vmem:[%s1807 + $0x30] sm:$0xf]
        %v1821 = vld [vmem:[%s1807 + $0x34] sm:$0xf]
        %v1822 = vld [vmem:[%s1807 + $0x38] sm:$0xf]
        %v1823 = vld [vmem:[%s1807 + $0x3c] sm:$0xf]
        %v1840 = vunpack.c.l.b16 %v1808
        %v1841 = vunpack.c.l.b16 %v1809
        %v1842 = vunpack.c.l.b16 %v1810
        %v1843 = vunpack.c.l.b16 %v1811
        %v1844 = vunpack.c.l.b16 %v1812
        %v1845 = vunpack.c.l.b16 %v1813
        %v1846 = vunpack.c.l.b16 %v1814
        %v1847 = vunpack.c.l.b16 %v1815
        %v1848 = vunpack.c.l.b16 %v1816
        %v1849 = vunpack.c.l.b16 %v1817
        %v1850 = vunpack.c.l.b16 %v1818
        %v1851 = vunpack.c.l.b16 %v1819
        %v1852 = vunpack.c.l.b16 %v1820
        %v1853 = vunpack.c.l.b16 %v1821
        %v1854 = vunpack.c.l.b16 %v1822
        %v1855 = vunpack.c.l.b16 %v1823
        %v1856 = vpack.c.b16 %v1841, %v1840
        %v1857 = vpack.c.b16 %v1843, %v1842
        %v1858 = vpack.c.b16 %v1845, %v1844
        %v1859 = vpack.c.b16 %v1847, %v1846
        %v1860 = vpack.c.b16 %v1849, %v1848
        %v1861 = vpack.c.b16 %v1851, %v1850
        %v1862 = vpack.c.b16 %v1853, %v1852
        %v1863 = vpack.c.b16 %v1855, %v1854
        %1872 = vmatprep.subr.bf16.mxu0 0
        %1873 = vmatpush1.bf16.msra.mxu0 %v1856
        %1874 = vmatprep.subr.bf16.mxu0 0
        %1875 = vmatpush1.bf16.msra.mxu0 %v1857
        %1876 = vmatprep.subr.bf16.mxu0 0
        %1877 = vmatpush1.bf16.msra.mxu0 %v1858
        %1878 = vmatprep.subr.bf16.mxu0 0
        %1879 = vmatpush1.bf16.msra.mxu0 %v1859
        %1880 = vmatprep.subr.bf16.mxu0 0
        %1881 = vmatpush1.bf16.msra.mxu0 %v1860
        %1882 = vmatprep.subr.bf16.mxu0 0
        %1883 = vmatpush1.bf16.msra.mxu0 %v1861
        %1884 = vmatprep.subr.bf16.mxu0 0
        %1885 = vmatpush1.bf16.msra.mxu0 %v1862
        %1886 = vmatprep.subr.bf16.mxu0 0
        %1887 = vmatpush1.bf16.msra.mxu0 %v1863
        %1888 = vmatprep.subr.bf16.mxu0 0
        %1889 = vmatpush1.bf16.msra.mxu0 0
        %1890 = vmatprep.subr.bf16.mxu0 0
        %1891 = vmatpush1.bf16.msra.mxu0 0
        %1892 = vmatprep.subr.bf16.mxu0 0
        %1893 = vmatpush1.bf16.msra.mxu0 0
        %1894 = vmatprep.subr.bf16.mxu0 0
        %1895 = vmatpush1.bf16.msra.mxu0 0
        %1896 = vmatprep.subr.bf16.mxu0 0
        %1897 = vmatpush1.bf16.msra.mxu0 0
        %1898 = vmatprep.subr.bf16.mxu0 0
        %1899 = vmatpush1.bf16.msra.mxu0 0
        %1900 = vmatprep.subr.bf16.mxu0 0
        %1901 = vmatpush1.bf16.msra.mxu0 0
        %1902 = vmatprep.subr.bf16.mxu0 0
        %1903 = vmatpush1.bf16.msra.mxu0 0
        %1904 = vmatprep.mubr.bf16.mxu0 0
        %1905 = vmatmul.mubr.bf16.gmra.mrb[0].mxu0 %v1803
        %v1906 = vpop.f32.mrb[0].mxu0
        %v1907 = vadd.f32 0.0, %v1906
        %v1908 = vpop.f32.mrb[0].mxu0
        %v1909 = vpop.f32.mrb[0].mxu0
        %v1910 = vadd.f32 0.0, %v1909
        %v1911 = vpop.f32.mrb[0].mxu0
        %1912 = vmatprep.mubr.bf16.mxu0 0
        %1913 = vmatmul.mubr.bf16.gmra.mrb[0].mxu0 %v1804
        %v1914 = vpop.f32.mrb[0].mxu0
        %v1915 = vadd.f32 0.0, %v1914
        %v1916 = vpop.f32.mrb[0].mxu0
        %v1917 = vpop.f32.mrb[0].mxu0
        %v1918 = vadd.f32 0.0, %v1917
        %v1919 = vpop.f32.mrb[0].mxu0
        %1920 = vmatprep.mubr.bf16.mxu0 0
        %1921 = vmatmul.mubr.bf16.gmra.mrb[0].mxu0 %v1805
        %v1922 = vpop.f32.mrb[0].mxu0
        %v1923 = vadd.f32 0.0, %v1922
        %v1924 = vpop.f32.mrb[0].mxu0
        %v1925 = vpop.f32.mrb[0].mxu0
        %v1926 = vadd.f32 0.0, %v1925
        %v1927 = vpop.f32.mrb[0].mxu0
        %1928 = vmatprep.mubr.bf16.mxu0 0
        %1929 = vmatmul.mubr.bf16.gmra.mrb[0].mxu0 %v1806
        %v1930 = vpop.f32.mrb[0].mxu0
        %v1931 = vadd.f32 0.0, %v1930
        %v1932 = vpop.f32.mrb[0].mxu0
        %v1933 = vpop.f32.mrb[0].mxu0
        %v1934 = vadd.f32 0.0, %v1933
        %v1935 = vpop.f32.mrb[0].mxu0
        %1936 = vdwg.mxu0
        %v1937 = vadd.f32 %v1279, %v1907
        %v1938 = vadd.f32 %v1282, %v1910
        %v1939 = vadd.f32 %v1287, %v1915
        %v1940 = vadd.f32 %v1290, %v1918
        %v1941 = vadd.f32 %v1295, %v1923
        %v1942 = vadd.f32 %v1298, %v1926
        %v1943 = vadd.f32 %v1303, %v1931
        %v1944 = vadd.f32 %v1306, %v1934
        %s1945 = scalar_lea.vmem [#allocation3], 448
        %v1946 = vld [vmem:[%s1945] sm:$0xf]
        %v1947 = vld [vmem:[%s1945 + $0x4] sm:$0xf]
        %v1948 = vld [vmem:[%s1945 + $0x8] sm:$0xf]
        %v1949 = vld [vmem:[%s1945 + $0xc] sm:$0xf]
        %v1950 = vld [vmem:[%s1945 + $0x10] sm:$0xf]
        %v1951 = vld [vmem:[%s1945 + $0x14] sm:$0xf]
        %v1952 = vld [vmem:[%s1945 + $0x18] sm:$0xf]
        %v1953 = vld [vmem:[%s1945 + $0x1c] sm:$0xf]
        %v1954 = vld [vmem:[%s1945 + $0x20] sm:$0xf]
        %v1955 = vld [vmem:[%s1945 + $0x24] sm:$0xf]
        %v1956 = vld [vmem:[%s1945 + $0x28] sm:$0xf]
        %v1957 = vld [vmem:[%s1945 + $0x2c] sm:$0xf]
        %v1958 = vld [vmem:[%s1945 + $0x30] sm:$0xf]
        %v1959 = vld [vmem:[%s1945 + $0x34] sm:$0xf]
        %v1960 = vld [vmem:[%s1945 + $0x38] sm:$0xf]
        %v1961 = vld [vmem:[%s1945 + $0x3c] sm:$0xf]
        %v1978 = vunpack.c.l.b16 %v1946
        %v1979 = vunpack.c.l.b16 %v1947
        %v1980 = vunpack.c.l.b16 %v1948
        %v1981 = vunpack.c.l.b16 %v1949
        %v1982 = vunpack.c.l.b16 %v1950
        %v1983 = vunpack.c.l.b16 %v1951
        %v1984 = vunpack.c.l.b16 %v1952
        %v1985 = vunpack.c.l.b16 %v1953
        %v1986 = vunpack.c.l.b16 %v1954
        %v1987 = vunpack.c.l.b16 %v1955
        %v1988 = vunpack.c.l.b16 %v1956
        %v1989 = vunpack.c.l.b16 %v1957
        %v1990 = vunpack.c.l.b16 %v1958
        %v1991 = vunpack.c.l.b16 %v1959
        %v1992 = vunpack.c.l.b16 %v1960
        %v1993 = vunpack.c.l.b16 %v1961
        %v1994 = vpack.c.b16 %v1979, %v1978
        %v1995 = vpack.c.b16 %v1981, %v1980
        %v1996 = vpack.c.b16 %v1983, %v1982
        %v1997 = vpack.c.b16 %v1985, %v1984
        %v1998 = vpack.c.b16 %v1987, %v1986
        %v1999 = vpack.c.b16 %v1989, %v1988
        %v2000 = vpack.c.b16 %v1991, %v1990
        %v2001 = vpack.c.b16 %v1993, %v1992
        %2010 = vmatprep.subr.bf16.mxu0 0
        %2011 = vmatpush1.bf16.msra.mxu0 %v1994
        %2012 = vmatprep.subr.bf16.mxu0 0
        %2013 = vmatpush1.bf16.msra.mxu0 %v1995
        %2014 = vmatprep.subr.bf16.mxu0 0
        %2015 = vmatpush1.bf16.msra.mxu0 %v1996
        %2016 = vmatprep.subr.bf16.mxu0 0
        %2017 = vmatpush1.bf16.msra.mxu0 %v1997
        %2018 = vmatprep.subr.bf16.mxu0 0
        %2019 = vmatpush1.bf16.msra.mxu0 %v1998
        %2020 = vmatprep.subr.bf16.mxu0 0
        %2021 = vmatpush1.bf16.msra.mxu0 %v1999
        %2022 = vmatprep.subr.bf16.mxu0 0
        %2023 = vmatpush1.bf16.msra.mxu0 %v2000
        %2024 = vmatprep.subr.bf16.mxu0 0
        %2025 = vmatpush1.bf16.msra.mxu0 %v2001
        %2026 = vmatprep.subr.bf16.mxu0 0
        %2027 = vmatpush1.bf16.msra.mxu0 0
        %2028 = vmatprep.subr.bf16.mxu0 0
        %2029 = vmatpush1.bf16.msra.mxu0 0
        %2030 = vmatprep.subr.bf16.mxu0 0
        %2031 = vmatpush1.bf16.msra.mxu0 0
        %2032 = vmatprep.subr.bf16.mxu0 0
        %2033 = vmatpush1.bf16.msra.mxu0 0
        %2034 = vmatprep.subr.bf16.mxu0 0
        %2035 = vmatpush1.bf16.msra.mxu0 0
        %2036 = vmatprep.subr.bf16.mxu0 0
        %2037 = vmatpush1.bf16.msra.mxu0 0
        %2038 = vmatprep.subr.bf16.mxu0 0
        %2039 = vmatpush1.bf16.msra.mxu0 0
        %2040 = vmatprep.subr.bf16.mxu0 0
        %2041 = vmatpush1.bf16.msra.mxu0 0
        %2042 = vmatprep.mubr.bf16.mxu0 0
        %2043 = vmatmul.mubr.bf16.gmra.mrb[0].mxu0 %v1803
        %v2044 = vpop.f32.mrb[0].mxu0
        %v2045 = vadd.f32 0.0, %v2044
        %v2046 = vpop.f32.mrb[0].mxu0
        %v2047 = vpop.f32.mrb[0].mxu0
        %v2048 = vadd.f32 0.0, %v2047
        %v2049 = vpop.f32.mrb[0].mxu0
        %2050 = vmatprep.mubr.bf16.mxu0 0
        %2051 = vmatmul.mubr.bf16.gmra.mrb[0].mxu0 %v1804
        %v2052 = vpop.f32.mrb[0].mxu0
        %v2053 = vadd.f32 0.0, %v2052
        %v2054 = vpop.f32.mrb[0].mxu0
        %v2055 = vpop.f32.mrb[0].mxu0
        %v2056 = vadd.f32 0.0, %v2055
        %v2057 = vpop.f32.mrb[0].mxu0
        %2058 = vmatprep.mubr.bf16.mxu0 0
        %2059 = vmatmul.mubr.bf16.gmra.mrb[0].mxu0 %v1805
        %v2060 = vpop.f32.mrb[0].mxu0
        %v2061 = vadd.f32 0.0, %v2060
        %v2062 = vpop.f32.mrb[0].mxu0
        %v2063 = vpop.f32.mrb[0].mxu0
        %v2064 = vadd.f32 0.0, %v2063
        %v2065 = vpop.f32.mrb[0].mxu0
        %2066 = vmatprep.mubr.bf16.mxu0 0
        %2067 = vmatmul.mubr.bf16.gmra.mrb[0].mxu0 %v1806
        %v2068 = vpop.f32.mrb[0].mxu0
        %v2069 = vadd.f32 0.0, %v2068
        %v2070 = vpop.f32.mrb[0].mxu0
        %v2071 = vpop.f32.mrb[0].mxu0
        %v2072 = vadd.f32 0.0, %v2071
        %v2073 = vpop.f32.mrb[0].mxu0
        %2074 = vdwg.mxu0
        %v2075 = vadd.f32 %v1522, %v2045
        %v2076 = vadd.f32 %v1525, %v2048
        %v2077 = vadd.f32 %v1530, %v2053
        %v2078 = vadd.f32 %v1533, %v2056
        %v2079 = vadd.f32 %v1538, %v2061
        %v2080 = vadd.f32 %v1541, %v2064
        %v2081 = vadd.f32 %v1546, %v2069
        %v2082 = vadd.f32 %v1549, %v2072
        %s2083 = scalar_lea.vmem [#allocation3], 512
        %v2084 = vld [vmem:[%s2083] sm:$0xf]
        %v2085 = vld [vmem:[%s2083 + $0x4] sm:$0xf]
        %v2086 = vld [vmem:[%s2083 + $0x8] sm:$0xf]
        %v2087 = vld [vmem:[%s2083 + $0xc] sm:$0xf]
        %v2088 = vld [vmem:[%s2083 + $0x10] sm:$0xf]
        %v2089 = vld [vmem:[%s2083 + $0x14] sm:$0xf]
        %v2090 = vld [vmem:[%s2083 + $0x18] sm:$0xf]
        %v2091 = vld [vmem:[%s2083 + $0x1c] sm:$0xf]
        %v2092 = vld [vmem:[%s2083 + $0x20] sm:$0xf]
        %v2093 = vld [vmem:[%s2083 + $0x24] sm:$0xf]
        %v2094 = vld [vmem:[%s2083 + $0x28] sm:$0xf]
        %v2095 = vld [vmem:[%s2083 + $0x2c] sm:$0xf]
        %v2096 = vld [vmem:[%s2083 + $0x30] sm:$0xf]
        %v2097 = vld [vmem:[%s2083 + $0x34] sm:$0xf]
        %v2098 = vld [vmem:[%s2083 + $0x38] sm:$0xf]
        %v2099 = vld [vmem:[%s2083 + $0x3c] sm:$0xf]
        %v2116 = vunpack.c.l.b16 %v2084
        %v2117 = vunpack.c.l.b16 %v2085
        %v2118 = vunpack.c.l.b16 %v2086
        %v2119 = vunpack.c.l.b16 %v2087
        %v2120 = vunpack.c.l.b16 %v2088
        %v2121 = vunpack.c.l.b16 %v2089
        %v2122 = vunpack.c.l.b16 %v2090
        %v2123 = vunpack.c.l.b16 %v2091
        %v2124 = vunpack.c.l.b16 %v2092
        %v2125 = vunpack.c.l.b16 %v2093
        %v2126 = vunpack.c.l.b16 %v2094
        %v2127 = vunpack.c.l.b16 %v2095
        %v2128 = vunpack.c.l.b16 %v2096
        %v2129 = vunpack.c.l.b16 %v2097
        %v2130 = vunpack.c.l.b16 %v2098
        %v2131 = vunpack.c.l.b16 %v2099
        %v2132 = vpack.c.b16 %v2117, %v2116
        %v2133 = vpack.c.b16 %v2119, %v2118
        %v2134 = vpack.c.b16 %v2121, %v2120
        %v2135 = vpack.c.b16 %v2123, %v2122
        %v2136 = vpack.c.b16 %v2125, %v2124
        %v2137 = vpack.c.b16 %v2127, %v2126
        %v2138 = vpack.c.b16 %v2129, %v2128
        %v2139 = vpack.c.b16 %v2131, %v2130
        %2148 = vmatprep.subr.bf16.mxu0 0
        %2149 = vmatpush1.bf16.msra.mxu0 %v2132
        %2150 = vmatprep.subr.bf16.mxu0 0
        %2151 = vmatpush1.bf16.msra.mxu0 %v2133
        %2152 = vmatprep.subr.bf16.mxu0 0
        %2153 = vmatpush1.bf16.msra.mxu0 %v2134
        %2154 = vmatprep.subr.bf16.mxu0 0
        %2155 = vmatpush1.bf16.msra.mxu0 %v2135
        %2156 = vmatprep.subr.bf16.mxu0 0
        %2157 = vmatpush1.bf16.msra.mxu0 %v2136
        %2158 = vmatprep.subr.bf16.mxu0 0
        %2159 = vmatpush1.bf16.msra.mxu0 %v2137
        %2160 = vmatprep.subr.bf16.mxu0 0
        %2161 = vmatpush1.bf16.msra.mxu0 %v2138
        %2162 = vmatprep.subr.bf16.mxu0 0
        %2163 = vmatpush1.bf16.msra.mxu0 %v2139
        %2164 = vmatprep.subr.bf16.mxu0 0
        %2165 = vmatpush1.bf16.msra.mxu0 0
        %2166 = vmatprep.subr.bf16.mxu0 0
        %2167 = vmatpush1.bf16.msra.mxu0 0
        %2168 = vmatprep.subr.bf16.mxu0 0
        %2169 = vmatpush1.bf16.msra.mxu0 0
        %2170 = vmatprep.subr.bf16.mxu0 0
        %2171 = vmatpush1.bf16.msra.mxu0 0
        %2172 = vmatprep.subr.bf16.mxu0 0
        %2173 = vmatpush1.bf16.msra.mxu0 0
        %2174 = vmatprep.subr.bf16.mxu0 0
        %2175 = vmatpush1.bf16.msra.mxu0 0
        %2176 = vmatprep.subr.bf16.mxu0 0
        %2177 = vmatpush1.bf16.msra.mxu0 0
        %2178 = vmatprep.subr.bf16.mxu0 0
        %2179 = vmatpush1.bf16.msra.mxu0 0
        %2180 = vmatprep.mubr.bf16.mxu0 0
        %2181 = vmatmul.mubr.bf16.gmra.mrb[0].mxu0 %v1803
        %v2182 = vpop.f32.mrb[0].mxu0
        %v2183 = vadd.f32 0.0, %v2182
        %v2184 = vpop.f32.mrb[0].mxu0
        %v2185 = vpop.f32.mrb[0].mxu0
        %v2186 = vadd.f32 0.0, %v2185
        %v2187 = vpop.f32.mrb[0].mxu0
        %2188 = vmatprep.mubr.bf16.mxu0 0
        %2189 = vmatmul.mubr.bf16.gmra.mrb[0].mxu0 %v1804
        %v2190 = vpop.f32.mrb[0].mxu0
        %v2191 = vadd.f32 0.0, %v2190
        %v2192 = vpop.f32.mrb[0].mxu0
        %v2193 = vpop.f32.mrb[0].mxu0
        %v2194 = vadd.f32 0.0, %v2193
        %v2195 = vpop.f32.mrb[0].mxu0
        %2196 = vmatprep.mubr.bf16.mxu0 0
        %2197 = vmatmul.mubr.bf16.gmra.mrb[0].mxu0 %v1805
        %v2198 = vpop.f32.mrb[0].mxu0
        %v2199 = vadd.f32 0.0, %v2198
        %v2200 = vpop.f32.mrb[0].mxu0
        %v2201 = vpop.f32.mrb[0].mxu0
        %v2202 = vadd.f32 0.0, %v2201
        %v2203 = vpop.f32.mrb[0].mxu0
        %2204 = vmatprep.mubr.bf16.mxu0 0
        %2205 = vmatmul.mubr.bf16.gmra.mrb[0].mxu0 %v1806
        %v2206 = vpop.f32.mrb[0].mxu0
        %v2207 = vadd.f32 0.0, %v2206
        %v2208 = vpop.f32.mrb[0].mxu0
        %v2209 = vpop.f32.mrb[0].mxu0
        %v2210 = vadd.f32 0.0, %v2209
        %v2211 = vpop.f32.mrb[0].mxu0
        %2212 = vdwg.mxu0
        %v2213 = vadd.f32 %v1765, %v2183
        %v2214 = vadd.f32 %v1768, %v2186
        %v2215 = vadd.f32 %v1773, %v2191
        %v2216 = vadd.f32 %v1776, %v2194
        %v2217 = vadd.f32 %v1781, %v2199
        %v2218 = vadd.f32 %v1784, %v2202
        %v2219 = vadd.f32 %v1789, %v2207
        %v2220 = vadd.f32 %v1792, %v2210
        %v2222 = vlaneseq
        %v2223 = vshrl.u32 %v2222, 7
        %v2224 = vsub.s32 0, %v2223
        %v2225 = vrot.slane %v998, %v2224
        %v2227 = vadd.f32 %v2075, %v2225
        %v2228 = vadd.f32 %v2076, %v2225
        %v2229 = vadd.f32 %v2077, %v2225
        %v2230 = vadd.f32 %v2078, %v2225
        %v2231 = vadd.f32 %v2079, %v2225
        %v2232 = vadd.f32 %v2080, %v2225
        %v2233 = vadd.f32 %v2081, %v2225
        %v2234 = vadd.f32 %v2082, %v2225
        %v2235 = vrot.slane %v1937, 7
        %v2236 = vrot.slane %v1938, 7
        %v2237 = vrot.slane %v1939, 7
        %v2238 = vrot.slane %v1940, 7
        %v2239 = vrot.slane %v1941, 7
        %v2240 = vrot.slane %v1942, 7
        %v2241 = vrot.slane %v1943, 7
        %v2242 = vrot.slane %v1944, 7
        %vm2243 = vcmp.lt.s32.totalorder %v419, 1
        %v2244 = vsel %vm2243, %v2241, %v2242
        %v2245 = vsel %vm2243, %v2240, %v2241
        %v2246 = vsel %vm2243, %v2239, %v2240
        %v2247 = vsel %vm2243, %v2238, %v2239
        %v2248 = vsel %vm2243, %v2237, %v2238
        %v2249 = vsel %vm2243, %v2236, %v2237
        %v2250 = vsel %vm2243, %v2235, %v2236
        %v2251 = vsel %vm2243, %v2242, %v2235
        %v2252 = vsel %vm523, 1, 0
        %v2253 = vsel %vm524, 1, 0
        %v2254 = vsel %vm525, 1, 0
        %v2255 = vsel %vm526, 1, 0
        %v2256 = vsel %vm527, 1, 0
        %v2257 = vsel %vm528, 1, 0
        %v2258 = vsel %vm529, 1, 0
        %v2259 = vsel %vm530, 1, 0
        %vm2260 = vcmp.eq.s32.totalorder %v2252, 1
        %vm2261 = vcmp.eq.s32.totalorder %v2253, 1
        %vm2262 = vcmp.eq.s32.totalorder %v2254, 1
        %vm2263 = vcmp.eq.s32.totalorder %v2255, 1
        %vm2264 = vcmp.eq.s32.totalorder %v2256, 1
        %vm2265 = vcmp.eq.s32.totalorder %v2257, 1
        %vm2266 = vcmp.eq.s32.totalorder %v2258, 1
        %vm2267 = vcmp.eq.s32.totalorder %v2259, 1
        %v2268 = vsel %vm2260, 0.0, %v2251
        %v2269 = vsel %vm2261, 0.0, %v2250
        %v2270 = vsel %vm2262, 0.0, %v2249
        %v2271 = vsel %vm2263, 0.0, %v2248
        %v2272 = vsel %vm2264, 0.0, %v2247
        %v2273 = vsel %vm2265, 0.0, %v2246
        %v2274 = vsel %vm2266, 0.0, %v2245
        %v2275 = vsel %vm2267, 0.0, %v2244
        %v2276 = vadd.f32 %v2227, %v2268
        %v2277 = vadd.f32 %v2228, %v2269
        %v2278 = vadd.f32 %v2229, %v2270
        %v2279 = vadd.f32 %v2230, %v2271
        %v2280 = vadd.f32 %v2231, %v2272
        %v2281 = vadd.f32 %v2232, %v2273
        %v2282 = vadd.f32 %v2233, %v2274
        %v2283 = vadd.f32 %v2234, %v2275
        %v2284 = vrot.slane %v2213, 1
        %v2285 = vrot.slane %v2214, 1
        %v2286 = vrot.slane %v2215, 1
        %v2287 = vrot.slane %v2216, 1
        %v2288 = vrot.slane %v2217, 1
        %v2289 = vrot.slane %v2218, 1
        %v2290 = vrot.slane %v2219, 1
        %v2291 = vrot.slane %v2220, 1
        %vm2292 = vcmp.lt.s32.totalorder %v419, 7
        %v2293 = vsel %vm2292, %v2290, %v2291
        %v2294 = vsel %vm2292, %v2289, %v2290
        %v2295 = vsel %vm2292, %v2288, %v2289
        %v2296 = vsel %vm2292, %v2287, %v2288
        %v2297 = vsel %vm2292, %v2286, %v2287
        %v2298 = vsel %vm2292, %v2285, %v2286
        %v2299 = vsel %vm2292, %v2284, %v2285
        %v2300 = vsel %vm2292, %v2291, %v2284
        %v2301 = vsel %vm531, 1, 0
        %v2302 = vsel %vm532, 1, 0
        %v2303 = vsel %vm533, 1, 0
        %v2304 = vsel %vm534, 1, 0
        %v2305 = vsel %vm535, 1, 0
        %v2306 = vsel %vm536, 1, 0
        %v2307 = vsel %vm537, 1, 0
        %v2308 = vsel %vm538, 1, 0
        %vm2309 = vcmp.eq.s32.totalorder %v2301, 1
        %vm2310 = vcmp.eq.s32.totalorder %v2302, 1
        %vm2311 = vcmp.eq.s32.totalorder %v2303, 1
        %vm2312 = vcmp.eq.s32.totalorder %v2304, 1
        %vm2313 = vcmp.eq.s32.totalorder %v2305, 1
        %vm2314 = vcmp.eq.s32.totalorder %v2306, 1
        %vm2315 = vcmp.eq.s32.totalorder %v2307, 1
        %vm2316 = vcmp.eq.s32.totalorder %v2308, 1
        %v2317 = vsel %vm2309, 0.0, %v2299
        %v2318 = vsel %vm2310, 0.0, %v2298
        %v2319 = vsel %vm2311, 0.0, %v2297
        %v2320 = vsel %vm2312, 0.0, %v2296
        %v2321 = vsel %vm2313, 0.0, %v2295
        %v2322 = vsel %vm2314, 0.0, %v2294
        %v2323 = vsel %vm2315, 0.0, %v2293
        %v2324 = vsel %vm2316, 0.0, %v2300
        %v2325 = vadd.f32 %v2276, %v2317
        %v2326 = vadd.f32 %v2277, %v2318
        %v2327 = vadd.f32 %v2278, %v2319
        %v2328 = vadd.f32 %v2279, %v2320
        %v2329 = vadd.f32 %v2280, %v2321
        %v2330 = vadd.f32 %v2281, %v2322
        %v2331 = vadd.f32 %v2282, %v2323
        %v2332 = vadd.f32 %v2283, %v2324
        %v2333 = vld [vmem:[%s7] sm:$0x1]
        %v2334 = vld [vmem:[%s8] sm:$0x1]
        %v2335 = vadd.f32 %v2325, %v2326
        %v2336 = vadd.f32 %v2335, %v2327
        %v2337 = vadd.f32 %v2336, %v2328
        %v2338 = vadd.f32 %v2337, %v2329
        %v2339 = vadd.f32 %v2338, %v2330
        %v2340 = vadd.f32 %v2339, %v2331
        %v2341 = vadd.f32 %v2340, %v2332
        %v2342 = vrot.slane %v2341, 4
        %v2343 = vadd.f32 %v2341, %v2342
        %v2344 = vrot.slane %v2343, 2
        %v2345 = vadd.f32 %v2343, %v2344
        %v2346 = vrot.slane %v2345, 1
        %v2347 = vadd.f32 %v2345, %v2346
        %2348 = vmatprep.subr.mxu0 0.0
        %2349 = vmatpush1.msra.mxu0 %v539
        %2350 = vmatprep.subr.mxu0 0.0
        %2351 = vmatpush1.msra.mxu0 %v540
        %2352 = vmatprep.subr.mxu0 0.0
        %2353 = vmatpush1.msra.mxu0 %v541
        %2354 = vmatprep.subr.mxu0 0.0
        %2355 = vmatpush1.msra.mxu0 %v542
        %2356 = vmatprep.subr.mxu0 0.0
        %2357 = vmatpush1.msra.mxu0 %v543
        %2358 = vmatprep.subr.mxu0 0.0
        %2359 = vmatpush1.msra.mxu0 %v544
        %2360 = vmatprep.subr.mxu0 0.0
        %2361 = vmatpush1.msra.mxu0 %v545
        %2362 = vmatprep.subr.mxu0 0.0
        %2363 = vmatpush1.msra.mxu0 %v546
        %2364 = vmatprep.subr.mxu0 0.0
        %2365 = vmatpush1.msra.mxu0 %v547
        %2366 = vmatprep.subr.mxu0 0.0
        %2367 = vmatpush1.msra.mxu0 %v548
        %2368 = vmatprep.subr.mxu0 0.0
        %2369 = vmatpush1.msra.mxu0 %v549
        %2370 = vmatprep.subr.mxu0 0.0
        %2371 = vmatpush1.msra.mxu0 %v550
        %2372 = vmatprep.subr.mxu0 0.0
        %2373 = vmatpush1.msra.mxu0 %v551
        %2374 = vmatprep.subr.mxu0 0.0
        %2375 = vmatpush1.msra.mxu0 %v552
        %2376 = vmatprep.subr.mxu0 0.0
        %2377 = vmatpush1.msra.mxu0 %v553
        %2378 = vmatprep.subr.mxu0 0.0
        %2379 = vmatpush1.msra.mxu0 %v554
        %2380 = vmatprep.subr.mxu0 0.0
        %2381 = vmatpush1.msra.mxu0 0.0
        %2382 = vmatprep.subr.mxu0 0.0
        %2383 = vmatpush1.msra.mxu0 0.0
        %2384 = vmatprep.subr.mxu0 0.0
        %2385 = vmatpush1.msra.mxu0 0.0
        %2386 = vmatprep.subr.mxu0 0.0
        %2387 = vmatpush1.msra.mxu0 0.0
        %2388 = vmatprep.subr.mxu0 0.0
        %2389 = vmatpush1.msra.mxu0 0.0
        %2390 = vmatprep.subr.mxu0 0.0
        %2391 = vmatpush1.msra.mxu0 0.0
        %2392 = vmatprep.subr.mxu0 0.0
        %2393 = vmatpush1.msra.mxu0 0.0
        %2394 = vmatprep.subr.mxu0 0.0
        %2395 = vmatpush1.msra.mxu0 0.0
        %2396 = vmatprep.subr.mxu0 0.0
        %2397 = vmatpush1.msra.mxu0 0.0
        %2398 = vmatprep.subr.mxu0 0.0
        %2399 = vmatpush1.msra.mxu0 0.0
        %2400 = vmatprep.subr.mxu0 0.0
        %2401 = vmatpush1.msra.mxu0 0.0
        %2402 = vmatprep.subr.mxu0 0.0
        %2403 = vmatpush1.msra.mxu0 0.0
        %2404 = vmatprep.subr.mxu0 0.0
        %2405 = vmatpush1.msra.mxu0 0.0
        %2406 = vmatprep.subr.mxu0 0.0
        %2407 = vmatpush1.msra.mxu0 0.0
        %2408 = vmatprep.subr.mxu0 0.0
        %2409 = vmatpush1.msra.mxu0 0.0
        %2410 = vmatprep.subr.mxu0 0.0
        %2411 = vmatpush1.msra.mxu0 0.0
        %2412 = vmatprep.mubr.f32.mxu0 0.0
        %2413 = vmatmul.mubr.f32.gmra.mrb[0].mxu0 %v2347
        %v2414 = vpop.f32.mrb[0].mxu0
        %v2415 = vadd.f32 0.0, %v2414
        %v2416 = vpop.f32.mrb[0].mxu0
        %2417 = vdwg.mxu0
        %v2418 = vmul.f32 %v2415, %v652
        %v2420 = vsel %vm654, %v2418, 0
        %2422 = vmatprep.subr.mxu0 0.0
        %2423 = vmatpush1.msra.mxu0 %v555
        %2424 = vmatprep.subr.mxu0 0.0
        %2425 = vmatpush1.msra.mxu0 %v556
        %2426 = vmatprep.subr.mxu0 0.0
        %2427 = vmatpush1.msra.mxu0 %v557
        %2428 = vmatprep.subr.mxu0 0.0
        %2429 = vmatpush1.msra.mxu0 %v558
        %2430 = vmatprep.subr.mxu0 0.0
        %2431 = vmatpush1.msra.mxu0 0.0
        %2432 = vmatprep.subr.mxu0 0.0
        %2433 = vmatpush1.msra.mxu0 0.0
        %2434 = vmatprep.subr.mxu0 0.0
        %2435 = vmatpush1.msra.mxu0 0.0
        %2436 = vmatprep.subr.mxu0 0.0
        %2437 = vmatpush1.msra.mxu0 0.0
        %2438 = vmatprep.subr.mxu0 0.0
        %2439 = vmatpush1.msra.mxu0 0.0
        %2440 = vmatprep.subr.mxu0 0.0
        %2441 = vmatpush1.msra.mxu0 0.0
        %2442 = vmatprep.subr.mxu0 0.0
        %2443 = vmatpush1.msra.mxu0 0.0
        %2444 = vmatprep.subr.mxu0 0.0
        %2445 = vmatpush1.msra.mxu0 0.0
        %2446 = vmatprep.subr.mxu0 0.0
        %2447 = vmatpush1.msra.mxu0 0.0
        %2448 = vmatprep.subr.mxu0 0.0
        %2449 = vmatpush1.msra.mxu0 0.0
        %2450 = vmatprep.subr.mxu0 0.0
        %2451 = vmatpush1.msra.mxu0 0.0
        %2452 = vmatprep.subr.mxu0 0.0
        %2453 = vmatpush1.msra.mxu0 0.0
        %2454 = vmatprep.subr.mxu0 0.0
        %2455 = vmatpush1.msra.mxu0 0.0
        %2456 = vmatprep.subr.mxu0 0.0
        %2457 = vmatpush1.msra.mxu0 0.0
        %2458 = vmatprep.subr.mxu0 0.0
        %2459 = vmatpush1.msra.mxu0 0.0
        %2460 = vmatprep.subr.mxu0 0.0
        %2461 = vmatpush1.msra.mxu0 0.0
        %2462 = vmatprep.subr.mxu0 0.0
        %2463 = vmatpush1.msra.mxu0 0.0
        %2464 = vmatprep.subr.mxu0 0.0
        %2465 = vmatpush1.msra.mxu0 0.0
        %2466 = vmatprep.subr.mxu0 0.0
        %2467 = vmatpush1.msra.mxu0 0.0
        %2468 = vmatprep.subr.mxu0 0.0
        %2469 = vmatpush1.msra.mxu0 0.0
        %2470 = vmatprep.subr.mxu0 0.0
        %2471 = vmatpush1.msra.mxu0 0.0
        %2472 = vmatprep.subr.mxu0 0.0
        %2473 = vmatpush1.msra.mxu0 0.0
        %2474 = vmatprep.subr.mxu0 0.0
        %2475 = vmatpush1.msra.mxu0 0.0
        %2476 = vmatprep.subr.mxu0 0.0
        %2477 = vmatpush1.msra.mxu0 0.0
        %2478 = vmatprep.subr.mxu0 0.0
        %2479 = vmatpush1.msra.mxu0 0.0
        %2480 = vmatprep.subr.mxu0 0.0
        %2481 = vmatpush1.msra.mxu0 0.0
        %2482 = vmatprep.subr.mxu0 0.0
        %2483 = vmatpush1.msra.mxu0 0.0
        %2484 = vmatprep.subr.mxu0 0.0
        %2485 = vmatpush1.msra.mxu0 0.0
        %2486 = vmatprep.mubr.f32.mxu0 0.0
        %2487 = vmatmul.mubr.f32.gmra.mrb[0].mxu0 %v2420
        %v2488 = vpop.f32.mrb[0].mxu0
        %v2489 = vadd.f32 0.0, %v2488
        %v2490 = vpop.f32.mrb[0].mxu0
        %2491 = vdwg.mxu0
        %v2492 = vlaneseq
        %v2493 = vshrl.u32 %v2492, 7
        %v2494 = vsub.s32 0, %v2493
        %v2495 = vrot.slane %v2489, %v2494
        %v2496 = vsub.f32 %v2325, %v2495
        %v2497 = vsub.f32 %v2326, %v2495
        %v2498 = vsub.f32 %v2327, %v2495
        %v2499 = vsub.f32 %v2328, %v2495
        %v2500 = vsub.f32 %v2329, %v2495
        %v2501 = vsub.f32 %v2330, %v2495
        %v2502 = vsub.f32 %v2331, %v2495
        %v2503 = vsub.f32 %v2332, %v2495
        %v2504 = vmul.f32 %v2496, %v2496
        %v2505 = vmul.f32 %v2497, %v2497
        %v2506 = vmul.f32 %v2498, %v2498
        %v2507 = vmul.f32 %v2499, %v2499
        %v2508 = vmul.f32 %v2500, %v2500
        %v2509 = vmul.f32 %v2501, %v2501
        %v2510 = vmul.f32 %v2502, %v2502
        %v2511 = vmul.f32 %v2503, %v2503
        %v2512 = vadd.f32 %v2504, %v2505
        %v2513 = vadd.f32 %v2512, %v2506
        %v2514 = vadd.f32 %v2513, %v2507
        %v2515 = vadd.f32 %v2514, %v2508
        %v2516 = vadd.f32 %v2515, %v2509
        %v2517 = vadd.f32 %v2516, %v2510
        %v2518 = vadd.f32 %v2517, %v2511
        %v2519 = vrot.slane %v2518, 4
        %v2520 = vadd.f32 %v2518, %v2519
        %v2521 = vrot.slane %v2520, 2
        %v2522 = vadd.f32 %v2520, %v2521
        %v2523 = vrot.slane %v2522, 1
        %v2524 = vadd.f32 %v2522, %v2523
        %2525 = vmatprep.subr.mxu0 0.0
        %2526 = vmatpush1.msra.mxu0 %v539
        %2527 = vmatprep.subr.mxu0 0.0
        %2528 = vmatpush1.msra.mxu0 %v540
        %2529 = vmatprep.subr.mxu0 0.0
        %2530 = vmatpush1.msra.mxu0 %v541
        %2531 = vmatprep.subr.mxu0 0.0
        %2532 = vmatpush1.msra.mxu0 %v542
        %2533 = vmatprep.subr.mxu0 0.0
        %2534 = vmatpush1.msra.mxu0 %v543
        %2535 = vmatprep.subr.mxu0 0.0
        %2536 = vmatpush1.msra.mxu0 %v544
        %2537 = vmatprep.subr.mxu0 0.0
        %2538 = vmatpush1.msra.mxu0 %v545
        %2539 = vmatprep.subr.mxu0 0.0
        %2540 = vmatpush1.msra.mxu0 %v546
        %2541 = vmatprep.subr.mxu0 0.0
        %2542 = vmatpush1.msra.mxu0 %v547
        %2543 = vmatprep.subr.mxu0 0.0
        %2544 = vmatpush1.msra.mxu0 %v548
        %2545 = vmatprep.subr.mxu0 0.0
        %2546 = vmatpush1.msra.mxu0 %v549
        %2547 = vmatprep.subr.mxu0 0.0
        %2548 = vmatpush1.msra.mxu0 %v550
        %2549 = vmatprep.subr.mxu0 0.0
        %2550 = vmatpush1.msra.mxu0 %v551
        %2551 = vmatprep.subr.mxu0 0.0
        %2552 = vmatpush1.msra.mxu0 %v552
        %2553 = vmatprep.subr.mxu0 0.0
        %2554 = vmatpush1.msra.mxu0 %v553
        %2555 = vmatprep.subr.mxu0 0.0
        %2556 = vmatpush1.msra.mxu0 %v554
        %2557 = vmatprep.subr.mxu0 0.0
        %2558 = vmatpush1.msra.mxu0 0.0
        %2559 = vmatprep.subr.mxu0 0.0
        %2560 = vmatpush1.msra.mxu0 0.0
        %2561 = vmatprep.subr.mxu0 0.0
        %2562 = vmatpush1.msra.mxu0 0.0
        %2563 = vmatprep.subr.mxu0 0.0
        %2564 = vmatpush1.msra.mxu0 0.0
        %2565 = vmatprep.subr.mxu0 0.0
        %2566 = vmatpush1.msra.mxu0 0.0
        %2567 = vmatprep.subr.mxu0 0.0
        %2568 = vmatpush1.msra.mxu0 0.0
        %2569 = vmatprep.subr.mxu0 0.0
        %2570 = vmatpush1.msra.mxu0 0.0
        %2571 = vmatprep.subr.mxu0 0.0
        %2572 = vmatpush1.msra.mxu0 0.0
        %2573 = vmatprep.subr.mxu0 0.0
        %2574 = vmatpush1.msra.mxu0 0.0
        %2575 = vmatprep.subr.mxu0 0.0
        %2576 = vmatpush1.msra.mxu0 0.0
        %2577 = vmatprep.subr.mxu0 0.0
        %2578 = vmatpush1.msra.mxu0 0.0
        %2579 = vmatprep.subr.mxu0 0.0
        %2580 = vmatpush1.msra.mxu0 0.0
        %2581 = vmatprep.subr.mxu0 0.0
        %2582 = vmatpush1.msra.mxu0 0.0
        %2583 = vmatprep.subr.mxu0 0.0
        %2584 = vmatpush1.msra.mxu0 0.0
        %2585 = vmatprep.subr.mxu0 0.0
        %2586 = vmatpush1.msra.mxu0 0.0
        %2587 = vmatprep.subr.mxu0 0.0
        %2588 = vmatpush1.msra.mxu0 0.0
        %2589 = vmatprep.mubr.f32.mxu0 0.0
        %2590 = vmatmul.mubr.f32.gmra.mrb[0].mxu0 %v2524
        %v2591 = vpop.f32.mrb[0].mxu0
        %v2592 = vadd.f32 0.0, %v2591
        %v2593 = vpop.f32.mrb[0].mxu0
        %2594 = vdwg.mxu0
        %v2595 = vmul.f32 %v2592, %v652
        %v2596 = vadd.f32 %v2595, 1e-05
        %v2597 = vrsqrt.pop %v2596
        %v2599 = vsel %vm654, %v2597, 0
        %2601 = vmatprep.subr.mxu0 0.0
        %2602 = vmatpush1.msra.mxu0 %v555
        %2603 = vmatprep.subr.mxu0 0.0
        %2604 = vmatpush1.msra.mxu0 %v556
        %2605 = vmatprep.subr.mxu0 0.0
        %2606 = vmatpush1.msra.mxu0 %v557
        %2607 = vmatprep.subr.mxu0 0.0
        %2608 = vmatpush1.msra.mxu0 %v558
        %2609 = vmatprep.subr.mxu0 0.0
        %2610 = vmatpush1.msra.mxu0 0.0
        %2611 = vmatprep.subr.mxu0 0.0
        %2612 = vmatpush1.msra.mxu0 0.0
        %2613 = vmatprep.subr.mxu0 0.0
        %2614 = vmatpush1.msra.mxu0 0.0
        %2615 = vmatprep.subr.mxu0 0.0
        %2616 = vmatpush1.msra.mxu0 0.0
        %2617 = vmatprep.subr.mxu0 0.0
        %2618 = vmatpush1.msra.mxu0 0.0
        %2619 = vmatprep.subr.mxu0 0.0
        %2620 = vmatpush1.msra.mxu0 0.0
        %2621 = vmatprep.subr.mxu0 0.0
        %2622 = vmatpush1.msra.mxu0 0.0
        %2623 = vmatprep.subr.mxu0 0.0
        %2624 = vmatpush1.msra.mxu0 0.0
        %2625 = vmatprep.subr.mxu0 0.0
        %2626 = vmatpush1.msra.mxu0 0.0
        %2627 = vmatprep.subr.mxu0 0.0
        %2628 = vmatpush1.msra.mxu0 0.0
        %2629 = vmatprep.subr.mxu0 0.0
        %2630 = vmatpush1.msra.mxu0 0.0
        %2631 = vmatprep.subr.mxu0 0.0
        %2632 = vmatpush1.msra.mxu0 0.0
        %2633 = vmatprep.subr.mxu0 0.0
        %2634 = vmatpush1.msra.mxu0 0.0
        %2635 = vmatprep.subr.mxu0 0.0
        %2636 = vmatpush1.msra.mxu0 0.0
        %2637 = vmatprep.subr.mxu0 0.0
        %2638 = vmatpush1.msra.mxu0 0.0
        %2639 = vmatprep.subr.mxu0 0.0
        %2640 = vmatpush1.msra.mxu0 0.0
        %2641 = vmatprep.subr.mxu0 0.0
        %2642 = vmatpush1.msra.mxu0 0.0
        %2643 = vmatprep.subr.mxu0 0.0
        %2644 = vmatpush1.msra.mxu0 0.0
        %2645 = vmatprep.subr.mxu0 0.0
        %2646 = vmatpush1.msra.mxu0 0.0
        %2647 = vmatprep.subr.mxu0 0.0
        %2648 = vmatpush1.msra.mxu0 0.0
        %2649 = vmatprep.subr.mxu0 0.0
        %2650 = vmatpush1.msra.mxu0 0.0
        %2651 = vmatprep.subr.mxu0 0.0
        %2652 = vmatpush1.msra.mxu0 0.0
        %2653 = vmatprep.subr.mxu0 0.0
        %2654 = vmatpush1.msra.mxu0 0.0
        %2655 = vmatprep.subr.mxu0 0.0
        %2656 = vmatpush1.msra.mxu0 0.0
        %2657 = vmatprep.subr.mxu0 0.0
        %2658 = vmatpush1.msra.mxu0 0.0
        %2659 = vmatprep.subr.mxu0 0.0
        %2660 = vmatpush1.msra.mxu0 0.0
        %2661 = vmatprep.subr.mxu0 0.0
        %2662 = vmatpush1.msra.mxu0 0.0
        %2663 = vmatprep.subr.mxu0 0.0
        %2664 = vmatpush1.msra.mxu0 0.0
        %2665 = vmatprep.mubr.f32.mxu0 0.0
        %2666 = vmatmul.mubr.f32.gmra.mrb[0].mxu0 %v2599
        %v2667 = vpop.f32.mrb[0].mxu0
        %v2668 = vadd.f32 0.0, %v2667
        %v2669 = vpop.f32.mrb[0].mxu0
        %2670 = vdwg.mxu0
        %v2671 = vmul.f32 %v2668, %v2333
        %v2672 = vlaneseq
        %v2673 = vshrl.u32 %v2672, 7
        %v2674 = vsub.s32 0, %v2673
        %v2675 = vrot.slane %v2671, %v2674
        %v2676 = vmul.f32 %v2496, %v2675
        %v2677 = vmul.f32 %v2497, %v2675
        %v2678 = vmul.f32 %v2498, %v2675
        %v2679 = vmul.f32 %v2499, %v2675
        %v2680 = vmul.f32 %v2500, %v2675
        %v2681 = vmul.f32 %v2501, %v2675
        %v2682 = vmul.f32 %v2502, %v2675
        %v2683 = vmul.f32 %v2503, %v2675
        %v2685 = vlaneseq
        %v2686 = vshrl.u32 %v2685, 7
        %v2687 = vsub.s32 0, %v2686
        %v2688 = vrot.slane %v2334, %v2687
        %v2690 = vadd.f32 %v2676, %v2688
        %v2691 = vadd.f32 %v2677, %v2688
        %v2692 = vadd.f32 %v2678, %v2688
        %v2693 = vadd.f32 %v2679, %v2688
        %v2694 = vadd.f32 %v2680, %v2688
        %v2695 = vadd.f32 %v2681, %v2688
        %v2696 = vadd.f32 %v2682, %v2688
        %v2697 = vadd.f32 %v2683, %v2688
        %v2698 = vxor.u32 %v2690, 2147483648
        %v2699 = vxor.u32 %v2691, 2147483648
        %v2700 = vxor.u32 %v2692, 2147483648
        %v2701 = vxor.u32 %v2693, 2147483648
        %v2702 = vxor.u32 %v2694, 2147483648
        %v2703 = vxor.u32 %v2695, 2147483648
        %v2704 = vxor.u32 %v2696, 2147483648
        %v2705 = vxor.u32 %v2697, 2147483648
        %v2706 = vmul.f32 %v2698, 1.442695
        %v2707 = vpow.pop %v2706
        %v2708 = vmul.f32 %v2699, 1.442695
        %v2709 = vpow.pop %v2708
        %v2710 = vmul.f32 %v2700, 1.442695
        %v2711 = vpow.pop %v2710
        %v2712 = vmul.f32 %v2701, 1.442695
        %v2713 = vpow.pop %v2712
        %v2714 = vmul.f32 %v2702, 1.442695
        %v2715 = vpow.pop %v2714
        %v2716 = vmul.f32 %v2703, 1.442695
        %v2717 = vpow.pop %v2716
        %v2718 = vmul.f32 %v2704, 1.442695
        %v2719 = vpow.pop %v2718
        %v2720 = vmul.f32 %v2705, 1.442695
        %v2721 = vpow.pop %v2720
        %v2722 = vadd.f32 %v2707, 1.0
        %v2723 = vadd.f32 %v2709, 1.0
        %v2724 = vadd.f32 %v2711, 1.0
        %v2725 = vadd.f32 %v2713, 1.0
        %v2726 = vadd.f32 %v2715, 1.0
        %v2727 = vadd.f32 %v2717, 1.0
        %v2728 = vadd.f32 %v2719, 1.0
        %v2729 = vadd.f32 %v2721, 1.0
        %v2730 = vrcp.pop %v2722
        %v2731 = vmul.f32 1.0, %v2730
        %v2732 = vrcp.pop %v2723
        %v2733 = vmul.f32 1.0, %v2732
        %v2734 = vrcp.pop %v2724
        %v2735 = vmul.f32 1.0, %v2734
        %v2736 = vrcp.pop %v2725
        %v2737 = vmul.f32 1.0, %v2736
        %v2738 = vrcp.pop %v2726
        %v2739 = vmul.f32 1.0, %v2738
        %v2740 = vrcp.pop %v2727
        %v2741 = vmul.f32 1.0, %v2740
        %v2742 = vrcp.pop %v2728
        %v2743 = vmul.f32 1.0, %v2742
        %v2744 = vrcp.pop %v2729
        %v2745 = vmul.f32 1.0, %v2744
        %v2746 = vmul.f32 %v2690, %v2731
        %v2747 = vmul.f32 %v2691, %v2733
        %v2748 = vmul.f32 %v2692, %v2735
        %v2749 = vmul.f32 %v2693, %v2737
        %v2750 = vmul.f32 %v2694, %v2739
        %v2751 = vmul.f32 %v2695, %v2741
        %v2752 = vmul.f32 %v2696, %v2743
        %v2753 = vmul.f32 %v2697, %v2745
        %2754 = vst [vmem:[#allocation2 + $0x8] sm:$0xff] %v2746
        %2755 = vst [vmem:[#allocation2 + $0x10] sm:$0xff] %v2747
        %2756 = vst [vmem:[#allocation2 + $0x18] sm:$0xff] %v2748
        %2757 = vst [vmem:[#allocation2 + $0x20] sm:$0xff] %v2749
        %2758 = vst [vmem:[#allocation2 + $0x28] sm:$0xff] %v2750
        %2759 = vst [vmem:[#allocation2 + $0x30] sm:$0xff] %v2751
        %2760 = vst [vmem:[#allocation2 + $0x38] sm:$0xff] %v2752
        %2761 = vst [vmem:[#allocation2 + $0x40] sm:$0xff] %v2753
        %v2762 = vld [vmem:[%s10] sm:$0x1]
        %v2763 = vld [vmem:[#allocation2] sm:$0xff]
        %v2764 = vld [vmem:[#allocation2 + $0x8] sm:$0xff]
        %v2765 = vld [vmem:[#allocation2 + $0x10] sm:$0xff]
        %v2766 = vld [vmem:[#allocation2 + $0x18] sm:$0xff]
        %v2767 = vld [vmem:[#allocation2 + $0x20] sm:$0xff]
        %v2768 = vld [vmem:[#allocation2 + $0x28] sm:$0xff]
        %v2769 = vld [vmem:[#allocation2 + $0x30] sm:$0xff]
        %v2770 = vld [vmem:[#allocation2 + $0x38] sm:$0xff]
        %v2771 = vpack.c.bf16 %v2764, %v2763
        %v2772 = vpack.c.bf16 %v2766, %v2765
        %v2773 = vpack.c.bf16 %v2768, %v2767
        %v2774 = vpack.c.bf16 %v2770, %v2769
        %v2775 = vld [vmem:[#allocation6] sm:$0xf]
        %v2776 = vld [vmem:[#allocation6 + $0x4] sm:$0xf]
        %v2777 = vld [vmem:[#allocation6 + $0x8] sm:$0xf]
        %v2778 = vld [vmem:[#allocation6 + $0xc] sm:$0xf]
        %v2779 = vld [vmem:[#allocation6 + $0x10] sm:$0xf]
        %v2780 = vld [vmem:[#allocation6 + $0x14] sm:$0xf]
        %v2781 = vld [vmem:[#allocation6 + $0x18] sm:$0xf]
        %v2782 = vld [vmem:[#allocation6 + $0x1c] sm:$0xf]
        %v2783 = vld [vmem:[#allocation6 + $0x20] sm:$0xf]
        %v2784 = vld [vmem:[#allocation6 + $0x24] sm:$0xf]
        %v2785 = vld [vmem:[#allocation6 + $0x28] sm:$0xf]
        %v2786 = vld [vmem:[#allocation6 + $0x2c] sm:$0xf]
        %v2787 = vld [vmem:[#allocation6 + $0x30] sm:$0xf]
        %v2788 = vld [vmem:[#allocation6 + $0x34] sm:$0xf]
        %v2789 = vld [vmem:[#allocation6 + $0x38] sm:$0xf]
        %v2790 = vld [vmem:[#allocation6 + $0x3c] sm:$0xf]
        %s2791 = scalar_lea.vmem [#allocation6], 64
        %v2792 = vld [vmem:[%s2791] sm:$0xf]
        %v2793 = vld [vmem:[%s2791 + $0x4] sm:$0xf]
        %v2794 = vld [vmem:[%s2791 + $0x8] sm:$0xf]
        %v2795 = vld [vmem:[%s2791 + $0xc] sm:$0xf]
        %v2796 = vld [vmem:[%s2791 + $0x10] sm:$0xf]
        %v2797 = vld [vmem:[%s2791 + $0x14] sm:$0xf]
        %v2798 = vld [vmem:[%s2791 + $0x18] sm:$0xf]
        %v2799 = vld [vmem:[%s2791 + $0x1c] sm:$0xf]
        %v2800 = vld [vmem:[%s2791 + $0x20] sm:$0xf]
        %v2801 = vld [vmem:[%s2791 + $0x24] sm:$0xf]
        %v2802 = vld [vmem:[%s2791 + $0x28] sm:$0xf]
        %v2803 = vld [vmem:[%s2791 + $0x2c] sm:$0xf]
        %v2804 = vld [vmem:[%s2791 + $0x30] sm:$0xf]
        %v2805 = vld [vmem:[%s2791 + $0x34] sm:$0xf]
        %v2806 = vld [vmem:[%s2791 + $0x38] sm:$0xf]
        %v2807 = vld [vmem:[%s2791 + $0x3c] sm:$0xf]
        %s2808 = scalar_lea.vmem [#allocation6], 128
        %v2809 = vld [vmem:[%s2808] sm:$0xf]
        %v2810 = vld [vmem:[%s2808 + $0x4] sm:$0xf]
        %v2811 = vld [vmem:[%s2808 + $0x8] sm:$0xf]
        %v2812 = vld [vmem:[%s2808 + $0xc] sm:$0xf]
        %v2813 = vld [vmem:[%s2808 + $0x10] sm:$0xf]
        %v2814 = vld [vmem:[%s2808 + $0x14] sm:$0xf]
        %v2815 = vld [vmem:[%s2808 + $0x18] sm:$0xf]
        %v2816 = vld [vmem:[%s2808 + $0x1c] sm:$0xf]
        %v2817 = vld [vmem:[%s2808 + $0x20] sm:$0xf]
        %v2818 = vld [vmem:[%s2808 + $0x24] sm:$0xf]
        %v2819 = vld [vmem:[%s2808 + $0x28] sm:$0xf]
        %v2820 = vld [vmem:[%s2808 + $0x2c] sm:$0xf]
        %v2821 = vld [vmem:[%s2808 + $0x30] sm:$0xf]
        %v2822 = vld [vmem:[%s2808 + $0x34] sm:$0xf]
        %v2823 = vld [vmem:[%s2808 + $0x38] sm:$0xf]
        %v2824 = vld [vmem:[%s2808 + $0x3c] sm:$0xf]
        %v2825 = vld [vmem:[#allocation2 + $0x40] sm:$0xff]
        %v2826 = vpack.c.bf16 %v2765, %v2764
        %v2827 = vpack.c.bf16 %v2767, %v2766
        %v2828 = vpack.c.bf16 %v2769, %v2768
        %v2829 = vpack.c.bf16 %v2825, %v2770
        %s2830 = scalar_lea.vmem [#allocation6], 192
        %v2831 = vld [vmem:[%s2830] sm:$0xf]
        %v2832 = vld [vmem:[%s2830 + $0x4] sm:$0xf]
        %v2833 = vld [vmem:[%s2830 + $0x8] sm:$0xf]
        %v2834 = vld [vmem:[%s2830 + $0xc] sm:$0xf]
        %v2835 = vld [vmem:[%s2830 + $0x10] sm:$0xf]
        %v2836 = vld [vmem:[%s2830 + $0x14] sm:$0xf]
        %v2837 = vld [vmem:[%s2830 + $0x18] sm:$0xf]
        %v2838 = vld [vmem:[%s2830 + $0x1c] sm:$0xf]
        %v2839 = vld [vmem:[%s2830 + $0x20] sm:$0xf]
        %v2840 = vld [vmem:[%s2830 + $0x24] sm:$0xf]
        %v2841 = vld [vmem:[%s2830 + $0x28] sm:$0xf]
        %v2842 = vld [vmem:[%s2830 + $0x2c] sm:$0xf]
        %v2843 = vld [vmem:[%s2830 + $0x30] sm:$0xf]
        %v2844 = vld [vmem:[%s2830 + $0x34] sm:$0xf]
        %v2845 = vld [vmem:[%s2830 + $0x38] sm:$0xf]
        %v2846 = vld [vmem:[%s2830 + $0x3c] sm:$0xf]
        %v2863 = vunpack.c.l.b16 %v2831
        %v2864 = vunpack.c.l.b16 %v2832
        %v2865 = vunpack.c.l.b16 %v2833
        %v2866 = vunpack.c.l.b16 %v2834
        %v2867 = vunpack.c.l.b16 %v2835
        %v2868 = vunpack.c.l.b16 %v2836
        %v2869 = vunpack.c.l.b16 %v2837
        %v2870 = vunpack.c.l.b16 %v2838
        %v2871 = vunpack.c.l.b16 %v2839
        %v2872 = vunpack.c.l.b16 %v2840
        %v2873 = vunpack.c.l.b16 %v2841
        %v2874 = vunpack.c.l.b16 %v2842
        %v2875 = vunpack.c.l.b16 %v2843
        %v2876 = vunpack.c.l.b16 %v2844
        %v2877 = vunpack.c.l.b16 %v2845
        %v2878 = vunpack.c.l.b16 %v2846
        %v2879 = vpack.c.b16 %v2864, %v2863
        %v2880 = vpack.c.b16 %v2866, %v2865
        %v2881 = vpack.c.b16 %v2868, %v2867
        %v2882 = vpack.c.b16 %v2870, %v2869
        %v2883 = vpack.c.b16 %v2872, %v2871
        %v2884 = vpack.c.b16 %v2874, %v2873
        %v2885 = vpack.c.b16 %v2876, %v2875
        %v2886 = vpack.c.b16 %v2878, %v2877
        %2895 = vmatprep.subr.bf16.mxu0 0
        %2896 = vmatpush1.bf16.msra.mxu0 %v2879
        %2897 = vmatprep.subr.bf16.mxu0 0
        %2898 = vmatpush1.bf16.msra.mxu0 %v2880
        %2899 = vmatprep.subr.bf16.mxu0 0
        %2900 = vmatpush1.bf16.msra.mxu0 %v2881
        %2901 = vmatprep.subr.bf16.mxu0 0
        %2902 = vmatpush1.bf16.msra.mxu0 %v2882
        %2903 = vmatprep.subr.bf16.mxu0 0
        %2904 = vmatpush1.bf16.msra.mxu0 %v2883
        %2905 = vmatprep.subr.bf16.mxu0 0
        %2906 = vmatpush1.bf16.msra.mxu0 %v2884
        %2907 = vmatprep.subr.bf16.mxu0 0
        %2908 = vmatpush1.bf16.msra.mxu0 %v2885
        %2909 = vmatprep.subr.bf16.mxu0 0
        %2910 = vmatpush1.bf16.msra.mxu0 %v2886
        %2911 = vmatprep.subr.bf16.mxu0 0
        %2912 = vmatpush1.bf16.msra.mxu0 0
        %2913 = vmatprep.subr.bf16.mxu0 0
        %2914 = vmatpush1.bf16.msra.mxu0 0
        %2915 = vmatprep.subr.bf16.mxu0 0
        %2916 = vmatpush1.bf16.msra.mxu0 0
        %2917 = vmatprep.subr.bf16.mxu0 0
        %2918 = vmatpush1.bf16.msra.mxu0 0
        %2919 = vmatprep.subr.bf16.mxu0 0
        %2920 = vmatpush1.bf16.msra.mxu0 0
        %2921 = vmatprep.subr.bf16.mxu0 0
        %2922 = vmatpush1.bf16.msra.mxu0 0
        %2923 = vmatprep.subr.bf16.mxu0 0
        %2924 = vmatpush1.bf16.msra.mxu0 0
        %2925 = vmatprep.subr.bf16.mxu0 0
        %2926 = vmatpush1.bf16.msra.mxu0 0
        %2927 = vmatprep.mubr.bf16.mxu0 0
        %2928 = vmatmul.mubr.bf16.gmra.mrb[0].mxu0 %v2826
        %v2929 = vpop.f32.mrb[0].mxu0
        %v2930 = vadd.f32 0.0, %v2929
        %v2931 = vpop.f32.mrb[0].mxu0
        %v2932 = vpop.f32.mrb[0].mxu0
        %v2933 = vadd.f32 0.0, %v2932
        %v2934 = vpop.f32.mrb[0].mxu0
        %2935 = vmatprep.mubr.bf16.mxu0 0
        %2936 = vmatmul.mubr.bf16.gmra.mrb[0].mxu0 %v2827
        %v2937 = vpop.f32.mrb[0].mxu0
        %v2938 = vadd.f32 0.0, %v2937
        %v2939 = vpop.f32.mrb[0].mxu0
        %v2940 = vpop.f32.mrb[0].mxu0
        %v2941 = vadd.f32 0.0, %v2940
        %v2942 = vpop.f32.mrb[0].mxu0
        %2943 = vmatprep.mubr.bf16.mxu0 0
        %2944 = vmatmul.mubr.bf16.gmra.mrb[0].mxu0 %v2828
        %v2945 = vpop.f32.mrb[0].mxu0
        %v2946 = vadd.f32 0.0, %v2945
        %v2947 = vpop.f32.mrb[0].mxu0
        %v2948 = vpop.f32.mrb[0].mxu0
        %v2949 = vadd.f32 0.0, %v2948
        %v2950 = vpop.f32.mrb[0].mxu0
        %2951 = vmatprep.mubr.bf16.mxu0 0
        %2952 = vmatmul.mubr.bf16.gmra.mrb[0].mxu0 %v2829
        %v2953 = vpop.f32.mrb[0].mxu0
        %v2954 = vadd.f32 0.0, %v2953
        %v2955 = vpop.f32.mrb[0].mxu0
        %v2956 = vpop.f32.mrb[0].mxu0
        %v2957 = vadd.f32 0.0, %v2956
        %v2958 = vpop.f32.mrb[0].mxu0
        %2959 = vdwg.mxu0
        %v2976 = vunpack.c.l.b16 %v2775
        %v2977 = vunpack.c.l.b16 %v2776
        %v2978 = vunpack.c.l.b16 %v2777
        %v2979 = vunpack.c.l.b16 %v2778
        %v2980 = vunpack.c.l.b16 %v2779
        %v2981 = vunpack.c.l.b16 %v2780
        %v2982 = vunpack.c.l.b16 %v2781
        %v2983 = vunpack.c.l.b16 %v2782
        %v2984 = vunpack.c.l.b16 %v2783
        %v2985 = vunpack.c.l.b16 %v2784
        %v2986 = vunpack.c.l.b16 %v2785
        %v2987 = vunpack.c.l.b16 %v2786
        %v2988 = vunpack.c.l.b16 %v2787
        %v2989 = vunpack.c.l.b16 %v2788
        %v2990 = vunpack.c.l.b16 %v2789
        %v2991 = vunpack.c.l.b16 %v2790
        %v2992 = vpack.c.b16 %v2977, %v2976
        %v2993 = vpack.c.b16 %v2979, %v2978
        %v2994 = vpack.c.b16 %v2981, %v2980
        %v2995 = vpack.c.b16 %v2983, %v2982
        %v2996 = vpack.c.b16 %v2985, %v2984
        %v2997 = vpack.c.b16 %v2987, %v2986
        %v2998 = vpack.c.b16 %v2989, %v2988
        %v2999 = vpack.c.b16 %v2991, %v2990
        %3008 = vmatprep.subr.bf16.mxu0 0
        %3009 = vmatpush1.bf16.msra.mxu0 %v2992
        %3010 = vmatprep.subr.bf16.mxu0 0
        %3011 = vmatpush1.bf16.msra.mxu0 %v2993
        %3012 = vmatprep.subr.bf16.mxu0 0
        %3013 = vmatpush1.bf16.msra.mxu0 %v2994
        %3014 = vmatprep.subr.bf16.mxu0 0
        %3015 = vmatpush1.bf16.msra.mxu0 %v2995
        %3016 = vmatprep.subr.bf16.mxu0 0
        %3017 = vmatpush1.bf16.msra.mxu0 %v2996
        %3018 = vmatprep.subr.bf16.mxu0 0
        %3019 = vmatpush1.bf16.msra.mxu0 %v2997
        %3020 = vmatprep.subr.bf16.mxu0 0
        %3021 = vmatpush1.bf16.msra.mxu0 %v2998
        %3022 = vmatprep.subr.bf16.mxu0 0
        %3023 = vmatpush1.bf16.msra.mxu0 %v2999
        %3024 = vmatprep.subr.bf16.mxu0 0
        %3025 = vmatpush1.bf16.msra.mxu0 0
        %3026 = vmatprep.subr.bf16.mxu0 0
        %3027 = vmatpush1.bf16.msra.mxu0 0
        %3028 = vmatprep.subr.bf16.mxu0 0
        %3029 = vmatpush1.bf16.msra.mxu0 0
        %3030 = vmatprep.subr.bf16.mxu0 0
        %3031 = vmatpush1.bf16.msra.mxu0 0
        %3032 = vmatprep.subr.bf16.mxu0 0
        %3033 = vmatpush1.bf16.msra.mxu0 0
        %3034 = vmatprep.subr.bf16.mxu0 0
        %3035 = vmatpush1.bf16.msra.mxu0 0
        %3036 = vmatprep.subr.bf16.mxu0 0
        %3037 = vmatpush1.bf16.msra.mxu0 0
        %3038 = vmatprep.subr.bf16.mxu0 0
        %3039 = vmatpush1.bf16.msra.mxu0 0
        %3040 = vmatprep.mubr.bf16.mxu0 0
        %3041 = vmatmul.mubr.bf16.gmra.mrb[0].mxu0 %v2771
        %v3042 = vpop.f32.mrb[0].mxu0
        %v3043 = vadd.f32 %v2930, %v3042
        %v3044 = vpop.f32.mrb[0].mxu0
        %v3045 = vpop.f32.mrb[0].mxu0
        %v3046 = vadd.f32 %v2933, %v3045
        %v3047 = vpop.f32.mrb[0].mxu0
        %3048 = vmatprep.mubr.bf16.mxu0 0
        %3049 = vmatmul.mubr.bf16.gmra.mrb[0].mxu0 %v2772
        %v3050 = vpop.f32.mrb[0].mxu0
        %v3051 = vadd.f32 %v2938, %v3050
        %v3052 = vpop.f32.mrb[0].mxu0
        %v3053 = vpop.f32.mrb[0].mxu0
        %v3054 = vadd.f32 %v2941, %v3053
        %v3055 = vpop.f32.mrb[0].mxu0
        %3056 = vmatprep.mubr.bf16.mxu0 0
        %3057 = vmatmul.mubr.bf16.gmra.mrb[0].mxu0 %v2773
        %v3058 = vpop.f32.mrb[0].mxu0
        %v3059 = vadd.f32 %v2946, %v3058
        %v3060 = vpop.f32.mrb[0].mxu0
        %v3061 = vpop.f32.mrb[0].mxu0
        %v3062 = vadd.f32 %v2949, %v3061
        %v3063 = vpop.f32.mrb[0].mxu0
        %3064 = vmatprep.mubr.bf16.mxu0 0
        %3065 = vmatmul.mubr.bf16.gmra.mrb[0].mxu0 %v2774
        %v3066 = vpop.f32.mrb[0].mxu0
        %v3067 = vadd.f32 %v2954, %v3066
        %v3068 = vpop.f32.mrb[0].mxu0
        %v3069 = vpop.f32.mrb[0].mxu0
        %v3070 = vadd.f32 %v2957, %v3069
        %v3071 = vpop.f32.mrb[0].mxu0
        %3072 = vdwg.mxu0
        %s3073 = scalar_lea.vmem [#allocation6], 256
        %v3074 = vld [vmem:[%s3073] sm:$0xf]
        %v3075 = vld [vmem:[%s3073 + $0x4] sm:$0xf]
        %v3076 = vld [vmem:[%s3073 + $0x8] sm:$0xf]
        %v3077 = vld [vmem:[%s3073 + $0xc] sm:$0xf]
        %v3078 = vld [vmem:[%s3073 + $0x10] sm:$0xf]
        %v3079 = vld [vmem:[%s3073 + $0x14] sm:$0xf]
        %v3080 = vld [vmem:[%s3073 + $0x18] sm:$0xf]
        %v3081 = vld [vmem:[%s3073 + $0x1c] sm:$0xf]
        %v3082 = vld [vmem:[%s3073 + $0x20] sm:$0xf]
        %v3083 = vld [vmem:[%s3073 + $0x24] sm:$0xf]
        %v3084 = vld [vmem:[%s3073 + $0x28] sm:$0xf]
        %v3085 = vld [vmem:[%s3073 + $0x2c] sm:$0xf]
        %v3086 = vld [vmem:[%s3073 + $0x30] sm:$0xf]
        %v3087 = vld [vmem:[%s3073 + $0x34] sm:$0xf]
        %v3088 = vld [vmem:[%s3073 + $0x38] sm:$0xf]
        %v3089 = vld [vmem:[%s3073 + $0x3c] sm:$0xf]
        %v3106 = vunpack.c.l.b16 %v3074
        %v3107 = vunpack.c.l.b16 %v3075
        %v3108 = vunpack.c.l.b16 %v3076
        %v3109 = vunpack.c.l.b16 %v3077
        %v3110 = vunpack.c.l.b16 %v3078
        %v3111 = vunpack.c.l.b16 %v3079
        %v3112 = vunpack.c.l.b16 %v3080
        %v3113 = vunpack.c.l.b16 %v3081
        %v3114 = vunpack.c.l.b16 %v3082
        %v3115 = vunpack.c.l.b16 %v3083
        %v3116 = vunpack.c.l.b16 %v3084
        %v3117 = vunpack.c.l.b16 %v3085
        %v3118 = vunpack.c.l.b16 %v3086
        %v3119 = vunpack.c.l.b16 %v3087
        %v3120 = vunpack.c.l.b16 %v3088
        %v3121 = vunpack.c.l.b16 %v3089
        %v3122 = vpack.c.b16 %v3107, %v3106
        %v3123 = vpack.c.b16 %v3109, %v3108
        %v3124 = vpack.c.b16 %v3111, %v3110
        %v3125 = vpack.c.b16 %v3113, %v3112
        %v3126 = vpack.c.b16 %v3115, %v3114
        %v3127 = vpack.c.b16 %v3117, %v3116
        %v3128 = vpack.c.b16 %v3119, %v3118
        %v3129 = vpack.c.b16 %v3121, %v3120
        %3138 = vmatprep.subr.bf16.mxu0 0
        %3139 = vmatpush1.bf16.msra.mxu0 %v3122
        %3140 = vmatprep.subr.bf16.mxu0 0
        %3141 = vmatpush1.bf16.msra.mxu0 %v3123
        %3142 = vmatprep.subr.bf16.mxu0 0
        %3143 = vmatpush1.bf16.msra.mxu0 %v3124
        %3144 = vmatprep.subr.bf16.mxu0 0
        %3145 = vmatpush1.bf16.msra.mxu0 %v3125
        %3146 = vmatprep.subr.bf16.mxu0 0
        %3147 = vmatpush1.bf16.msra.mxu0 %v3126
        %3148 = vmatprep.subr.bf16.mxu0 0
        %3149 = vmatpush1.bf16.msra.mxu0 %v3127
        %3150 = vmatprep.subr.bf16.mxu0 0
        %3151 = vmatpush1.bf16.msra.mxu0 %v3128
        %3152 = vmatprep.subr.bf16.mxu0 0
        %3153 = vmatpush1.bf16.msra.mxu0 %v3129
        %3154 = vmatprep.subr.bf16.mxu0 0
        %3155 = vmatpush1.bf16.msra.mxu0 0
        %3156 = vmatprep.subr.bf16.mxu0 0
        %3157 = vmatpush1.bf16.msra.mxu0 0
        %3158 = vmatprep.subr.bf16.mxu0 0
        %3159 = vmatpush1.bf16.msra.mxu0 0
        %3160 = vmatprep.subr.bf16.mxu0 0
        %3161 = vmatpush1.bf16.msra.mxu0 0
        %3162 = vmatprep.subr.bf16.mxu0 0
        %3163 = vmatpush1.bf16.msra.mxu0 0
        %3164 = vmatprep.subr.bf16.mxu0 0
        %3165 = vmatpush1.bf16.msra.mxu0 0
        %3166 = vmatprep.subr.bf16.mxu0 0
        %3167 = vmatpush1.bf16.msra.mxu0 0
        %3168 = vmatprep.subr.bf16.mxu0 0
        %3169 = vmatpush1.bf16.msra.mxu0 0
        %3170 = vmatprep.mubr.bf16.mxu0 0
        %3171 = vmatmul.mubr.bf16.gmra.mrb[0].mxu0 %v2826
        %v3172 = vpop.f32.mrb[0].mxu0
        %v3173 = vadd.f32 0.0, %v3172
        %v3174 = vpop.f32.mrb[0].mxu0
        %v3175 = vpop.f32.mrb[0].mxu0
        %v3176 = vadd.f32 0.0, %v3175
        %v3177 = vpop.f32.mrb[0].mxu0
        %3178 = vmatprep.mubr.bf16.mxu0 0
        %3179 = vmatmul.mubr.bf16.gmra.mrb[0].mxu0 %v2827
        %v3180 = vpop.f32.mrb[0].mxu0
        %v3181 = vadd.f32 0.0, %v3180
        %v3182 = vpop.f32.mrb[0].mxu0
        %v3183 = vpop.f32.mrb[0].mxu0
        %v3184 = vadd.f32 0.0, %v3183
        %v3185 = vpop.f32.mrb[0].mxu0
        %3186 = vmatprep.mubr.bf16.mxu0 0
        %3187 = vmatmul.mubr.bf16.gmra.mrb[0].mxu0 %v2828
        %v3188 = vpop.f32.mrb[0].mxu0
        %v3189 = vadd.f32 0.0, %v3188
        %v3190 = vpop.f32.mrb[0].mxu0
        %v3191 = vpop.f32.mrb[0].mxu0
        %v3192 = vadd.f32 0.0, %v3191
        %v3193 = vpop.f32.mrb[0].mxu0
        %3194 = vmatprep.mubr.bf16.mxu0 0
        %3195 = vmatmul.mubr.bf16.gmra.mrb[0].mxu0 %v2829
        %v3196 = vpop.f32.mrb[0].mxu0
        %v3197 = vadd.f32 0.0, %v3196
        %v3198 = vpop.f32.mrb[0].mxu0
        %v3199 = vpop.f32.mrb[0].mxu0
        %v3200 = vadd.f32 0.0, %v3199
        %v3201 = vpop.f32.mrb[0].mxu0
        %3202 = vdwg.mxu0
        %v3219 = vunpack.c.l.b16 %v2792
        %v3220 = vunpack.c.l.b16 %v2793
        %v3221 = vunpack.c.l.b16 %v2794
        %v3222 = vunpack.c.l.b16 %v2795
        %v3223 = vunpack.c.l.b16 %v2796
        %v3224 = vunpack.c.l.b16 %v2797
        %v3225 = vunpack.c.l.b16 %v2798
        %v3226 = vunpack.c.l.b16 %v2799
        %v3227 = vunpack.c.l.b16 %v2800
        %v3228 = vunpack.c.l.b16 %v2801
        %v3229 = vunpack.c.l.b16 %v2802
        %v3230 = vunpack.c.l.b16 %v2803
        %v3231 = vunpack.c.l.b16 %v2804
        %v3232 = vunpack.c.l.b16 %v2805
        %v3233 = vunpack.c.l.b16 %v2806
        %v3234 = vunpack.c.l.b16 %v2807
        %v3235 = vpack.c.b16 %v3220, %v3219
        %v3236 = vpack.c.b16 %v3222, %v3221
        %v3237 = vpack.c.b16 %v3224, %v3223
        %v3238 = vpack.c.b16 %v3226, %v3225
        %v3239 = vpack.c.b16 %v3228, %v3227
        %v3240 = vpack.c.b16 %v3230, %v3229
        %v3241 = vpack.c.b16 %v3232, %v3231
        %v3242 = vpack.c.b16 %v3234, %v3233
        %3251 = vmatprep.subr.bf16.mxu0 0
        %3252 = vmatpush1.bf16.msra.mxu0 %v3235
        %3253 = vmatprep.subr.bf16.mxu0 0
        %3254 = vmatpush1.bf16.msra.mxu0 %v3236
        %3255 = vmatprep.subr.bf16.mxu0 0
        %3256 = vmatpush1.bf16.msra.mxu0 %v3237
        %3257 = vmatprep.subr.bf16.mxu0 0
        %3258 = vmatpush1.bf16.msra.mxu0 %v3238
        %3259 = vmatprep.subr.bf16.mxu0 0
        %3260 = vmatpush1.bf16.msra.mxu0 %v3239
        %3261 = vmatprep.subr.bf16.mxu0 0
        %3262 = vmatpush1.bf16.msra.mxu0 %v3240
        %3263 = vmatprep.subr.bf16.mxu0 0
        %3264 = vmatpush1.bf16.msra.mxu0 %v3241
        %3265 = vmatprep.subr.bf16.mxu0 0
        %3266 = vmatpush1.bf16.msra.mxu0 %v3242
        %3267 = vmatprep.subr.bf16.mxu0 0
        %3268 = vmatpush1.bf16.msra.mxu0 0
        %3269 = vmatprep.subr.bf16.mxu0 0
        %3270 = vmatpush1.bf16.msra.mxu0 0
        %3271 = vmatprep.subr.bf16.mxu0 0
        %3272 = vmatpush1.bf16.msra.mxu0 0
        %3273 = vmatprep.subr.bf16.mxu0 0
        %3274 = vmatpush1.bf16.msra.mxu0 0
        %3275 = vmatprep.subr.bf16.mxu0 0
        %3276 = vmatpush1.bf16.msra.mxu0 0
        %3277 = vmatprep.subr.bf16.mxu0 0
        %3278 = vmatpush1.bf16.msra.mxu0 0
        %3279 = vmatprep.subr.bf16.mxu0 0
        %3280 = vmatpush1.bf16.msra.mxu0 0
        %3281 = vmatprep.subr.bf16.mxu0 0
        %3282 = vmatpush1.bf16.msra.mxu0 0
        %3283 = vmatprep.mubr.bf16.mxu0 0
        %3284 = vmatmul.mubr.bf16.gmra.mrb[0].mxu0 %v2771
        %v3285 = vpop.f32.mrb[0].mxu0
        %v3286 = vadd.f32 %v3173, %v3285
        %v3287 = vpop.f32.mrb[0].mxu0
        %v3288 = vpop.f32.mrb[0].mxu0
        %v3289 = vadd.f32 %v3176, %v3288
        %v3290 = vpop.f32.mrb[0].mxu0
        %3291 = vmatprep.mubr.bf16.mxu0 0
        %3292 = vmatmul.mubr.bf16.gmra.mrb[0].mxu0 %v2772
        %v3293 = vpop.f32.mrb[0].mxu0
        %v3294 = vadd.f32 %v3181, %v3293
        %v3295 = vpop.f32.mrb[0].mxu0
        %v3296 = vpop.f32.mrb[0].mxu0
        %v3297 = vadd.f32 %v3184, %v3296
        %v3298 = vpop.f32.mrb[0].mxu0
        %3299 = vmatprep.mubr.bf16.mxu0 0
        %3300 = vmatmul.mubr.bf16.gmra.mrb[0].mxu0 %v2773
        %v3301 = vpop.f32.mrb[0].mxu0
        %v3302 = vadd.f32 %v3189, %v3301
        %v3303 = vpop.f32.mrb[0].mxu0
        %v3304 = vpop.f32.mrb[0].mxu0
        %v3305 = vadd.f32 %v3192, %v3304
        %v3306 = vpop.f32.mrb[0].mxu0
        %3307 = vmatprep.mubr.bf16.mxu0 0
        %3308 = vmatmul.mubr.bf16.gmra.mrb[0].mxu0 %v2774
        %v3309 = vpop.f32.mrb[0].mxu0
        %v3310 = vadd.f32 %v3197, %v3309
        %v3311 = vpop.f32.mrb[0].mxu0
        %v3312 = vpop.f32.mrb[0].mxu0
        %v3313 = vadd.f32 %v3200, %v3312
        %v3314 = vpop.f32.mrb[0].mxu0
        %3315 = vdwg.mxu0
        %s3316 = scalar_lea.vmem [#allocation6], 320
        %v3317 = vld [vmem:[%s3316] sm:$0xf]
        %v3318 = vld [vmem:[%s3316 + $0x4] sm:$0xf]
        %v3319 = vld [vmem:[%s3316 + $0x8] sm:$0xf]
        %v3320 = vld [vmem:[%s3316 + $0xc] sm:$0xf]
        %v3321 = vld [vmem:[%s3316 + $0x10] sm:$0xf]
        %v3322 = vld [vmem:[%s3316 + $0x14] sm:$0xf]
        %v3323 = vld [vmem:[%s3316 + $0x18] sm:$0xf]
        %v3324 = vld [vmem:[%s3316 + $0x1c] sm:$0xf]
        %v3325 = vld [vmem:[%s3316 + $0x20] sm:$0xf]
        %v3326 = vld [vmem:[%s3316 + $0x24] sm:$0xf]
        %v3327 = vld [vmem:[%s3316 + $0x28] sm:$0xf]
        %v3328 = vld [vmem:[%s3316 + $0x2c] sm:$0xf]
        %v3329 = vld [vmem:[%s3316 + $0x30] sm:$0xf]
        %v3330 = vld [vmem:[%s3316 + $0x34] sm:$0xf]
        %v3331 = vld [vmem:[%s3316 + $0x38] sm:$0xf]
        %v3332 = vld [vmem:[%s3316 + $0x3c] sm:$0xf]
        %v3349 = vunpack.c.l.b16 %v3317
        %v3350 = vunpack.c.l.b16 %v3318
        %v3351 = vunpack.c.l.b16 %v3319
        %v3352 = vunpack.c.l.b16 %v3320
        %v3353 = vunpack.c.l.b16 %v3321
        %v3354 = vunpack.c.l.b16 %v3322
        %v3355 = vunpack.c.l.b16 %v3323
        %v3356 = vunpack.c.l.b16 %v3324
        %v3357 = vunpack.c.l.b16 %v3325
        %v3358 = vunpack.c.l.b16 %v3326
        %v3359 = vunpack.c.l.b16 %v3327
        %v3360 = vunpack.c.l.b16 %v3328
        %v3361 = vunpack.c.l.b16 %v3329
        %v3362 = vunpack.c.l.b16 %v3330
        %v3363 = vunpack.c.l.b16 %v3331
        %v3364 = vunpack.c.l.b16 %v3332
        %v3365 = vpack.c.b16 %v3350, %v3349
        %v3366 = vpack.c.b16 %v3352, %v3351
        %v3367 = vpack.c.b16 %v3354, %v3353
        %v3368 = vpack.c.b16 %v3356, %v3355
        %v3369 = vpack.c.b16 %v3358, %v3357
        %v3370 = vpack.c.b16 %v3360, %v3359
        %v3371 = vpack.c.b16 %v3362, %v3361
        %v3372 = vpack.c.b16 %v3364, %v3363
        %3381 = vmatprep.subr.bf16.mxu0 0
        %3382 = vmatpush1.bf16.msra.mxu0 %v3365
        %3383 = vmatprep.subr.bf16.mxu0 0
        %3384 = vmatpush1.bf16.msra.mxu0 %v3366
        %3385 = vmatprep.subr.bf16.mxu0 0
        %3386 = vmatpush1.bf16.msra.mxu0 %v3367
        %3387 = vmatprep.subr.bf16.mxu0 0
        %3388 = vmatpush1.bf16.msra.mxu0 %v3368
        %3389 = vmatprep.subr.bf16.mxu0 0
        %3390 = vmatpush1.bf16.msra.mxu0 %v3369
        %3391 = vmatprep.subr.bf16.mxu0 0
        %3392 = vmatpush1.bf16.msra.mxu0 %v3370
        %3393 = vmatprep.subr.bf16.mxu0 0
        %3394 = vmatpush1.bf16.msra.mxu0 %v3371
        %3395 = vmatprep.subr.bf16.mxu0 0
        %3396 = vmatpush1.bf16.msra.mxu0 %v3372
        %3397 = vmatprep.subr.bf16.mxu0 0
        %3398 = vmatpush1.bf16.msra.mxu0 0
        %3399 = vmatprep.subr.bf16.mxu0 0
        %3400 = vmatpush1.bf16.msra.mxu0 0
        %3401 = vmatprep.subr.bf16.mxu0 0
        %3402 = vmatpush1.bf16.msra.mxu0 0
        %3403 = vmatprep.subr.bf16.mxu0 0
        %3404 = vmatpush1.bf16.msra.mxu0 0
        %3405 = vmatprep.subr.bf16.mxu0 0
        %3406 = vmatpush1.bf16.msra.mxu0 0
        %3407 = vmatprep.subr.bf16.mxu0 0
        %3408 = vmatpush1.bf16.msra.mxu0 0
        %3409 = vmatprep.subr.bf16.mxu0 0
        %3410 = vmatpush1.bf16.msra.mxu0 0
        %3411 = vmatprep.subr.bf16.mxu0 0
        %3412 = vmatpush1.bf16.msra.mxu0 0
        %3413 = vmatprep.mubr.bf16.mxu0 0
        %3414 = vmatmul.mubr.bf16.gmra.mrb[0].mxu0 %v2826
        %v3415 = vpop.f32.mrb[0].mxu0
        %v3416 = vadd.f32 0.0, %v3415
        %v3417 = vpop.f32.mrb[0].mxu0
        %v3418 = vpop.f32.mrb[0].mxu0
        %v3419 = vadd.f32 0.0, %v3418
        %v3420 = vpop.f32.mrb[0].mxu0
        %3421 = vmatprep.mubr.bf16.mxu0 0
        %3422 = vmatmul.mubr.bf16.gmra.mrb[0].mxu0 %v2827
        %v3423 = vpop.f32.mrb[0].mxu0
        %v3424 = vadd.f32 0.0, %v3423
        %v3425 = vpop.f32.mrb[0].mxu0
        %v3426 = vpop.f32.mrb[0].mxu0
        %v3427 = vadd.f32 0.0, %v3426
        %v3428 = vpop.f32.mrb[0].mxu0
        %3429 = vmatprep.mubr.bf16.mxu0 0
        %3430 = vmatmul.mubr.bf16.gmra.mrb[0].mxu0 %v2828
        %v3431 = vpop.f32.mrb[0].mxu0
        %v3432 = vadd.f32 0.0, %v3431
        %v3433 = vpop.f32.mrb[0].mxu0
        %v3434 = vpop.f32.mrb[0].mxu0
        %v3435 = vadd.f32 0.0, %v3434
        %v3436 = vpop.f32.mrb[0].mxu0
        %3437 = vmatprep.mubr.bf16.mxu0 0
        %3438 = vmatmul.mubr.bf16.gmra.mrb[0].mxu0 %v2829
        %v3439 = vpop.f32.mrb[0].mxu0
        %v3440 = vadd.f32 0.0, %v3439
        %v3441 = vpop.f32.mrb[0].mxu0
        %v3442 = vpop.f32.mrb[0].mxu0
        %v3443 = vadd.f32 0.0, %v3442
        %v3444 = vpop.f32.mrb[0].mxu0
        %3445 = vdwg.mxu0
        %v3462 = vunpack.c.l.b16 %v2809
        %v3463 = vunpack.c.l.b16 %v2810
        %v3464 = vunpack.c.l.b16 %v2811
        %v3465 = vunpack.c.l.b16 %v2812
        %v3466 = vunpack.c.l.b16 %v2813
        %v3467 = vunpack.c.l.b16 %v2814
        %v3468 = vunpack.c.l.b16 %v2815
        %v3469 = vunpack.c.l.b16 %v2816
        %v3470 = vunpack.c.l.b16 %v2817
        %v3471 = vunpack.c.l.b16 %v2818
        %v3472 = vunpack.c.l.b16 %v2819
        %v3473 = vunpack.c.l.b16 %v2820
        %v3474 = vunpack.c.l.b16 %v2821
        %v3475 = vunpack.c.l.b16 %v2822
        %v3476 = vunpack.c.l.b16 %v2823
        %v3477 = vunpack.c.l.b16 %v2824
        %v3478 = vpack.c.b16 %v3463, %v3462
        %v3479 = vpack.c.b16 %v3465, %v3464
        %v3480 = vpack.c.b16 %v3467, %v3466
        %v3481 = vpack.c.b16 %v3469, %v3468
        %v3482 = vpack.c.b16 %v3471, %v3470
        %v3483 = vpack.c.b16 %v3473, %v3472
        %v3484 = vpack.c.b16 %v3475, %v3474
        %v3485 = vpack.c.b16 %v3477, %v3476
        %3494 = vmatprep.subr.bf16.mxu0 0
        %3495 = vmatpush1.bf16.msra.mxu0 %v3478
        %3496 = vmatprep.subr.bf16.mxu0 0
        %3497 = vmatpush1.bf16.msra.mxu0 %v3479
        %3498 = vmatprep.subr.bf16.mxu0 0
        %3499 = vmatpush1.bf16.msra.mxu0 %v3480
        %3500 = vmatprep.subr.bf16.mxu0 0
        %3501 = vmatpush1.bf16.msra.mxu0 %v3481
        %3502 = vmatprep.subr.bf16.mxu0 0
        %3503 = vmatpush1.bf16.msra.mxu0 %v3482
        %3504 = vmatprep.subr.bf16.mxu0 0
        %3505 = vmatpush1.bf16.msra.mxu0 %v3483
        %3506 = vmatprep.subr.bf16.mxu0 0
        %3507 = vmatpush1.bf16.msra.mxu0 %v3484
        %3508 = vmatprep.subr.bf16.mxu0 0
        %3509 = vmatpush1.bf16.msra.mxu0 %v3485
        %3510 = vmatprep.subr.bf16.mxu0 0
        %3511 = vmatpush1.bf16.msra.mxu0 0
        %3512 = vmatprep.subr.bf16.mxu0 0
        %3513 = vmatpush1.bf16.msra.mxu0 0
        %3514 = vmatprep.subr.bf16.mxu0 0
        %3515 = vmatpush1.bf16.msra.mxu0 0
        %3516 = vmatprep.subr.bf16.mxu0 0
        %3517 = vmatpush1.bf16.msra.mxu0 0
        %3518 = vmatprep.subr.bf16.mxu0 0
        %3519 = vmatpush1.bf16.msra.mxu0 0
        %3520 = vmatprep.subr.bf16.mxu0 0
        %3521 = vmatpush1.bf16.msra.mxu0 0
        %3522 = vmatprep.subr.bf16.mxu0 0
        %3523 = vmatpush1.bf16.msra.mxu0 0
        %3524 = vmatprep.subr.bf16.mxu0 0
        %3525 = vmatpush1.bf16.msra.mxu0 0
        %3526 = vmatprep.mubr.bf16.mxu0 0
        %3527 = vmatmul.mubr.bf16.gmra.mrb[0].mxu0 %v2771
        %v3528 = vpop.f32.mrb[0].mxu0
        %v3529 = vadd.f32 %v3416, %v3528
        %v3530 = vpop.f32.mrb[0].mxu0
        %v3531 = vpop.f32.mrb[0].mxu0
        %v3532 = vadd.f32 %v3419, %v3531
        %v3533 = vpop.f32.mrb[0].mxu0
        %3534 = vmatprep.mubr.bf16.mxu0 0
        %3535 = vmatmul.mubr.bf16.gmra.mrb[0].mxu0 %v2772
        %v3536 = vpop.f32.mrb[0].mxu0
        %v3537 = vadd.f32 %v3424, %v3536
        %v3538 = vpop.f32.mrb[0].mxu0
        %v3539 = vpop.f32.mrb[0].mxu0
        %v3540 = vadd.f32 %v3427, %v3539
        %v3541 = vpop.f32.mrb[0].mxu0
        %3542 = vmatprep.mubr.bf16.mxu0 0
        %3543 = vmatmul.mubr.bf16.gmra.mrb[0].mxu0 %v2773
        %v3544 = vpop.f32.mrb[0].mxu0
        %v3545 = vadd.f32 %v3432, %v3544
        %v3546 = vpop.f32.mrb[0].mxu0
        %v3547 = vpop.f32.mrb[0].mxu0
        %v3548 = vadd.f32 %v3435, %v3547
        %v3549 = vpop.f32.mrb[0].mxu0
        %3550 = vmatprep.mubr.bf16.mxu0 0
        %3551 = vmatmul.mubr.bf16.gmra.mrb[0].mxu0 %v2774
        %v3552 = vpop.f32.mrb[0].mxu0
        %v3553 = vadd.f32 %v3440, %v3552
        %v3554 = vpop.f32.mrb[0].mxu0
        %v3555 = vpop.f32.mrb[0].mxu0
        %v3556 = vadd.f32 %v3443, %v3555
        %v3557 = vpop.f32.mrb[0].mxu0
        %3558 = vdwg.mxu0
        %v3559 = vld [vmem:[#allocation2 + $0x10] sm:$0xff]
        %v3560 = vld [vmem:[#allocation2 + $0x18] sm:$0xff]
        %v3561 = vld [vmem:[#allocation2 + $0x20] sm:$0xff]
        %v3562 = vld [vmem:[#allocation2 + $0x28] sm:$0xff]
        %v3563 = vld [vmem:[#allocation2 + $0x30] sm:$0xff]
        %v3564 = vld [vmem:[#allocation2 + $0x38] sm:$0xff]
        %v3565 = vld [vmem:[#allocation2 + $0x40] sm:$0xff]
        %v3566 = vld [vmem:[#allocation2 + $0x48] sm:$0xff]
        %v3567 = vpack.c.bf16 %v3560, %v3559
        %v3568 = vpack.c.bf16 %v3562, %v3561
        %v3569 = vpack.c.bf16 %v3564, %v3563
        %v3570 = vpack.c.bf16 %v3566, %v3565
        %s3571 = scalar_lea.vmem [#allocation6], 384
        %v3572 = vld [vmem:[%s3571] sm:$0xf]
        %v3573 = vld [vmem:[%s3571 + $0x4] sm:$0xf]
        %v3574 = vld [vmem:[%s3571 + $0x8] sm:$0xf]
        %v3575 = vld [vmem:[%s3571 + $0xc] sm:$0xf]
        %v3576 = vld [vmem:[%s3571 + $0x10] sm:$0xf]
        %v3577 = vld [vmem:[%s3571 + $0x14] sm:$0xf]
        %v3578 = vld [vmem:[%s3571 + $0x18] sm:$0xf]
        %v3579 = vld [vmem:[%s3571 + $0x1c] sm:$0xf]
        %v3580 = vld [vmem:[%s3571 + $0x20] sm:$0xf]
        %v3581 = vld [vmem:[%s3571 + $0x24] sm:$0xf]
        %v3582 = vld [vmem:[%s3571 + $0x28] sm:$0xf]
        %v3583 = vld [vmem:[%s3571 + $0x2c] sm:$0xf]
        %v3584 = vld [vmem:[%s3571 + $0x30] sm:$0xf]
        %v3585 = vld [vmem:[%s3571 + $0x34] sm:$0xf]
        %v3586 = vld [vmem:[%s3571 + $0x38] sm:$0xf]
        %v3587 = vld [vmem:[%s3571 + $0x3c] sm:$0xf]
        %v3604 = vunpack.c.l.b16 %v3572
        %v3605 = vunpack.c.l.b16 %v3573
        %v3606 = vunpack.c.l.b16 %v3574
        %v3607 = vunpack.c.l.b16 %v3575
        %v3608 = vunpack.c.l.b16 %v3576
        %v3609 = vunpack.c.l.b16 %v3577
        %v3610 = vunpack.c.l.b16 %v3578
        %v3611 = vunpack.c.l.b16 %v3579
        %v3612 = vunpack.c.l.b16 %v3580
        %v3613 = vunpack.c.l.b16 %v3581
        %v3614 = vunpack.c.l.b16 %v3582
        %v3615 = vunpack.c.l.b16 %v3583
        %v3616 = vunpack.c.l.b16 %v3584
        %v3617 = vunpack.c.l.b16 %v3585
        %v3618 = vunpack.c.l.b16 %v3586
        %v3619 = vunpack.c.l.b16 %v3587
        %v3620 = vpack.c.b16 %v3605, %v3604
        %v3621 = vpack.c.b16 %v3607, %v3606
        %v3622 = vpack.c.b16 %v3609, %v3608
        %v3623 = vpack.c.b16 %v3611, %v3610
        %v3624 = vpack.c.b16 %v3613, %v3612
        %v3625 = vpack.c.b16 %v3615, %v3614
        %v3626 = vpack.c.b16 %v3617, %v3616
        %v3627 = vpack.c.b16 %v3619, %v3618
        %3636 = vmatprep.subr.bf16.mxu0 0
        %3637 = vmatpush1.bf16.msra.mxu0 %v3620
        %3638 = vmatprep.subr.bf16.mxu0 0
        %3639 = vmatpush1.bf16.msra.mxu0 %v3621
        %3640 = vmatprep.subr.bf16.mxu0 0
        %3641 = vmatpush1.bf16.msra.mxu0 %v3622
        %3642 = vmatprep.subr.bf16.mxu0 0
        %3643 = vmatpush1.bf16.msra.mxu0 %v3623
        %3644 = vmatprep.subr.bf16.mxu0 0
        %3645 = vmatpush1.bf16.msra.mxu0 %v3624
        %3646 = vmatprep.subr.bf16.mxu0 0
        %3647 = vmatpush1.bf16.msra.mxu0 %v3625
        %3648 = vmatprep.subr.bf16.mxu0 0
        %3649 = vmatpush1.bf16.msra.mxu0 %v3626
        %3650 = vmatprep.subr.bf16.mxu0 0
        %3651 = vmatpush1.bf16.msra.mxu0 %v3627
        %3652 = vmatprep.subr.bf16.mxu0 0
        %3653 = vmatpush1.bf16.msra.mxu0 0
        %3654 = vmatprep.subr.bf16.mxu0 0
        %3655 = vmatpush1.bf16.msra.mxu0 0
        %3656 = vmatprep.subr.bf16.mxu0 0
        %3657 = vmatpush1.bf16.msra.mxu0 0
        %3658 = vmatprep.subr.bf16.mxu0 0
        %3659 = vmatpush1.bf16.msra.mxu0 0
        %3660 = vmatprep.subr.bf16.mxu0 0
        %3661 = vmatpush1.bf16.msra.mxu0 0
        %3662 = vmatprep.subr.bf16.mxu0 0
        %3663 = vmatpush1.bf16.msra.mxu0 0
        %3664 = vmatprep.subr.bf16.mxu0 0
        %3665 = vmatpush1.bf16.msra.mxu0 0
        %3666 = vmatprep.subr.bf16.mxu0 0
        %3667 = vmatpush1.bf16.msra.mxu0 0
        %3668 = vmatprep.mubr.bf16.mxu0 0
        %3669 = vmatmul.mubr.bf16.gmra.mrb[0].mxu0 %v3567
        %v3670 = vpop.f32.mrb[0].mxu0
        %v3671 = vadd.f32 0.0, %v3670
        %v3672 = vpop.f32.mrb[0].mxu0
        %v3673 = vpop.f32.mrb[0].mxu0
        %v3674 = vadd.f32 0.0, %v3673
        %v3675 = vpop.f32.mrb[0].mxu0
        %3676 = vmatprep.mubr.bf16.mxu0 0
        %3677 = vmatmul.mubr.bf16.gmra.mrb[0].mxu0 %v3568
        %v3678 = vpop.f32.mrb[0].mxu0
        %v3679 = vadd.f32 0.0, %v3678
        %v3680 = vpop.f32.mrb[0].mxu0
        %v3681 = vpop.f32.mrb[0].mxu0
        %v3682 = vadd.f32 0.0, %v3681
        %v3683 = vpop.f32.mrb[0].mxu0
        %3684 = vmatprep.mubr.bf16.mxu0 0
        %3685 = vmatmul.mubr.bf16.gmra.mrb[0].mxu0 %v3569
        %v3686 = vpop.f32.mrb[0].mxu0
        %v3687 = vadd.f32 0.0, %v3686
        %v3688 = vpop.f32.mrb[0].mxu0
        %v3689 = vpop.f32.mrb[0].mxu0
        %v3690 = vadd.f32 0.0, %v3689
        %v3691 = vpop.f32.mrb[0].mxu0
        %3692 = vmatprep.mubr.bf16.mxu0 0
        %3693 = vmatmul.mubr.bf16.gmra.mrb[0].mxu0 %v3570
        %v3694 = vpop.f32.mrb[0].mxu0
        %v3695 = vadd.f32 0.0, %v3694
        %v3696 = vpop.f32.mrb[0].mxu0
        %v3697 = vpop.f32.mrb[0].mxu0
        %v3698 = vadd.f32 0.0, %v3697
        %v3699 = vpop.f32.mrb[0].mxu0
        %3700 = vdwg.mxu0
        %v3701 = vadd.f32 %v3043, %v3671
        %v3702 = vadd.f32 %v3046, %v3674
        %v3703 = vadd.f32 %v3051, %v3679
        %v3704 = vadd.f32 %v3054, %v3682
        %v3705 = vadd.f32 %v3059, %v3687
        %v3706 = vadd.f32 %v3062, %v3690
        %v3707 = vadd.f32 %v3067, %v3695
        %v3708 = vadd.f32 %v3070, %v3698
        %s3709 = scalar_lea.vmem [#allocation6], 448
        %v3710 = vld [vmem:[%s3709] sm:$0xf]
        %v3711 = vld [vmem:[%s3709 + $0x4] sm:$0xf]
        %v3712 = vld [vmem:[%s3709 + $0x8] sm:$0xf]
        %v3713 = vld [vmem:[%s3709 + $0xc] sm:$0xf]
        %v3714 = vld [vmem:[%s3709 + $0x10] sm:$0xf]
        %v3715 = vld [vmem:[%s3709 + $0x14] sm:$0xf]
        %v3716 = vld [vmem:[%s3709 + $0x18] sm:$0xf]
        %v3717 = vld [vmem:[%s3709 + $0x1c] sm:$0xf]
        %v3718 = vld [vmem:[%s3709 + $0x20] sm:$0xf]
        %v3719 = vld [vmem:[%s3709 + $0x24] sm:$0xf]
        %v3720 = vld [vmem:[%s3709 + $0x28] sm:$0xf]
        %v3721 = vld [vmem:[%s3709 + $0x2c] sm:$0xf]
        %v3722 = vld [vmem:[%s3709 + $0x30] sm:$0xf]
        %v3723 = vld [vmem:[%s3709 + $0x34] sm:$0xf]
        %v3724 = vld [vmem:[%s3709 + $0x38] sm:$0xf]
        %v3725 = vld [vmem:[%s3709 + $0x3c] sm:$0xf]
        %v3742 = vunpack.c.l.b16 %v3710
        %v3743 = vunpack.c.l.b16 %v3711
        %v3744 = vunpack.c.l.b16 %v3712
        %v3745 = vunpack.c.l.b16 %v3713
        %v3746 = vunpack.c.l.b16 %v3714
        %v3747 = vunpack.c.l.b16 %v3715
        %v3748 = vunpack.c.l.b16 %v3716
        %v3749 = vunpack.c.l.b16 %v3717
        %v3750 = vunpack.c.l.b16 %v3718
        %v3751 = vunpack.c.l.b16 %v3719
        %v3752 = vunpack.c.l.b16 %v3720
        %v3753 = vunpack.c.l.b16 %v3721
        %v3754 = vunpack.c.l.b16 %v3722
        %v3755 = vunpack.c.l.b16 %v3723
        %v3756 = vunpack.c.l.b16 %v3724
        %v3757 = vunpack.c.l.b16 %v3725
        %v3758 = vpack.c.b16 %v3743, %v3742
        %v3759 = vpack.c.b16 %v3745, %v3744
        %v3760 = vpack.c.b16 %v3747, %v3746
        %v3761 = vpack.c.b16 %v3749, %v3748
        %v3762 = vpack.c.b16 %v3751, %v3750
        %v3763 = vpack.c.b16 %v3753, %v3752
        %v3764 = vpack.c.b16 %v3755, %v3754
        %v3765 = vpack.c.b16 %v3757, %v3756
        %3774 = vmatprep.subr.bf16.mxu0 0
        %3775 = vmatpush1.bf16.msra.mxu0 %v3758
        %3776 = vmatprep.subr.bf16.mxu0 0
        %3777 = vmatpush1.bf16.msra.mxu0 %v3759
        %3778 = vmatprep.subr.bf16.mxu0 0
        %3779 = vmatpush1.bf16.msra.mxu0 %v3760
        %3780 = vmatprep.subr.bf16.mxu0 0
        %3781 = vmatpush1.bf16.msra.mxu0 %v3761
        %3782 = vmatprep.subr.bf16.mxu0 0
        %3783 = vmatpush1.bf16.msra.mxu0 %v3762
        %3784 = vmatprep.subr.bf16.mxu0 0
        %3785 = vmatpush1.bf16.msra.mxu0 %v3763
        %3786 = vmatprep.subr.bf16.mxu0 0
        %3787 = vmatpush1.bf16.msra.mxu0 %v3764
        %3788 = vmatprep.subr.bf16.mxu0 0
        %3789 = vmatpush1.bf16.msra.mxu0 %v3765
        %3790 = vmatprep.subr.bf16.mxu0 0
        %3791 = vmatpush1.bf16.msra.mxu0 0
        %3792 = vmatprep.subr.bf16.mxu0 0
        %3793 = vmatpush1.bf16.msra.mxu0 0
        %3794 = vmatprep.subr.bf16.mxu0 0
        %3795 = vmatpush1.bf16.msra.mxu0 0
        %3796 = vmatprep.subr.bf16.mxu0 0
        %3797 = vmatpush1.bf16.msra.mxu0 0
        %3798 = vmatprep.subr.bf16.mxu0 0
        %3799 = vmatpush1.bf16.msra.mxu0 0
        %3800 = vmatprep.subr.bf16.mxu0 0
        %3801 = vmatpush1.bf16.msra.mxu0 0
        %3802 = vmatprep.subr.bf16.mxu0 0
        %3803 = vmatpush1.bf16.msra.mxu0 0
        %3804 = vmatprep.subr.bf16.mxu0 0
        %3805 = vmatpush1.bf16.msra.mxu0 0
        %3806 = vmatprep.mubr.bf16.mxu0 0
        %3807 = vmatmul.mubr.bf16.gmra.mrb[0].mxu0 %v3567
        %v3808 = vpop.f32.mrb[0].mxu0
        %v3809 = vadd.f32 0.0, %v3808
        %v3810 = vpop.f32.mrb[0].mxu0
        %v3811 = vpop.f32.mrb[0].mxu0
        %v3812 = vadd.f32 0.0, %v3811
        %v3813 = vpop.f32.mrb[0].mxu0
        %3814 = vmatprep.mubr.bf16.mxu0 0
        %3815 = vmatmul.mubr.bf16.gmra.mrb[0].mxu0 %v3568
        %v3816 = vpop.f32.mrb[0].mxu0
        %v3817 = vadd.f32 0.0, %v3816
        %v3818 = vpop.f32.mrb[0].mxu0
        %v3819 = vpop.f32.mrb[0].mxu0
        %v3820 = vadd.f32 0.0, %v3819
        %v3821 = vpop.f32.mrb[0].mxu0
        %3822 = vmatprep.mubr.bf16.mxu0 0
        %3823 = vmatmul.mubr.bf16.gmra.mrb[0].mxu0 %v3569
        %v3824 = vpop.f32.mrb[0].mxu0
        %v3825 = vadd.f32 0.0, %v3824
        %v3826 = vpop.f32.mrb[0].mxu0
        %v3827 = vpop.f32.mrb[0].mxu0
        %v3828 = vadd.f32 0.0, %v3827
        %v3829 = vpop.f32.mrb[0].mxu0
        %3830 = vmatprep.mubr.bf16.mxu0 0
        %3831 = vmatmul.mubr.bf16.gmra.mrb[0].mxu0 %v3570
        %v3832 = vpop.f32.mrb[0].mxu0
        %v3833 = vadd.f32 0.0, %v3832
        %v3834 = vpop.f32.mrb[0].mxu0
        %v3835 = vpop.f32.mrb[0].mxu0
        %v3836 = vadd.f32 0.0, %v3835
        %v3837 = vpop.f32.mrb[0].mxu0
        %3838 = vdwg.mxu0
        %v3839 = vadd.f32 %v3286, %v3809
        %v3840 = vadd.f32 %v3289, %v3812
        %v3841 = vadd.f32 %v3294, %v3817
        %v3842 = vadd.f32 %v3297, %v3820
        %v3843 = vadd.f32 %v3302, %v3825
        %v3844 = vadd.f32 %v3305, %v3828
        %v3845 = vadd.f32 %v3310, %v3833
        %v3846 = vadd.f32 %v3313, %v3836
        %s3847 = scalar_lea.vmem [#allocation6], 512
        %v3848 = vld [vmem:[%s3847] sm:$0xf]
        %v3849 = vld [vmem:[%s3847 + $0x4] sm:$0xf]
        %v3850 = vld [vmem:[%s3847 + $0x8] sm:$0xf]
        %v3851 = vld [vmem:[%s3847 + $0xc] sm:$0xf]
        %v3852 = vld [vmem:[%s3847 + $0x10] sm:$0xf]
        %v3853 = vld [vmem:[%s3847 + $0x14] sm:$0xf]
        %v3854 = vld [vmem:[%s3847 + $0x18] sm:$0xf]
        %v3855 = vld [vmem:[%s3847 + $0x1c] sm:$0xf]
        %v3856 = vld [vmem:[%s3847 + $0x20] sm:$0xf]
        %v3857 = vld [vmem:[%s3847 + $0x24] sm:$0xf]
        %v3858 = vld [vmem:[%s3847 + $0x28] sm:$0xf]
        %v3859 = vld [vmem:[%s3847 + $0x2c] sm:$0xf]
        %v3860 = vld [vmem:[%s3847 + $0x30] sm:$0xf]
        %v3861 = vld [vmem:[%s3847 + $0x34] sm:$0xf]
        %v3862 = vld [vmem:[%s3847 + $0x38] sm:$0xf]
        %v3863 = vld [vmem:[%s3847 + $0x3c] sm:$0xf]
        %v3880 = vunpack.c.l.b16 %v3848
        %v3881 = vunpack.c.l.b16 %v3849
        %v3882 = vunpack.c.l.b16 %v3850
        %v3883 = vunpack.c.l.b16 %v3851
        %v3884 = vunpack.c.l.b16 %v3852
        %v3885 = vunpack.c.l.b16 %v3853
        %v3886 = vunpack.c.l.b16 %v3854
        %v3887 = vunpack.c.l.b16 %v3855
        %v3888 = vunpack.c.l.b16 %v3856
        %v3889 = vunpack.c.l.b16 %v3857
        %v3890 = vunpack.c.l.b16 %v3858
        %v3891 = vunpack.c.l.b16 %v3859
        %v3892 = vunpack.c.l.b16 %v3860
        %v3893 = vunpack.c.l.b16 %v3861
        %v3894 = vunpack.c.l.b16 %v3862
        %v3895 = vunpack.c.l.b16 %v3863
        %v3896 = vpack.c.b16 %v3881, %v3880
        %v3897 = vpack.c.b16 %v3883, %v3882
        %v3898 = vpack.c.b16 %v3885, %v3884
        %v3899 = vpack.c.b16 %v3887, %v3886
        %v3900 = vpack.c.b16 %v3889, %v3888
        %v3901 = vpack.c.b16 %v3891, %v3890
        %v3902 = vpack.c.b16 %v3893, %v3892
        %v3903 = vpack.c.b16 %v3895, %v3894
        %3912 = vmatprep.subr.bf16.mxu0 0
        %3913 = vmatpush1.bf16.msra.mxu0 %v3896
        %3914 = vmatprep.subr.bf16.mxu0 0
        %3915 = vmatpush1.bf16.msra.mxu0 %v3897
        %3916 = vmatprep.subr.bf16.mxu0 0
        %3917 = vmatpush1.bf16.msra.mxu0 %v3898
        %3918 = vmatprep.subr.bf16.mxu0 0
        %3919 = vmatpush1.bf16.msra.mxu0 %v3899
        %3920 = vmatprep.subr.bf16.mxu0 0
        %3921 = vmatpush1.bf16.msra.mxu0 %v3900
        %3922 = vmatprep.subr.bf16.mxu0 0
        %3923 = vmatpush1.bf16.msra.mxu0 %v3901
        %3924 = vmatprep.subr.bf16.mxu0 0
        %3925 = vmatpush1.bf16.msra.mxu0 %v3902
        %3926 = vmatprep.subr.bf16.mxu0 0
        %3927 = vmatpush1.bf16.msra.mxu0 %v3903
        %3928 = vmatprep.subr.bf16.mxu0 0
        %3929 = vmatpush1.bf16.msra.mxu0 0
        %3930 = vmatprep.subr.bf16.mxu0 0
        %3931 = vmatpush1.bf16.msra.mxu0 0
        %3932 = vmatprep.subr.bf16.mxu0 0
        %3933 = vmatpush1.bf16.msra.mxu0 0
        %3934 = vmatprep.subr.bf16.mxu0 0
        %3935 = vmatpush1.bf16.msra.mxu0 0
        %3936 = vmatprep.subr.bf16.mxu0 0
        %3937 = vmatpush1.bf16.msra.mxu0 0
        %3938 = vmatprep.subr.bf16.mxu0 0
        %3939 = vmatpush1.bf16.msra.mxu0 0
        %3940 = vmatprep.subr.bf16.mxu0 0
        %3941 = vmatpush1.bf16.msra.mxu0 0
        %3942 = vmatprep.subr.bf16.mxu0 0
        %3943 = vmatpush1.bf16.msra.mxu0 0
        %3944 = vmatprep.mubr.bf16.mxu0 0
        %3945 = vmatmul.mubr.bf16.gmra.mrb[0].mxu0 %v3567
        %v3946 = vpop.f32.mrb[0].mxu0
        %v3947 = vadd.f32 0.0, %v3946
        %v3948 = vpop.f32.mrb[0].mxu0
        %v3949 = vpop.f32.mrb[0].mxu0
        %v3950 = vadd.f32 0.0, %v3949
        %v3951 = vpop.f32.mrb[0].mxu0
        %3952 = vmatprep.mubr.bf16.mxu0 0
        %3953 = vmatmul.mubr.bf16.gmra.mrb[0].mxu0 %v3568
        %v3954 = vpop.f32.mrb[0].mxu0
        %v3955 = vadd.f32 0.0, %v3954
        %v3956 = vpop.f32.mrb[0].mxu0
        %v3957 = vpop.f32.mrb[0].mxu0
        %v3958 = vadd.f32 0.0, %v3957
        %v3959 = vpop.f32.mrb[0].mxu0
        %3960 = vmatprep.mubr.bf16.mxu0 0
        %3961 = vmatmul.mubr.bf16.gmra.mrb[0].mxu0 %v3569
        %v3962 = vpop.f32.mrb[0].mxu0
        %v3963 = vadd.f32 0.0, %v3962
        %v3964 = vpop.f32.mrb[0].mxu0
        %v3965 = vpop.f32.mrb[0].mxu0
        %v3966 = vadd.f32 0.0, %v3965
        %v3967 = vpop.f32.mrb[0].mxu0
        %3968 = vmatprep.mubr.bf16.mxu0 0
        %3969 = vmatmul.mubr.bf16.gmra.mrb[0].mxu0 %v3570
        %v3970 = vpop.f32.mrb[0].mxu0
        %v3971 = vadd.f32 0.0, %v3970
        %v3972 = vpop.f32.mrb[0].mxu0
        %v3973 = vpop.f32.mrb[0].mxu0
        %v3974 = vadd.f32 0.0, %v3973
        %v3975 = vpop.f32.mrb[0].mxu0
        %3976 = vdwg.mxu0
        %v3977 = vadd.f32 %v3529, %v3947
        %v3978 = vadd.f32 %v3532, %v3950
        %v3979 = vadd.f32 %v3537, %v3955
        %v3980 = vadd.f32 %v3540, %v3958
        %v3981 = vadd.f32 %v3545, %v3963
        %v3982 = vadd.f32 %v3548, %v3966
        %v3983 = vadd.f32 %v3553, %v3971
        %v3984 = vadd.f32 %v3556, %v3974
        %v3986 = vlaneseq
        %v3987 = vshrl.u32 %v3986, 7
        %v3988 = vsub.s32 0, %v3987
        %v3989 = vrot.slane %v2762, %v3988
        %v3991 = vadd.f32 %v3839, %v3989
        %v3992 = vadd.f32 %v3840, %v3989
        %v3993 = vadd.f32 %v3841, %v3989
        %v3994 = vadd.f32 %v3842, %v3989
        %v3995 = vadd.f32 %v3843, %v3989
        %v3996 = vadd.f32 %v3844, %v3989
        %v3997 = vadd.f32 %v3845, %v3989
        %v3998 = vadd.f32 %v3846, %v3989
        %v3999 = vrot.slane %v3701, 7
        %v4000 = vrot.slane %v3702, 7
        %v4001 = vrot.slane %v3703, 7
        %v4002 = vrot.slane %v3704, 7
        %v4003 = vrot.slane %v3705, 7
        %v4004 = vrot.slane %v3706, 7
        %v4005 = vrot.slane %v3707, 7
        %v4006 = vrot.slane %v3708, 7
        %v4007 = vsel %vm2243, %v4005, %v4006
        %v4008 = vsel %vm2243, %v4004, %v4005
        %v4009 = vsel %vm2243, %v4003, %v4004
        %v4010 = vsel %vm2243, %v4002, %v4003
        %v4011 = vsel %vm2243, %v4001, %v4002
        %v4012 = vsel %vm2243, %v4000, %v4001
        %v4013 = vsel %vm2243, %v3999, %v4000
        %v4014 = vsel %vm2243, %v4006, %v3999
        %v4015 = vsel %vm2260, 0.0, %v4014
        %v4016 = vsel %vm2261, 0.0, %v4013
        %v4017 = vsel %vm2262, 0.0, %v4012
        %v4018 = vsel %vm2263, 0.0, %v4011
        %v4019 = vsel %vm2264, 0.0, %v4010
        %v4020 = vsel %vm2265, 0.0, %v4009
        %v4021 = vsel %vm2266, 0.0, %v4008
        %v4022 = vsel %vm2267, 0.0, %v4007
        %v4023 = vadd.f32 %v3991, %v4015
        %v4024 = vadd.f32 %v3992, %v4016
        %v4025 = vadd.f32 %v3993, %v4017
        %v4026 = vadd.f32 %v3994, %v4018
        %v4027 = vadd.f32 %v3995, %v4019
        %v4028 = vadd.f32 %v3996, %v4020
        %v4029 = vadd.f32 %v3997, %v4021
        %v4030 = vadd.f32 %v3998, %v4022
        %v4031 = vrot.slane %v3977, 1
        %v4032 = vrot.slane %v3978, 1
        %v4033 = vrot.slane %v3979, 1
        %v4034 = vrot.slane %v3980, 1
        %v4035 = vrot.slane %v3981, 1
        %v4036 = vrot.slane %v3982, 1
        %v4037 = vrot.slane %v3983, 1
        %v4038 = vrot.slane %v3984, 1
        %v4039 = vsel %vm2292, %v4037, %v4038
        %v4040 = vsel %vm2292, %v4036, %v4037
        %v4041 = vsel %vm2292, %v4035, %v4036
        %v4042 = vsel %vm2292, %v4034, %v4035
        %v4043 = vsel %vm2292, %v4033, %v4034
        %v4044 = vsel %vm2292, %v4032, %v4033
        %v4045 = vsel %vm2292, %v4031, %v4032
        %v4046 = vsel %vm2292, %v4038, %v4031
        %v4047 = vsel %vm2309, 0.0, %v4045
        %v4048 = vsel %vm2310, 0.0, %v4044
        %v4049 = vsel %vm2311, 0.0, %v4043
        %v4050 = vsel %vm2312, 0.0, %v4042
        %v4051 = vsel %vm2313, 0.0, %v4041
        %v4052 = vsel %vm2314, 0.0, %v4040
        %v4053 = vsel %vm2315, 0.0, %v4039
        %v4054 = vsel %vm2316, 0.0, %v4046
        %v4055 = vadd.f32 %v4023, %v4047
        %v4056 = vadd.f32 %v4024, %v4048
        %v4057 = vadd.f32 %v4025, %v4049
        %v4058 = vadd.f32 %v4026, %v4050
        %v4059 = vadd.f32 %v4027, %v4051
        %v4060 = vadd.f32 %v4028, %v4052
        %v4061 = vadd.f32 %v4029, %v4053
        %v4062 = vadd.f32 %v4030, %v4054
        %v4063 = vadd.f32 %v559, %v4055
        %v4064 = vadd.f32 %v560, %v4056
        %v4065 = vadd.f32 %v561, %v4057
        %v4066 = vadd.f32 %v562, %v4058
        %v4067 = vadd.f32 %v563, %v4059
        %v4068 = vadd.f32 %v564, %v4060
        %v4069 = vadd.f32 %v565, %v4061
        %v4070 = vadd.f32 %v566, %v4062
        %4071 = vst [vmem:[%s409] sm:$0xff] %v4063
        %4072 = vst [vmem:[%s409 + $0x8] sm:$0xff] %v4064
        %4073 = vst [vmem:[%s409 + $0x10] sm:$0xff] %v4065
        %4074 = vst [vmem:[%s409 + $0x18] sm:$0xff] %v4066
        %4075 = vst [vmem:[%s409 + $0x20] sm:$0xff] %v4067
        %4076 = vst [vmem:[%s409 + $0x28] sm:$0xff] %v4068
        %4077 = vst [vmem:[%s409 + $0x30] sm:$0xff] %v4069
        %4078 = vst [vmem:[%s409 + $0x38] sm:$0xff] %v4070
        %s4079 = sand.u32 %s271, 1
        %s4080 = scalar_lea.sflag [#allocation5], %s4079
        %s4081 = sand.u32 %s271, 1
        %s4082 = smul.addr %s4081, 64
        %s4083 = scalar_lea.vmem [#allocation8], %s4082
        // Predicated region
        $region73: #{tpu_custom_call.1} parent=63 // pred_check
          %p4084 = pneg %p281
        $region74: #{tpu_custom_call.1} parent=63 // pred_check_branch
          %4086 = sbr.rel (%p4084) target = $region76
        $region75: #{tpu_custom_call.1} parent=63 // pred_region
          %s4088 = ssub.s32 1024, 1024
          %4089 = vsyncadd %s4080, %s4088
          %s4090 = smul.addr %s27, 8
          %s4091 = smul.addr %s4090, 128
          %s4092 = scalar_lea.hbm %s11, %s4091
          %s4093 = sshll.u32 %s4083, 4
          %s4094 = int_to_ptr.vmem [resolvable:$true] %s4093
          %4099 = dma.vmem_to_hbm [thread:$0]  %s4094, 1024, %s4092, %s4080, 128, 128, 8
        $region76: #{tpu_custom_call.1} parent=63 // pred_fallthru
          _
      $region64: #{tpu_custom_call.1} parent=5 // pred_fallthru
        _
      %p4100 = scmp.le.s32.totalorder 2, %s22
      // Predicated region
      $region77: #{tpu_custom_call.1} parent=5 // pred_check
        %p4101 = pneg %p4100
      $region78: #{tpu_custom_call.1} parent=5 // pred_check_branch
        %4103 = sbr.rel (%p4101) target = $region80
      $region79: #{tpu_custom_call.1} parent=5 // pred_region
        %s4104 = ssub.s32 %s22, 2
        // Predicated region
        $region81: #{tpu_custom_call.1} parent=79 // pred_check
          %p4105 = pneg %p287
        $region82: #{tpu_custom_call.1} parent=79 // pred_check_branch
          %4107 = sbr.rel (%p4105) target = $region84
        $region83: #{tpu_custom_call.1} parent=79 // pred_region
          %s4108 = sand.u32 %s272, 1
          %s4109 = scalar_lea.sflag [#allocation5], %s4108
          %s4110 = sand.u32 %s272, 1
          %s4111 = smul.addr %s4110, 64
          %s4112 = scalar_lea.vmem [#allocation8], %s4111
          %4113 = dma.done %s4109, 1024
        $region84: #{tpu_custom_call.1} parent=79 // pred_fallthru
          _
      $region80: #{tpu_custom_call.1} parent=5 // pred_fallthru
        _
    $region6: #{tpu_custom_call.1} parent=1 // loop_footer
      %s26 = sadd.s32 1, %s22
    $region7: #{tpu_custom_call.1} parent=1 // loop_footer_branch
      %21 = sbr.rel target = $region3
    $region8: #{tpu_custom_call.1} parent=1 // loop_exit
      _
    %4114 = vsyncpa [#allocation4], 1
    %s4115 = scalar_lea.sflag [#allocation4], 1
    %4116 = vsyncpa %s4115, 1
    %4117 = vsyncpa [#allocation7], 1
    %4118 = vsyncpa [#allocation5], 1
    %s4119 = scalar_lea.sflag [#allocation5], 1
    %4120 = vsyncpa %s4119, 1

</llo_original>
